<compile_context>
chip_gen: v7x
topology: tpu7x:2x2x1
jax: 0.10.0
libtpu: 0.0.40
codegen_flags: <defaults>
</compile_context>

<pallas_src>
import numpy as np
import jax
import jax.numpy as jnp
from jax.experimental import pallas as pl
from jax.experimental.pallas import tpu as pltpu

LANE = 128
SUBLANE = 8


def _round_up(x, m):
    return ((x + m - 1) // m) * m


# ----------------------------- Pallas kernel --------------------------------
def textcnn_kernel(tok_ref,            # SMEM (B_pad, L) int32          [scalar prefetch]
                   emb_ref,            # VMEM (V, Ep) f32               [resident table]
                   wconv_ref,          # VMEM (K*Ep, Fp)  im2col conv weight
                   bconv_ref,          # VMEM (1, Fp)
                   w1_ref, b1_ref,     # VMEM (Fp, Hp), (1, Hp)
                   w2_ref, b2_ref,     # VMEM (Hp, Hp), (1, Hp)
                   w3_ref, b3_ref,     # VMEM (1, Hp),  (1, 1)
                   conv_out_ref,       # out  (TB, Lpad, Fp)  lane-dense conv (pre-transpose)
                   pooled_ref,         # out  (TB, Fp)
                   prob_ref,           # out  (TB, 1)
                   patches_buf):       # scratch VMEM (TB*Lpad, K*Ep)
    i = pl.program_id(0)

    TB, Lpad, Fp = conv_out_ref.shape
    Ep = emb_ref.shape[1]
    KEp = patches_buf.shape[1]
    KS = KEp // Ep                      # conv kernel size (3)
    L = tok_ref.shape[1]
    Lout = L - KS + 1

    # ---- 1) zero the patch buffer (pad rows deterministic; scratch persists) --
    patches_buf[...] = jnp.zeros_like(patches_buf)

    # ---- 2) fused embedding gather + im2col scatter ---------------------------
    # Token (b, l) contributes to patch row t = l - k, column block k, for each
    # k with 0 <= t < Lout.  All offsets below are static except the table row.
    for b in range(TB):
        for l in range(L):
            tok = tok_ref[i * TB + b, l]
            row = emb_ref[pl.ds(tok, 1), :]                      # (1, Ep) dyn load
            for k in range(KS):
                t = l - k
                if 0 <= t < Lout:
                    r = b * Lpad + t
                    patches_buf[r:r + 1, k * Ep:(k + 1) * Ep] = row

    # ---- 3) whole conv as a single MXU matmul, + bias + ReLU ------------------
    conv = jnp.dot(patches_buf[...], wconv_ref[...],
                   preferred_element_type=jnp.float32)           # (TB*Lpad, Fp)
    conv = jnp.maximum(conv + bconv_ref[...], 0.0)
    convr = conv.reshape(TB, Lpad, Fp)                           # sublane-preserving split

    # ---- 4) lane-dense conv_out + masked adaptive max pool --------------------
    conv_out_ref[...] = convr
    pos = jax.lax.broadcasted_iota(jnp.int32, (TB, Lpad, Fp), 1)
    pooled = jnp.max(jnp.where(pos < Lout, convr, -jnp.inf), axis=1)   # (TB, Fp)
    pooled_ref[...] = pooled

    # ---- 5) MLP head -----------------------------------------------------------
    # TODO(synk): nn.Dropout(0.5) is identity here (inference semantics).
    h1 = jnp.maximum(jnp.dot(pooled, w1_ref[...],
                             preferred_element_type=jnp.float32) + b1_ref[...], 0.0)
    h2 = jnp.maximum(jnp.dot(h1, w2_ref[...],
                             preferred_element_type=jnp.float32) + b2_ref[...], 0.0)
    # N=1 output column: VPU multiply + lane reduce instead of an MXU matmul.
    logit = jnp.sum(h2 * w3_ref[...], axis=-1, keepdims=True) + b3_ref[...]
    prob_ref[...] = jax.nn.sigmoid(logit)                        # (TB, 1)


# --------------------------- parameter preparation ---------------------------
def prepare_params(emb_table, w_conv, b_conv, w1, b1, w2, b2, w3, b3):
    """PyTorch-layout params -> padded, kernel-friendly layouts (one-time cost)."""
    V, E = emb_table.shape
    F, _, K = w_conv.shape
    H = w1.shape[0]

    Ep = _round_up(E, LANE)
    Fp = _round_up(F, LANE)
    Hp = _round_up(H, LANE)

    def pad_last(x, tgt):
        return jnp.pad(x, [(0, 0)] * (x.ndim - 1) + [(0, tgt - x.shape[-1])])

    emb_p = pad_last(emb_table, Ep)                               # (V, Ep)
    # Conv1d weight (F, E, K) -> (K, Ep, Fp) -> flattened im2col weight (K*Ep, Fp)
    wc = jnp.transpose(w_conv, (2, 1, 0))                         # (K, E, F)
    wc = jnp.pad(wc, ((0, 0), (0, Ep - E), (0, Fp - F)))          # (K, Ep, Fp)
    wconv_flat = wc.reshape(K * Ep, Fp)
    bconv_p = pad_last(b_conv, Fp).reshape(1, Fp)

    w1_p = jnp.pad(w1.T, ((0, Fp - F), (0, Hp - H)))              # (Fp, Hp)
    b1_p = pad_last(b1, Hp).reshape(1, Hp)
    w2_p = jnp.pad(w2.T, ((0, Hp - H), (0, Hp - H)))              # (Hp, Hp)
    b2_p = pad_last(b2, Hp).reshape(1, Hp)
    w3_p = pad_last(w3, Hp)                                       # (1, Hp) row
    b3_p = b3.reshape(1, 1)

    return dict(embedding=emb_p, wconv=wconv_flat, bconv=bconv_p,
                w1=w1_p, b1=b1_p, w2=w2_p, b2=b2_p, w3=w3_p, b3=b3_p,
                E=E, F=F, H=H, K=K)


# ------------------------------ wrapper (glue) -------------------------------
def textcnn_forward(tokens, params, *, tile_b=8):
    # TODO(synk): the embedding table is VMEM-resident (fine for vocab ~1e3-1e4);
    # very large vocabularies would need an HBM table + per-row DMA gather.
    emb_table = params['embedding']                 # (V, Ep)
    V, Ep = emb_table.shape
    KEp, Fp = params['wconv'].shape
    Hp = params['w1'].shape[1]
    K, F = params['K'], params['F']

    tokens = tokens.astype(jnp.int32)
    B, L = tokens.shape
    Lout = L - K + 1
    Lpad = _round_up(Lout, SUBLANE)

    TB = _round_up(max(tile_b, SUBLANE), SUBLANE)   # batch tile (multiple of 8)
    B_pad = _round_up(B, TB)
    if B_pad != B:
        tokens = jnp.pad(tokens, ((0, B_pad - B), (0, 0)))   # pad token id 0 (valid row)
    nb = B_pad // TB

    grid_spec = pltpu.PrefetchScalarGridSpec(
        num_scalar_prefetch=1,                      # tokens -> SMEM
        grid=(nb,),
        in_specs=[
            pl.BlockSpec((V, Ep),   lambda i, tok: (0, 0)),          # embedding table
            pl.BlockSpec((KEp, Fp), lambda i, tok: (0, 0)),          # wconv (im2col)
            pl.BlockSpec((1, Fp),   lambda i, tok: (0, 0)),          # bconv
            pl.BlockSpec((Fp, Hp),  lambda i, tok: (0, 0)),          # w1
            pl.BlockSpec((1, Hp),   lambda i, tok: (0, 0)),          # b1
            pl.BlockSpec((Hp, Hp),  lambda i, tok: (0, 0)),          # w2
            pl.BlockSpec((1, Hp),   lambda i, tok: (0, 0)),          # b2
            pl.BlockSpec((1, Hp),   lambda i, tok: (0, 0)),          # w3 row
            pl.BlockSpec((1, 1),    lambda i, tok: (0, 0)),          # b3
        ],
        out_specs=[
            pl.BlockSpec((TB, Lpad, Fp), lambda i, tok: (i, 0, 0)),  # conv (lane-dense)
            pl.BlockSpec((TB, Fp),       lambda i, tok: (i, 0)),     # pooled
            pl.BlockSpec((TB, 1),        lambda i, tok: (i, 0)),     # prob
        ],
        scratch_shapes=[
            pltpu.VMEM((TB * Lpad, KEp), jnp.float32),               # im2col patches
        ],
    )

    out_shapes = (
        jax.ShapeDtypeStruct((B_pad, Lpad, Fp), jnp.float32),
        jax.ShapeDtypeStruct((B_pad, Fp), jnp.float32),
        jax.ShapeDtypeStruct((B_pad, 1), jnp.float32),
    )

    conv_lnf, pooled, prob = pl.pallas_call(
        textcnn_kernel,
        grid_spec=grid_spec,
        out_shape=out_shapes,
        compiler_params=pltpu.CompilerParams(
            dimension_semantics=("parallel",)),
    )(tokens, emb_table, params['wconv'], params['bconv'],
      params['w1'], params['b1'], params['w2'], params['b2'],
      params['w3'], params['b3'])

    # Strip batch/lane padding; one tiny XLA transpose to PyTorch NCL layout.
    prob = prob[:B, 0]                                   # torch .squeeze() on (B, 1)
    pooled = pooled[:B, :F]
    conv_out = jnp.transpose(conv_lnf[:B, :Lout, :F], (0, 2, 1))   # (B, F, L-2)
    return prob, pooled, conv_out


# ------------------------- pure-JAX reference (check) ------------------------
def reference_forward(tokens, emb_table, w_conv, b_conv, w1, b1, w2, b2, w3, b3):
    hp = jax.lax.Precision.HIGHEST
    emb = jnp.take(emb_table, tokens, axis=0)        # (B, L, E)
    x = jnp.transpose(emb, (0, 2, 1))                # (B, E, L)   (PyTorch NCL)
    B, E, L = x.shape
    F, _, K = w_conv.shape
    Lout = L - K + 1
    conv = jnp.zeros((B, F, Lout), jnp.float32)
    for k in range(K):
        conv = conv + jnp.einsum('bet,fe->bft', x[:, :, k:k + Lout], w_conv[:, :, k],
                                 precision=hp)
    conv = jnp.maximum(conv + b_conv[None, :, None], 0.0)
    pooled = jnp.max(conv, axis=2)                   # (B, F)
    h1 = jnp.maximum(jnp.dot(pooled, w1.T, precision=hp) + b1, 0.0)
    h2 = jnp.maximum(jnp.dot(h1, w2.T, precision=hp) + b2, 0.0)
    prob = jax.nn.sigmoid(jnp.dot(h2, w3.T, precision=hp) + b3)   # (B, 1)
    return jnp.squeeze(prob, axis=-1), pooled, conv


# --------------------------------- main --------------------------------------
if __name__ == "__main__":
    vocab_size = 1000
    embedding_dim = 100
    num_filters = 64
    hidden_units = 32
    B, L = 2, 16

    key = jax.random.PRNGKey(0)
    ks = jax.random.split(key, 10)

    # Deterministic PyTorch-layout parameters.
    emb_table = 0.1 * jax.random.normal(ks[0], (vocab_size, embedding_dim), jnp.float32)
    w_conv = 0.1 * jax.random.normal(ks[1], (num_filters, embedding_dim, 3), jnp.float32)
    b_conv = 0.1 * jax.random.normal(ks[2], (num_filters,), jnp.float32)
    w1 = 0.1 * jax.random.normal(ks[3], (hidden_units, num_filters), jnp.float32)
    b1 = 0.1 * jax.random.normal(ks[4], (hidden_units,), jnp.float32)
    w2 = 0.1 * jax.random.normal(ks[5], (hidden_units, hidden_units), jnp.float32)
    b2 = 0.1 * jax.random.normal(ks[6], (hidden_units,), jnp.float32)
    w3 = 0.1 * jax.random.normal(ks[7], (1, hidden_units), jnp.float32)
    b3 = 0.1 * jax.random.normal(ks[8], (1,), jnp.float32)

    tokens = jax.random.randint(ks[9], (B, L), 0, vocab_size, dtype=jnp.int32)

    params = prepare_params(emb_table, w_conv, b_conv, w1, b1, w2, b2, w3, b3)

    prob, pooled, conv_out = jax.block_until_ready(textcnn_forward(tokens, params))
    prob_r, pooled_r, conv_r = jax.block_until_ready(
        reference_forward(tokens, emb_table, w_conv, b_conv, w1, b1, w2, b2, w3, b3))

    assert prob.shape == (B,)
    assert pooled.shape == (B, num_filters)
    assert conv_out.shape == (B, num_filters, L - 2)
    np.testing.assert_allclose(np.asarray(prob), np.asarray(prob_r), rtol=1e-5, atol=1e-5)
    np.testing.assert_allclose(np.asarray(pooled), np.asarray(pooled_r), rtol=1e-5, atol=1e-5)
    np.testing.assert_allclose(np.asarray(conv_out), np.asarray(conv_r), rtol=1e-5, atol=1e-5)

    print("KERNEL_OK")
</pallas_src>

<mosaic_0001>
module attributes {stable_mosaic.version = 11 : i64} {
  func.func @textcnn_kernel(%arg0: i32, %arg1: memref<8x16xi32, #tpu.memory_space<smem>>, %arg2: memref<1000x128xf32, #tpu.memory_space<vmem>>, %arg3: memref<384x128xf32, #tpu.memory_space<vmem>>, %arg4: memref<1x128xf32, #tpu.memory_space<vmem>>, %arg5: memref<128x128xf32, #tpu.memory_space<vmem>>, %arg6: memref<1x128xf32, #tpu.memory_space<vmem>>, %arg7: memref<128x128xf32, #tpu.memory_space<vmem>>, %arg8: memref<1x128xf32, #tpu.memory_space<vmem>>, %arg9: memref<1x128xf32, #tpu.memory_space<vmem>>, %arg10: memref<1x1xf32, #tpu.memory_space<vmem>>, %arg11: memref<8x16x128xf32, #tpu.memory_space<vmem>>, %arg12: memref<8x128xf32, #tpu.memory_space<vmem>>, %arg13: memref<8x1xf32, #tpu.memory_space<vmem>>, %arg14: memref<128x384xf32, #tpu.memory_space<vmem>>) attributes {dimension_semantics = [#tpu.dimension_semantics<parallel>], iteration_bounds = array<i64: 1>, scalar_prefetch = 1 : i64, scratch_operands = 1 : i64, tpu.core_type = #tpu.core_type<tc>, window_params = [{pipeline_mode = #tpu.pipeline_mode<synchronous>, transform_indices = @transform_0, window_bounds = array<i64: 1000, 128>}, {pipeline_mode = #tpu.pipeline_mode<synchronous>, transform_indices = @transform_1, window_bounds = array<i64: 384, 128>}, {pipeline_mode = #tpu.pipeline_mode<synchronous>, transform_indices = @transform_2, window_bounds = array<i64: 1, 128>}, {pipeline_mode = #tpu.pipeline_mode<synchronous>, transform_indices = @transform_3, window_bounds = array<i64: 128, 128>}, {pipeline_mode = #tpu.pipeline_mode<synchronous>, transform_indices = @transform_4, window_bounds = array<i64: 1, 128>}, {pipeline_mode = #tpu.pipeline_mode<synchronous>, transform_indices = @transform_5, window_bounds = array<i64: 128, 128>}, {pipeline_mode = #tpu.pipeline_mode<synchronous>, transform_indices = @transform_6, window_bounds = array<i64: 1, 128>}, {pipeline_mode = #tpu.pipeline_mode<synchronous>, transform_indices = @transform_7, window_bounds = array<i64: 1, 128>}, {pipeline_mode = #tpu.pipeline_mode<synchronous>, transform_indices = @transform_8, window_bounds = array<i64: 1, 1>}, {transform_indices = @transform_9, window_bounds = array<i64: 8, 16, 128>}, {transform_indices = @transform_10, window_bounds = array<i64: 8, 128>}, {transform_indices = @transform_11, window_bounds = array<i64: 8, 1>}]} {
    %cst = arith.constant 0.000000e+00 : f32
    %0 = vector.broadcast %cst : f32 to vector<128x384xf32>
    %c0 = arith.constant 0 : index
    %c0_0 = arith.constant 0 : index
    %1 = vector.load %arg14[%c0, %c0_0] : memref<128x384xf32, #tpu.memory_space<vmem>>, vector<128x384xf32>
    tpu.vector_store %arg14[%c0, %c0_0], %0 {strides = array<i32>} : memref<128x384xf32, #tpu.memory_space<vmem>>, vector<128x384xf32>,
    %c8_i32 = arith.constant 8 : i32
    %2 = arith.muli %arg0, %c8_i32 : i32
    %c0_i32 = arith.constant 0 : i32
    %3 = arith.addi %2, %c0_i32 : i32
    %4 = arith.index_cast %3 : i32 to index
    %c0_1 = arith.constant 0 : index
    %5 = memref.load %arg1[%4, %c0_1] : memref<8x16xi32, #tpu.memory_space<smem>>
    %6 = arith.index_cast %5 : i32 to index
    %c0_2 = arith.constant 0 : index
    %7 = vector.load %arg2[%6, %c0_2] : memref<1000x128xf32, #tpu.memory_space<vmem>>, vector<1x128xf32>
    %c0_3 = arith.constant 0 : index
    %c0_4 = arith.constant 0 : index
    %8 = vector.load %arg14[%c0_3, %c0_4] : memref<128x384xf32, #tpu.memory_space<vmem>>, vector<1x128xf32>
    tpu.vector_store %arg14[%c0_3, %c0_4], %7 {strides = array<i32>} : memref<128x384xf32, #tpu.memory_space<vmem>>, vector<1x128xf32>,
    %c8_i32_5 = arith.constant 8 : i32
    %9 = arith.muli %arg0, %c8_i32_5 : i32
    %c0_i32_6 = arith.constant 0 : i32
    %10 = arith.addi %9, %c0_i32_6 : i32
    %11 = arith.index_cast %10 : i32 to index
    %c1 = arith.constant 1 : index
    %12 = memref.load %arg1[%11, %c1] : memref<8x16xi32, #tpu.memory_space<smem>>
    %13 = arith.index_cast %12 : i32 to index
    %c0_7 = arith.constant 0 : index
    %14 = vector.load %arg2[%13, %c0_7] : memref<1000x128xf32, #tpu.memory_space<vmem>>, vector<1x128xf32>
    %c1_8 = arith.constant 1 : index
    %c0_9 = arith.constant 0 : index
    %15 = vector.load %arg14[%c1_8, %c0_9] : memref<128x384xf32, #tpu.memory_space<vmem>>, vector<1x128xf32>
    tpu.vector_store %arg14[%c1_8, %c0_9], %14 {strides = array<i32>} : memref<128x384xf32, #tpu.memory_space<vmem>>, vector<1x128xf32>,
    %c0_10 = arith.constant 0 : index
    %c128 = arith.constant 128 : index
    %16 = vector.load %arg14[%c0_10, %c128] : memref<128x384xf32, #tpu.memory_space<vmem>>, vector<1x128xf32>
    tpu.vector_store %arg14[%c0_10, %c128], %14 {strides = array<i32>} : memref<128x384xf32, #tpu.memory_space<vmem>>, vector<1x128xf32>,
    %c8_i32_11 = arith.constant 8 : i32
    %17 = arith.muli %arg0, %c8_i32_11 : i32
    %c0_i32_12 = arith.constant 0 : i32
    %18 = arith.addi %17, %c0_i32_12 : i32
    %19 = arith.index_cast %18 : i32 to index
    %c2 = arith.constant 2 : index
    %20 = memref.load %arg1[%19, %c2] : memref<8x16xi32, #tpu.memory_space<smem>>
    %21 = arith.index_cast %20 : i32 to index
    %c0_13 = arith.constant 0 : index
    %22 = vector.load %arg2[%21, %c0_13] : memref<1000x128xf32, #tpu.memory_space<vmem>>, vector<1x128xf32>
    %c2_14 = arith.constant 2 : index
    %c0_15 = arith.constant 0 : index
    %23 = vector.load %arg14[%c2_14, %c0_15] : memref<128x384xf32, #tpu.memory_space<vmem>>, vector<1x128xf32>
    tpu.vector_store %arg14[%c2_14, %c0_15], %22 {strides = array<i32>} : memref<128x384xf32, #tpu.memory_space<vmem>>, vector<1x128xf32>,
    %c1_16 = arith.constant 1 : index
    %c128_17 = arith.constant 128 : index
    %24 = vector.load %arg14[%c1_16, %c128_17] : memref<128x384xf32, #tpu.memory_space<vmem>>, vector<1x128xf32>
    tpu.vector_store %arg14[%c1_16, %c128_17], %22 {strides = array<i32>} : memref<128x384xf32, #tpu.memory_space<vmem>>, vector<1x128xf32>,
    %c0_18 = arith.constant 0 : index
    %c256 = arith.constant 256 : index
    %25 = vector.load %arg14[%c0_18, %c256] : memref<128x384xf32, #tpu.memory_space<vmem>>, vector<1x128xf32>
    tpu.vector_store %arg14[%c0_18, %c256], %22 {strides = array<i32>} : memref<128x384xf32, #tpu.memory_space<vmem>>, vector<1x128xf32>,
    %c8_i32_19 = arith.constant 8 : i32
    %26 = arith.muli %arg0, %c8_i32_19 : i32
    %c0_i32_20 = arith.constant 0 : i32
    %27 = arith.addi %26, %c0_i32_20 : i32
    %28 = arith.index_cast %27 : i32 to index
    %c3 = arith.constant 3 : index
    %29 = memref.load %arg1[%28, %c3] : memref<8x16xi32, #tpu.memory_space<smem>>
    %30 = arith.index_cast %29 : i32 to index
    %c0_21 = arith.constant 0 : index
    %31 = vector.load %arg2[%30, %c0_21] : memref<1000x128xf32, #tpu.memory_space<vmem>>, vector<1x128xf32>
    %c3_22 = arith.constant 3 : index
    %c0_23 = arith.constant 0 : index
    %32 = vector.load %arg14[%c3_22, %c0_23] : memref<128x384xf32, #tpu.memory_space<vmem>>, vector<1x128xf32>
    tpu.vector_store %arg14[%c3_22, %c0_23], %31 {strides = array<i32>} : memref<128x384xf32, #tpu.memory_space<vmem>>, vector<1x128xf32>,
    %c2_24 = arith.constant 2 : index
    %c128_25 = arith.constant 128 : index
    %33 = vector.load %arg14[%c2_24, %c128_25] : memref<128x384xf32, #tpu.memory_space<vmem>>, vector<1x128xf32>
    tpu.vector_store %arg14[%c2_24, %c128_25], %31 {strides = array<i32>} : memref<128x384xf32, #tpu.memory_space<vmem>>, vector<1x128xf32>,
    %c1_26 = arith.constant 1 : index
    %c256_27 = arith.constant 256 : index
    %34 = vector.load %arg14[%c1_26, %c256_27] : memref<128x384xf32, #tpu.memory_space<vmem>>, vector<1x128xf32>
    tpu.vector_store %arg14[%c1_26, %c256_27], %31 {strides = array<i32>} : memref<128x384xf32, #tpu.memory_space<vmem>>, vector<1x128xf32>,
    %c8_i32_28 = arith.constant 8 : i32
    %35 = arith.muli %arg0, %c8_i32_28 : i32
    %c0_i32_29 = arith.constant 0 : i32
    %36 = arith.addi %35, %c0_i32_29 : i32
    %37 = arith.index_cast %36 : i32 to index
    %c4 = arith.constant 4 : index
    %38 = memref.load %arg1[%37, %c4] : memref<8x16xi32, #tpu.memory_space<smem>>
    %39 = arith.index_cast %38 : i32 to index
    %c0_30 = arith.constant 0 : index
    %40 = vector.load %arg2[%39, %c0_30] : memref<1000x128xf32, #tpu.memory_space<vmem>>, vector<1x128xf32>
    %c4_31 = arith.constant 4 : index
    %c0_32 = arith.constant 0 : index
    %41 = vector.load %arg14[%c4_31, %c0_32] : memref<128x384xf32, #tpu.memory_space<vmem>>, vector<1x128xf32>
    tpu.vector_store %arg14[%c4_31, %c0_32], %40 {strides = array<i32>} : memref<128x384xf32, #tpu.memory_space<vmem>>, vector<1x128xf32>,
    %c3_33 = arith.constant 3 : index
    %c128_34 = arith.constant 128 : index
    %42 = vector.load %arg14[%c3_33, %c128_34] : memref<128x384xf32, #tpu.memory_space<vmem>>, vector<1x128xf32>
    tpu.vector_store %arg14[%c3_33, %c128_34], %40 {strides = array<i32>} : memref<128x384xf32, #tpu.memory_space<vmem>>, vector<1x128xf32>,
    %c2_35 = arith.constant 2 : index
    %c256_36 = arith.constant 256 : index
    %43 = vector.load %arg14[%c2_35, %c256_36] : memref<128x384xf32, #tpu.memory_space<vmem>>, vector<1x128xf32>
    tpu.vector_store %arg14[%c2_35, %c256_36], %40 {strides = array<i32>} : memref<128x384xf32, #tpu.memory_space<vmem>>, vector<1x128xf32>,
    %c8_i32_37 = arith.constant 8 : i32
    %44 = arith.muli %arg0, %c8_i32_37 : i32
    %c0_i32_38 = arith.constant 0 : i32
    %45 = arith.addi %44, %c0_i32_38 : i32
    %46 = arith.index_cast %45 : i32 to index
    %c5 = arith.constant 5 : index
    %47 = memref.load %arg1[%46, %c5] : memref<8x16xi32, #tpu.memory_space<smem>>
    %48 = arith.index_cast %47 : i32 to index
    %c0_39 = arith.constant 0 : index
    %49 = vector.load %arg2[%48, %c0_39] : memref<1000x128xf32, #tpu.memory_space<vmem>>, vector<1x128xf32>
    %c5_40 = arith.constant 5 : index
    %c0_41 = arith.constant 0 : index
    %50 = vector.load %arg14[%c5_40, %c0_41] : memref<128x384xf32, #tpu.memory_space<vmem>>, vector<1x128xf32>
    tpu.vector_store %arg14[%c5_40, %c0_41], %49 {strides = array<i32>} : memref<128x384xf32, #tpu.memory_space<vmem>>, vector<1x128xf32>,
    %c4_42 = arith.constant 4 : index
    %c128_43 = arith.constant 128 : index
    %51 = vector.load %arg14[%c4_42, %c128_43] : memref<128x384xf32, #tpu.memory_space<vmem>>, vector<1x128xf32>
    tpu.vector_store %arg14[%c4_42, %c128_43], %49 {strides = array<i32>} : memref<128x384xf32, #tpu.memory_space<vmem>>, vector<1x128xf32>,
    %c3_44 = arith.constant 3 : index
    %c256_45 = arith.constant 256 : index
    %52 = vector.load %arg14[%c3_44, %c256_45] : memref<128x384xf32, #tpu.memory_space<vmem>>, vector<1x128xf32>
    tpu.vector_store %arg14[%c3_44, %c256_45], %49 {strides = array<i32>} : memref<128x384xf32, #tpu.memory_space<vmem>>, vector<1x128xf32>,
    %c8_i32_46 = arith.constant 8 : i32
    %53 = arith.muli %arg0, %c8_i32_46 : i32
    %c0_i32_47 = arith.constant 0 : i32
    %54 = arith.addi %53, %c0_i32_47 : i32
    %55 = arith.index_cast %54 : i32 to index
    %c6 = arith.constant 6 : index
    %56 = memref.load %arg1[%55, %c6] : memref<8x16xi32, #tpu.memory_space<smem>>
    %57 = arith.index_cast %56 : i32 to index
    %c0_48 = arith.constant 0 : index
    %58 = vector.load %arg2[%57, %c0_48] : memref<1000x128xf32, #tpu.memory_space<vmem>>, vector<1x128xf32>
    %c6_49 = arith.constant 6 : index
    %c0_50 = arith.constant 0 : index
    %59 = vector.load %arg14[%c6_49, %c0_50] : memref<128x384xf32, #tpu.memory_space<vmem>>, vector<1x128xf32>
    tpu.vector_store %arg14[%c6_49, %c0_50], %58 {strides = array<i32>} : memref<128x384xf32, #tpu.memory_space<vmem>>, vector<1x128xf32>,
    %c5_51 = arith.constant 5 : index
    %c128_52 = arith.constant 128 : index
    %60 = vector.load %arg14[%c5_51, %c128_52] : memref<128x384xf32, #tpu.memory_space<vmem>>, vector<1x128xf32>
    tpu.vector_store %arg14[%c5_51, %c128_52], %58 {strides = array<i32>} : memref<128x384xf32, #tpu.memory_space<vmem>>, vector<1x128xf32>,
    %c4_53 = arith.constant 4 : index
    %c256_54 = arith.constant 256 : index
    %61 = vector.load %arg14[%c4_53, %c256_54] : memref<128x384xf32, #tpu.memory_space<vmem>>, vector<1x128xf32>
    tpu.vector_store %arg14[%c4_53, %c256_54], %58 {strides = array<i32>} : memref<128x384xf32, #tpu.memory_space<vmem>>, vector<1x128xf32>,
    %c8_i32_55 = arith.constant 8 : i32
    %62 = arith.muli %arg0, %c8_i32_55 : i32
    %c0_i32_56 = arith.constant 0 : i32
    %63 = arith.addi %62, %c0_i32_56 : i32
    %64 = arith.index_cast %63 : i32 to index
    %c7 = arith.constant 7 : index
    %65 = memref.load %arg1[%64, %c7] : memref<8x16xi32, #tpu.memory_space<smem>>
    %66 = arith.index_cast %65 : i32 to index
    %c0_57 = arith.constant 0 : index
    %67 = vector.load %arg2[%66, %c0_57] : memref<1000x128xf32, #tpu.memory_space<vmem>>, vector<1x128xf32>
    %c7_58 = arith.constant 7 : index
    %c0_59 = arith.constant 0 : index
    %68 = vector.load %arg14[%c7_58, %c0_59] : memref<128x384xf32, #tpu.memory_space<vmem>>, vector<1x128xf32>
    tpu.vector_store %arg14[%c7_58, %c0_59], %67 {strides = array<i32>} : memref<128x384xf32, #tpu.memory_space<vmem>>, vector<1x128xf32>,
    %c6_60 = arith.constant 6 : index
    %c128_61 = arith.constant 128 : index
    %69 = vector.load %arg14[%c6_60, %c128_61] : memref<128x384xf32, #tpu.memory_space<vmem>>, vector<1x128xf32>
    tpu.vector_store %arg14[%c6_60, %c128_61], %67 {strides = array<i32>} : memref<128x384xf32, #tpu.memory_space<vmem>>, vector<1x128xf32>,
    %c5_62 = arith.constant 5 : index
    %c256_63 = arith.constant 256 : index
    %70 = vector.load %arg14[%c5_62, %c256_63] : memref<128x384xf32, #tpu.memory_space<vmem>>, vector<1x128xf32>
    tpu.vector_store %arg14[%c5_62, %c256_63], %67 {strides = array<i32>} : memref<128x384xf32, #tpu.memory_space<vmem>>, vector<1x128xf32>,
    %c8_i32_64 = arith.constant 8 : i32
    %71 = arith.muli %arg0, %c8_i32_64 : i32
    %c0_i32_65 = arith.constant 0 : i32
    %72 = arith.addi %71, %c0_i32_65 : i32
    %73 = arith.index_cast %72 : i32 to index
    %c8 = arith.constant 8 : index
    %74 = memref.load %arg1[%73, %c8] : memref<8x16xi32, #tpu.memory_space<smem>>
    %75 = arith.index_cast %74 : i32 to index
    %c0_66 = arith.constant 0 : index
    %76 = vector.load %arg2[%75, %c0_66] : memref<1000x128xf32, #tpu.memory_space<vmem>>, vector<1x128xf32>
    %c8_67 = arith.constant 8 : index
    %c0_68 = arith.constant 0 : index
    %77 = vector.load %arg14[%c8_67, %c0_68] : memref<128x384xf32, #tpu.memory_space<vmem>>, vector<1x128xf32>
    tpu.vector_store %arg14[%c8_67, %c0_68], %76 {strides = array<i32>} : memref<128x384xf32, #tpu.memory_space<vmem>>, vector<1x128xf32>,
    %c7_69 = arith.constant 7 : index
    %c128_70 = arith.constant 128 : index
    %78 = vector.load %arg14[%c7_69, %c128_70] : memref<128x384xf32, #tpu.memory_space<vmem>>, vector<1x128xf32>
    tpu.vector_store %arg14[%c7_69, %c128_70], %76 {strides = array<i32>} : memref<128x384xf32, #tpu.memory_space<vmem>>, vector<1x128xf32>,
    %c6_71 = arith.constant 6 : index
    %c256_72 = arith.constant 256 : index
    %79 = vector.load %arg14[%c6_71, %c256_72] : memref<128x384xf32, #tpu.memory_space<vmem>>, vector<1x128xf32>
    tpu.vector_store %arg14[%c6_71, %c256_72], %76 {strides = array<i32>} : memref<128x384xf32, #tpu.memory_space<vmem>>, vector<1x128xf32>,
    %c8_i32_73 = arith.constant 8 : i32
    %80 = arith.muli %arg0, %c8_i32_73 : i32
    %c0_i32_74 = arith.constant 0 : i32
    %81 = arith.addi %80, %c0_i32_74 : i32
    %82 = arith.index_cast %81 : i32 to index
    %c9 = arith.constant 9 : index
    %83 = memref.load %arg1[%82, %c9] : memref<8x16xi32, #tpu.memory_space<smem>>
    %84 = arith.index_cast %83 : i32 to index
    %c0_75 = arith.constant 0 : index
    %85 = vector.load %arg2[%84, %c0_75] : memref<1000x128xf32, #tpu.memory_space<vmem>>, vector<1x128xf32>
    %c9_76 = arith.constant 9 : index
    %c0_77 = arith.constant 0 : index
    %86 = vector.load %arg14[%c9_76, %c0_77] : memref<128x384xf32, #tpu.memory_space<vmem>>, vector<1x128xf32>
    tpu.vector_store %arg14[%c9_76, %c0_77], %85 {strides = array<i32>} : memref<128x384xf32, #tpu.memory_space<vmem>>, vector<1x128xf32>,
    %c8_78 = arith.constant 8 : index
    %c128_79 = arith.constant 128 : index
    %87 = vector.load %arg14[%c8_78, %c128_79] : memref<128x384xf32, #tpu.memory_space<vmem>>, vector<1x128xf32>
    tpu.vector_store %arg14[%c8_78, %c128_79], %85 {strides = array<i32>} : memref<128x384xf32, #tpu.memory_space<vmem>>, vector<1x128xf32>,
    %c7_80 = arith.constant 7 : index
    %c256_81 = arith.constant 256 : index
    %88 = vector.load %arg14[%c7_80, %c256_81] : memref<128x384xf32, #tpu.memory_space<vmem>>, vector<1x128xf32>
    tpu.vector_store %arg14[%c7_80, %c256_81], %85 {strides = array<i32>} : memref<128x384xf32, #tpu.memory_space<vmem>>, vector<1x128xf32>,
    %c8_i32_82 = arith.constant 8 : i32
    %89 = arith.muli %arg0, %c8_i32_82 : i32
    %c0_i32_83 = arith.constant 0 : i32
    %90 = arith.addi %89, %c0_i32_83 : i32
    %91 = arith.index_cast %90 : i32 to index
    %c10 = arith.constant 10 : index
    %92 = memref.load %arg1[%91, %c10] : memref<8x16xi32, #tpu.memory_space<smem>>
    %93 = arith.index_cast %92 : i32 to index
    %c0_84 = arith.constant 0 : index
    %94 = vector.load %arg2[%93, %c0_84] : memref<1000x128xf32, #tpu.memory_space<vmem>>, vector<1x128xf32>
    %c10_85 = arith.constant 10 : index
    %c0_86 = arith.constant 0 : index
    %95 = vector.load %arg14[%c10_85, %c0_86] : memref<128x384xf32, #tpu.memory_space<vmem>>, vector<1x128xf32>
    tpu.vector_store %arg14[%c10_85, %c0_86], %94 {strides = array<i32>} : memref<128x384xf32, #tpu.memory_space<vmem>>, vector<1x128xf32>,
    %c9_87 = arith.constant 9 : index
    %c128_88 = arith.constant 128 : index
    %96 = vector.load %arg14[%c9_87, %c128_88] : memref<128x384xf32, #tpu.memory_space<vmem>>, vector<1x128xf32>
    tpu.vector_store %arg14[%c9_87, %c128_88], %94 {strides = array<i32>} : memref<128x384xf32, #tpu.memory_space<vmem>>, vector<1x128xf32>,
    %c8_89 = arith.constant 8 : index
    %c256_90 = arith.constant 256 : index
    %97 = vector.load %arg14[%c8_89, %c256_90] : memref<128x384xf32, #tpu.memory_space<vmem>>, vector<1x128xf32>
    tpu.vector_store %arg14[%c8_89, %c256_90], %94 {strides = array<i32>} : memref<128x384xf32, #tpu.memory_space<vmem>>, vector<1x128xf32>,
    %c8_i32_91 = arith.constant 8 : i32
    %98 = arith.muli %arg0, %c8_i32_91 : i32
    %c0_i32_92 = arith.constant 0 : i32
    %99 = arith.addi %98, %c0_i32_92 : i32
    %100 = arith.index_cast %99 : i32 to index
    %c11 = arith.constant 11 : index
    %101 = memref.load %arg1[%100, %c11] : memref<8x16xi32, #tpu.memory_space<smem>>
    %102 = arith.index_cast %101 : i32 to index
    %c0_93 = arith.constant 0 : index
    %103 = vector.load %arg2[%102, %c0_93] : memref<1000x128xf32, #tpu.memory_space<vmem>>, vector<1x128xf32>
    %c11_94 = arith.constant 11 : index
    %c0_95 = arith.constant 0 : index
    %104 = vector.load %arg14[%c11_94, %c0_95] : memref<128x384xf32, #tpu.memory_space<vmem>>, vector<1x128xf32>
    tpu.vector_store %arg14[%c11_94, %c0_95], %103 {strides = array<i32>} : memref<128x384xf32, #tpu.memory_space<vmem>>, vector<1x128xf32>,
    %c10_96 = arith.constant 10 : index
    %c128_97 = arith.constant 128 : index
    %105 = vector.load %arg14[%c10_96, %c128_97] : memref<128x384xf32, #tpu.memory_space<vmem>>, vector<1x128xf32>
    tpu.vector_store %arg14[%c10_96, %c128_97], %103 {strides = array<i32>} : memref<128x384xf32, #tpu.memory_space<vmem>>, vector<1x128xf32>,
    %c9_98 = arith.constant 9 : index
    %c256_99 = arith.constant 256 : index
    %106 = vector.load %arg14[%c9_98, %c256_99] : memref<128x384xf32, #tpu.memory_space<vmem>>, vector<1x128xf32>
    tpu.vector_store %arg14[%c9_98, %c256_99], %103 {strides = array<i32>} : memref<128x384xf32, #tpu.memory_space<vmem>>, vector<1x128xf32>,
    %c8_i32_100 = arith.constant 8 : i32
    %107 = arith.muli %arg0, %c8_i32_100 : i32
    %c0_i32_101 = arith.constant 0 : i32
    %108 = arith.addi %107, %c0_i32_101 : i32
    %109 = arith.index_cast %108 : i32 to index
    %c12 = arith.constant 12 : index
    %110 = memref.load %arg1[%109, %c12] : memref<8x16xi32, #tpu.memory_space<smem>>
    %111 = arith.index_cast %110 : i32 to index
    %c0_102 = arith.constant 0 : index
    %112 = vector.load %arg2[%111, %c0_102] : memref<1000x128xf32, #tpu.memory_space<vmem>>, vector<1x128xf32>
    %c12_103 = arith.constant 12 : index
    %c0_104 = arith.constant 0 : index
    %113 = vector.load %arg14[%c12_103, %c0_104] : memref<128x384xf32, #tpu.memory_space<vmem>>, vector<1x128xf32>
    tpu.vector_store %arg14[%c12_103, %c0_104], %112 {strides = array<i32>} : memref<128x384xf32, #tpu.memory_space<vmem>>, vector<1x128xf32>,
    %c11_105 = arith.constant 11 : index
    %c128_106 = arith.constant 128 : index
    %114 = vector.load %arg14[%c11_105, %c128_106] : memref<128x384xf32, #tpu.memory_space<vmem>>, vector<1x128xf32>
    tpu.vector_store %arg14[%c11_105, %c128_106], %112 {strides = array<i32>} : memref<128x384xf32, #tpu.memory_space<vmem>>, vector<1x128xf32>,
    %c10_107 = arith.constant 10 : index
    %c256_108 = arith.constant 256 : index
    %115 = vector.load %arg14[%c10_107, %c256_108] : memref<128x384xf32, #tpu.memory_space<vmem>>, vector<1x128xf32>
    tpu.vector_store %arg14[%c10_107, %c256_108], %112 {strides = array<i32>} : memref<128x384xf32, #tpu.memory_space<vmem>>, vector<1x128xf32>,
    %c8_i32_109 = arith.constant 8 : i32
    %116 = arith.muli %arg0, %c8_i32_109 : i32
    %c0_i32_110 = arith.constant 0 : i32
    %117 = arith.addi %116, %c0_i32_110 : i32
    %118 = arith.index_cast %117 : i32 to index
    %c13 = arith.constant 13 : index
    %119 = memref.load %arg1[%118, %c13] : memref<8x16xi32, #tpu.memory_space<smem>>
    %120 = arith.index_cast %119 : i32 to index
    %c0_111 = arith.constant 0 : index
    %121 = vector.load %arg2[%120, %c0_111] : memref<1000x128xf32, #tpu.memory_space<vmem>>, vector<1x128xf32>
    %c13_112 = arith.constant 13 : index
    %c0_113 = arith.constant 0 : index
    %122 = vector.load %arg14[%c13_112, %c0_113] : memref<128x384xf32, #tpu.memory_space<vmem>>, vector<1x128xf32>
    tpu.vector_store %arg14[%c13_112, %c0_113], %121 {strides = array<i32>} : memref<128x384xf32, #tpu.memory_space<vmem>>, vector<1x128xf32>,
    %c12_114 = arith.constant 12 : index
    %c128_115 = arith.constant 128 : index
    %123 = vector.load %arg14[%c12_114, %c128_115] : memref<128x384xf32, #tpu.memory_space<vmem>>, vector<1x128xf32>
    tpu.vector_store %arg14[%c12_114, %c128_115], %121 {strides = array<i32>} : memref<128x384xf32, #tpu.memory_space<vmem>>, vector<1x128xf32>,
    %c11_116 = arith.constant 11 : index
    %c256_117 = arith.constant 256 : index
    %124 = vector.load %arg14[%c11_116, %c256_117] : memref<128x384xf32, #tpu.memory_space<vmem>>, vector<1x128xf32>
    tpu.vector_store %arg14[%c11_116, %c256_117], %121 {strides = array<i32>} : memref<128x384xf32, #tpu.memory_space<vmem>>, vector<1x128xf32>,
    %c8_i32_118 = arith.constant 8 : i32
    %125 = arith.muli %arg0, %c8_i32_118 : i32
    %c0_i32_119 = arith.constant 0 : i32
    %126 = arith.addi %125, %c0_i32_119 : i32
    %127 = arith.index_cast %126 : i32 to index
    %c14 = arith.constant 14 : index
    %128 = memref.load %arg1[%127, %c14] : memref<8x16xi32, #tpu.memory_space<smem>>
    %129 = arith.index_cast %128 : i32 to index
    %c0_120 = arith.constant 0 : index
    %130 = vector.load %arg2[%129, %c0_120] : memref<1000x128xf32, #tpu.memory_space<vmem>>, vector<1x128xf32>
    %c13_121 = arith.constant 13 : index
    %c128_122 = arith.constant 128 : index
    %131 = vector.load %arg14[%c13_121, %c128_122] : memref<128x384xf32, #tpu.memory_space<vmem>>, vector<1x128xf32>
    tpu.vector_store %arg14[%c13_121, %c128_122], %130 {strides = array<i32>} : memref<128x384xf32, #tpu.memory_space<vmem>>, vector<1x128xf32>,
    %c12_123 = arith.constant 12 : index
    %c256_124 = arith.constant 256 : index
    %132 = vector.load %arg14[%c12_123, %c256_124] : memref<128x384xf32, #tpu.memory_space<vmem>>, vector<1x128xf32>
    tpu.vector_store %arg14[%c12_123, %c256_124], %130 {strides = array<i32>} : memref<128x384xf32, #tpu.memory_space<vmem>>, vector<1x128xf32>,
    %c8_i32_125 = arith.constant 8 : i32
    %133 = arith.muli %arg0, %c8_i32_125 : i32
    %c0_i32_126 = arith.constant 0 : i32
    %134 = arith.addi %133, %c0_i32_126 : i32
    %135 = arith.index_cast %134 : i32 to index
    %c15 = arith.constant 15 : index
    %136 = memref.load %arg1[%135, %c15] : memref<8x16xi32, #tpu.memory_space<smem>>
    %137 = arith.index_cast %136 : i32 to index
    %c0_127 = arith.constant 0 : index
    %138 = vector.load %arg2[%137, %c0_127] : memref<1000x128xf32, #tpu.memory_space<vmem>>, vector<1x128xf32>
    %c13_128 = arith.constant 13 : index
    %c256_129 = arith.constant 256 : index
    %139 = vector.load %arg14[%c13_128, %c256_129] : memref<128x384xf32, #tpu.memory_space<vmem>>, vector<1x128xf32>
    tpu.vector_store %arg14[%c13_128, %c256_129], %138 {strides = array<i32>} : memref<128x384xf32, #tpu.memory_space<vmem>>, vector<1x128xf32>,
    %c8_i32_130 = arith.constant 8 : i32
    %140 = arith.muli %arg0, %c8_i32_130 : i32
    %c1_i32 = arith.constant 1 : i32
    %141 = arith.addi %140, %c1_i32 : i32
    %142 = arith.index_cast %141 : i32 to index
    %c0_131 = arith.constant 0 : index
    %143 = memref.load %arg1[%142, %c0_131] : memref<8x16xi32, #tpu.memory_space<smem>>
    %144 = arith.index_cast %143 : i32 to index
    %c0_132 = arith.constant 0 : index
    %145 = vector.load %arg2[%144, %c0_132] : memref<1000x128xf32, #tpu.memory_space<vmem>>, vector<1x128xf32>
    %c16 = arith.constant 16 : index
    %c0_133 = arith.constant 0 : index
    %146 = vector.load %arg14[%c16, %c0_133] : memref<128x384xf32, #tpu.memory_space<vmem>>, vector<1x128xf32>
    tpu.vector_store %arg14[%c16, %c0_133], %145 {strides = array<i32>} : memref<128x384xf32, #tpu.memory_space<vmem>>, vector<1x128xf32>,
    %c8_i32_134 = arith.constant 8 : i32
    %147 = arith.muli %arg0, %c8_i32_134 : i32
    %c1_i32_135 = arith.constant 1 : i32
    %148 = arith.addi %147, %c1_i32_135 : i32
    %149 = arith.index_cast %148 : i32 to index
    %c1_136 = arith.constant 1 : index
    %150 = memref.load %arg1[%149, %c1_136] : memref<8x16xi32, #tpu.memory_space<smem>>
    %151 = arith.index_cast %150 : i32 to index
    %c0_137 = arith.constant 0 : index
    %152 = vector.load %arg2[%151, %c0_137] : memref<1000x128xf32, #tpu.memory_space<vmem>>, vector<1x128xf32>
    %c17 = arith.constant 17 : index
    %c0_138 = arith.constant 0 : index
    %153 = vector.load %arg14[%c17, %c0_138] : memref<128x384xf32, #tpu.memory_space<vmem>>, vector<1x128xf32>
    tpu.vector_store %arg14[%c17, %c0_138], %152 {strides = array<i32>} : memref<128x384xf32, #tpu.memory_space<vmem>>, vector<1x128xf32>,
    %c16_139 = arith.constant 16 : index
    %c128_140 = arith.constant 128 : index
    %154 = vector.load %arg14[%c16_139, %c128_140] : memref<128x384xf32, #tpu.memory_space<vmem>>, vector<1x128xf32>
    tpu.vector_store %arg14[%c16_139, %c128_140], %152 {strides = array<i32>} : memref<128x384xf32, #tpu.memory_space<vmem>>, vector<1x128xf32>,
    %c8_i32_141 = arith.constant 8 : i32
    %155 = arith.muli %arg0, %c8_i32_141 : i32
    %c1_i32_142 = arith.constant 1 : i32
    %156 = arith.addi %155, %c1_i32_142 : i32
    %157 = arith.index_cast %156 : i32 to index
    %c2_143 = arith.constant 2 : index
    %158 = memref.load %arg1[%157, %c2_143] : memref<8x16xi32, #tpu.memory_space<smem>>
    %159 = arith.index_cast %158 : i32 to index
    %c0_144 = arith.constant 0 : index
    %160 = vector.load %arg2[%159, %c0_144] : memref<1000x128xf32, #tpu.memory_space<vmem>>, vector<1x128xf32>
    %c18 = arith.constant 18 : index
    %c0_145 = arith.constant 0 : index
    %161 = vector.load %arg14[%c18, %c0_145] : memref<128x384xf32, #tpu.memory_space<vmem>>, vector<1x128xf32>
    tpu.vector_store %arg14[%c18, %c0_145], %160 {strides = array<i32>} : memref<128x384xf32, #tpu.memory_space<vmem>>, vector<1x128xf32>,
    %c17_146 = arith.constant 17 : index
    %c128_147 = arith.constant 128 : index
    %162 = vector.load %arg14[%c17_146, %c128_147] : memref<128x384xf32, #tpu.memory_space<vmem>>, vector<1x128xf32>
    tpu.vector_store %arg14[%c17_146, %c128_147], %160 {strides = array<i32>} : memref<128x384xf32, #tpu.memory_space<vmem>>, vector<1x128xf32>,
    %c16_148 = arith.constant 16 : index
    %c256_149 = arith.constant 256 : index
    %163 = vector.load %arg14[%c16_148, %c256_149] : memref<128x384xf32, #tpu.memory_space<vmem>>, vector<1x128xf32>
    tpu.vector_store %arg14[%c16_148, %c256_149], %160 {strides = array<i32>} : memref<128x384xf32, #tpu.memory_space<vmem>>, vector<1x128xf32>,
    %c8_i32_150 = arith.constant 8 : i32
    %164 = arith.muli %arg0, %c8_i32_150 : i32
    %c1_i32_151 = arith.constant 1 : i32
    %165 = arith.addi %164, %c1_i32_151 : i32
    %166 = arith.index_cast %165 : i32 to index
    %c3_152 = arith.constant 3 : index
    %167 = memref.load %arg1[%166, %c3_152] : memref<8x16xi32, #tpu.memory_space<smem>>
    %168 = arith.index_cast %167 : i32 to index
    %c0_153 = arith.constant 0 : index
    %169 = vector.load %arg2[%168, %c0_153] : memref<1000x128xf32, #tpu.memory_space<vmem>>, vector<1x128xf32>
    %c19 = arith.constant 19 : index
    %c0_154 = arith.constant 0 : index
    %170 = vector.load %arg14[%c19, %c0_154] : memref<128x384xf32, #tpu.memory_space<vmem>>, vector<1x128xf32>
    tpu.vector_store %arg14[%c19, %c0_154], %169 {strides = array<i32>} : memref<128x384xf32, #tpu.memory_space<vmem>>, vector<1x128xf32>,
    %c18_155 = arith.constant 18 : index
    %c128_156 = arith.constant 128 : index
    %171 = vector.load %arg14[%c18_155, %c128_156] : memref<128x384xf32, #tpu.memory_space<vmem>>, vector<1x128xf32>
    tpu.vector_store %arg14[%c18_155, %c128_156], %169 {strides = array<i32>} : memref<128x384xf32, #tpu.memory_space<vmem>>, vector<1x128xf32>,
    %c17_157 = arith.constant 17 : index
    %c256_158 = arith.constant 256 : index
    %172 = vector.load %arg14[%c17_157, %c256_158] : memref<128x384xf32, #tpu.memory_space<vmem>>, vector<1x128xf32>
    tpu.vector_store %arg14[%c17_157, %c256_158], %169 {strides = array<i32>} : memref<128x384xf32, #tpu.memory_space<vmem>>, vector<1x128xf32>,
    %c8_i32_159 = arith.constant 8 : i32
    %173 = arith.muli %arg0, %c8_i32_159 : i32
    %c1_i32_160 = arith.constant 1 : i32
    %174 = arith.addi %173, %c1_i32_160 : i32
    %175 = arith.index_cast %174 : i32 to index
    %c4_161 = arith.constant 4 : index
    %176 = memref.load %arg1[%175, %c4_161] : memref<8x16xi32, #tpu.memory_space<smem>>
    %177 = arith.index_cast %176 : i32 to index
    %c0_162 = arith.constant 0 : index
    %178 = vector.load %arg2[%177, %c0_162] : memref<1000x128xf32, #tpu.memory_space<vmem>>, vector<1x128xf32>
    %c20 = arith.constant 20 : index
    %c0_163 = arith.constant 0 : index
    %179 = vector.load %arg14[%c20, %c0_163] : memref<128x384xf32, #tpu.memory_space<vmem>>, vector<1x128xf32>
    tpu.vector_store %arg14[%c20, %c0_163], %178 {strides = array<i32>} : memref<128x384xf32, #tpu.memory_space<vmem>>, vector<1x128xf32>,
    %c19_164 = arith.constant 19 : index
    %c128_165 = arith.constant 128 : index
    %180 = vector.load %arg14[%c19_164, %c128_165] : memref<128x384xf32, #tpu.memory_space<vmem>>, vector<1x128xf32>
    tpu.vector_store %arg14[%c19_164, %c128_165], %178 {strides = array<i32>} : memref<128x384xf32, #tpu.memory_space<vmem>>, vector<1x128xf32>,
    %c18_166 = arith.constant 18 : index
    %c256_167 = arith.constant 256 : index
    %181 = vector.load %arg14[%c18_166, %c256_167] : memref<128x384xf32, #tpu.memory_space<vmem>>, vector<1x128xf32>
    tpu.vector_store %arg14[%c18_166, %c256_167], %178 {strides = array<i32>} : memref<128x384xf32, #tpu.memory_space<vmem>>, vector<1x128xf32>,
    %c8_i32_168 = arith.constant 8 : i32
    %182 = arith.muli %arg0, %c8_i32_168 : i32
    %c1_i32_169 = arith.constant 1 : i32
    %183 = arith.addi %182, %c1_i32_169 : i32
    %184 = arith.index_cast %183 : i32 to index
    %c5_170 = arith.constant 5 : index
    %185 = memref.load %arg1[%184, %c5_170] : memref<8x16xi32, #tpu.memory_space<smem>>
    %186 = arith.index_cast %185 : i32 to index
    %c0_171 = arith.constant 0 : index
    %187 = vector.load %arg2[%186, %c0_171] : memref<1000x128xf32, #tpu.memory_space<vmem>>, vector<1x128xf32>
    %c21 = arith.constant 21 : index
    %c0_172 = arith.constant 0 : index
    %188 = vector.load %arg14[%c21, %c0_172] : memref<128x384xf32, #tpu.memory_space<vmem>>, vector<1x128xf32>
    tpu.vector_store %arg14[%c21, %c0_172], %187 {strides = array<i32>} : memref<128x384xf32, #tpu.memory_space<vmem>>, vector<1x128xf32>,
    %c20_173 = arith.constant 20 : index
    %c128_174 = arith.constant 128 : index
    %189 = vector.load %arg14[%c20_173, %c128_174] : memref<128x384xf32, #tpu.memory_space<vmem>>, vector<1x128xf32>
    tpu.vector_store %arg14[%c20_173, %c128_174], %187 {strides = array<i32>} : memref<128x384xf32, #tpu.memory_space<vmem>>, vector<1x128xf32>,
    %c19_175 = arith.constant 19 : index
    %c256_176 = arith.constant 256 : index
    %190 = vector.load %arg14[%c19_175, %c256_176] : memref<128x384xf32, #tpu.memory_space<vmem>>, vector<1x128xf32>
    tpu.vector_store %arg14[%c19_175, %c256_176], %187 {strides = array<i32>} : memref<128x384xf32, #tpu.memory_space<vmem>>, vector<1x128xf32>,
    %c8_i32_177 = arith.constant 8 : i32
    %191 = arith.muli %arg0, %c8_i32_177 : i32
    %c1_i32_178 = arith.constant 1 : i32
    %192 = arith.addi %191, %c1_i32_178 : i32
    %193 = arith.index_cast %192 : i32 to index
    %c6_179 = arith.constant 6 : index
    %194 = memref.load %arg1[%193, %c6_179] : memref<8x16xi32, #tpu.memory_space<smem>>
    %195 = arith.index_cast %194 : i32 to index
    %c0_180 = arith.constant 0 : index
    %196 = vector.load %arg2[%195, %c0_180] : memref<1000x128xf32, #tpu.memory_space<vmem>>, vector<1x128xf32>
    %c22 = arith.constant 22 : index
    %c0_181 = arith.constant 0 : index
    %197 = vector.load %arg14[%c22, %c0_181] : memref<128x384xf32, #tpu.memory_space<vmem>>, vector<1x128xf32>
    tpu.vector_store %arg14[%c22, %c0_181], %196 {strides = array<i32>} : memref<128x384xf32, #tpu.memory_space<vmem>>, vector<1x128xf32>,
    %c21_182 = arith.constant 21 : index
    %c128_183 = arith.constant 128 : index
    %198 = vector.load %arg14[%c21_182, %c128_183] : memref<128x384xf32, #tpu.memory_space<vmem>>, vector<1x128xf32>
    tpu.vector_store %arg14[%c21_182, %c128_183], %196 {strides = array<i32>} : memref<128x384xf32, #tpu.memory_space<vmem>>, vector<1x128xf32>,
    %c20_184 = arith.constant 20 : index
    %c256_185 = arith.constant 256 : index
    %199 = vector.load %arg14[%c20_184, %c256_185] : memref<128x384xf32, #tpu.memory_space<vmem>>, vector<1x128xf32>
    tpu.vector_store %arg14[%c20_184, %c256_185], %196 {strides = array<i32>} : memref<128x384xf32, #tpu.memory_space<vmem>>, vector<1x128xf32>,
    %c8_i32_186 = arith.constant 8 : i32
    %200 = arith.muli %arg0, %c8_i32_186 : i32
    %c1_i32_187 = arith.constant 1 : i32
    %201 = arith.addi %200, %c1_i32_187 : i32
    %202 = arith.index_cast %201 : i32 to index
    %c7_188 = arith.constant 7 : index
    %203 = memref.load %arg1[%202, %c7_188] : memref<8x16xi32, #tpu.memory_space<smem>>
    %204 = arith.index_cast %203 : i32 to index
    %c0_189 = arith.constant 0 : index
    %205 = vector.load %arg2[%204, %c0_189] : memref<1000x128xf32, #tpu.memory_space<vmem>>, vector<1x128xf32>
    %c23 = arith.constant 23 : index
    %c0_190 = arith.constant 0 : index
    %206 = vector.load %arg14[%c23, %c0_190] : memref<128x384xf32, #tpu.memory_space<vmem>>, vector<1x128xf32>
    tpu.vector_store %arg14[%c23, %c0_190], %205 {strides = array<i32>} : memref<128x384xf32, #tpu.memory_space<vmem>>, vector<1x128xf32>,
    %c22_191 = arith.constant 22 : index
    %c128_192 = arith.constant 128 : index
    %207 = vector.load %arg14[%c22_191, %c128_192] : memref<128x384xf32, #tpu.memory_space<vmem>>, vector<1x128xf32>
    tpu.vector_store %arg14[%c22_191, %c128_192], %205 {strides = array<i32>} : memref<128x384xf32, #tpu.memory_space<vmem>>, vector<1x128xf32>,
    %c21_193 = arith.constant 21 : index
    %c256_194 = arith.constant 256 : index
    %208 = vector.load %arg14[%c21_193, %c256_194] : memref<128x384xf32, #tpu.memory_space<vmem>>, vector<1x128xf32>
    tpu.vector_store %arg14[%c21_193, %c256_194], %205 {strides = array<i32>} : memref<128x384xf32, #tpu.memory_space<vmem>>, vector<1x128xf32>,
    %c8_i32_195 = arith.constant 8 : i32
    %209 = arith.muli %arg0, %c8_i32_195 : i32
    %c1_i32_196 = arith.constant 1 : i32
    %210 = arith.addi %209, %c1_i32_196 : i32
    %211 = arith.index_cast %210 : i32 to index
    %c8_197 = arith.constant 8 : index
    %212 = memref.load %arg1[%211, %c8_197] : memref<8x16xi32, #tpu.memory_space<smem>>
    %213 = arith.index_cast %212 : i32 to index
    %c0_198 = arith.constant 0 : index
    %214 = vector.load %arg2[%213, %c0_198] : memref<1000x128xf32, #tpu.memory_space<vmem>>, vector<1x128xf32>
    %c24 = arith.constant 24 : index
    %c0_199 = arith.constant 0 : index
    %215 = vector.load %arg14[%c24, %c0_199] : memref<128x384xf32, #tpu.memory_space<vmem>>, vector<1x128xf32>
    tpu.vector_store %arg14[%c24, %c0_199], %214 {strides = array<i32>} : memref<128x384xf32, #tpu.memory_space<vmem>>, vector<1x128xf32>,
    %c23_200 = arith.constant 23 : index
    %c128_201 = arith.constant 128 : index
    %216 = vector.load %arg14[%c23_200, %c128_201] : memref<128x384xf32, #tpu.memory_space<vmem>>, vector<1x128xf32>
    tpu.vector_store %arg14[%c23_200, %c128_201], %214 {strides = array<i32>} : memref<128x384xf32, #tpu.memory_space<vmem>>, vector<1x128xf32>,
    %c22_202 = arith.constant 22 : index
    %c256_203 = arith.constant 256 : index
    %217 = vector.load %arg14[%c22_202, %c256_203] : memref<128x384xf32, #tpu.memory_space<vmem>>, vector<1x128xf32>
    tpu.vector_store %arg14[%c22_202, %c256_203], %214 {strides = array<i32>} : memref<128x384xf32, #tpu.memory_space<vmem>>, vector<1x128xf32>,
    %c8_i32_204 = arith.constant 8 : i32
    %218 = arith.muli %arg0, %c8_i32_204 : i32
    %c1_i32_205 = arith.constant 1 : i32
    %219 = arith.addi %218, %c1_i32_205 : i32
    %220 = arith.index_cast %219 : i32 to index
    %c9_206 = arith.constant 9 : index
    %221 = memref.load %arg1[%220, %c9_206] : memref<8x16xi32, #tpu.memory_space<smem>>
    %222 = arith.index_cast %221 : i32 to index
    %c0_207 = arith.constant 0 : index
    %223 = vector.load %arg2[%222, %c0_207] : memref<1000x128xf32, #tpu.memory_space<vmem>>, vector<1x128xf32>
    %c25 = arith.constant 25 : index
    %c0_208 = arith.constant 0 : index
    %224 = vector.load %arg14[%c25, %c0_208] : memref<128x384xf32, #tpu.memory_space<vmem>>, vector<1x128xf32>
    tpu.vector_store %arg14[%c25, %c0_208], %223 {strides = array<i32>} : memref<128x384xf32, #tpu.memory_space<vmem>>, vector<1x128xf32>,
    %c24_209 = arith.constant 24 : index
    %c128_210 = arith.constant 128 : index
    %225 = vector.load %arg14[%c24_209, %c128_210] : memref<128x384xf32, #tpu.memory_space<vmem>>, vector<1x128xf32>
    tpu.vector_store %arg14[%c24_209, %c128_210], %223 {strides = array<i32>} : memref<128x384xf32, #tpu.memory_space<vmem>>, vector<1x128xf32>,
    %c23_211 = arith.constant 23 : index
    %c256_212 = arith.constant 256 : index
    %226 = vector.load %arg14[%c23_211, %c256_212] : memref<128x384xf32, #tpu.memory_space<vmem>>, vector<1x128xf32>
    tpu.vector_store %arg14[%c23_211, %c256_212], %223 {strides = array<i32>} : memref<128x384xf32, #tpu.memory_space<vmem>>, vector<1x128xf32>,
    %c8_i32_213 = arith.constant 8 : i32
    %227 = arith.muli %arg0, %c8_i32_213 : i32
    %c1_i32_214 = arith.constant 1 : i32
    %228 = arith.addi %227, %c1_i32_214 : i32
    %229 = arith.index_cast %228 : i32 to index
    %c10_215 = arith.constant 10 : index
    %230 = memref.load %arg1[%229, %c10_215] : memref<8x16xi32, #tpu.memory_space<smem>>
    %231 = arith.index_cast %230 : i32 to index
    %c0_216 = arith.constant 0 : index
    %232 = vector.load %arg2[%231, %c0_216] : memref<1000x128xf32, #tpu.memory_space<vmem>>, vector<1x128xf32>
    %c26 = arith.constant 26 : index
    %c0_217 = arith.constant 0 : index
    %233 = vector.load %arg14[%c26, %c0_217] : memref<128x384xf32, #tpu.memory_space<vmem>>, vector<1x128xf32>
    tpu.vector_store %arg14[%c26, %c0_217], %232 {strides = array<i32>} : memref<128x384xf32, #tpu.memory_space<vmem>>, vector<1x128xf32>,
    %c25_218 = arith.constant 25 : index
    %c128_219 = arith.constant 128 : index
    %234 = vector.load %arg14[%c25_218, %c128_219] : memref<128x384xf32, #tpu.memory_space<vmem>>, vector<1x128xf32>
    tpu.vector_store %arg14[%c25_218, %c128_219], %232 {strides = array<i32>} : memref<128x384xf32, #tpu.memory_space<vmem>>, vector<1x128xf32>,
    %c24_220 = arith.constant 24 : index
    %c256_221 = arith.constant 256 : index
    %235 = vector.load %arg14[%c24_220, %c256_221] : memref<128x384xf32, #tpu.memory_space<vmem>>, vector<1x128xf32>
    tpu.vector_store %arg14[%c24_220, %c256_221], %232 {strides = array<i32>} : memref<128x384xf32, #tpu.memory_space<vmem>>, vector<1x128xf32>,
    %c8_i32_222 = arith.constant 8 : i32
    %236 = arith.muli %arg0, %c8_i32_222 : i32
    %c1_i32_223 = arith.constant 1 : i32
    %237 = arith.addi %236, %c1_i32_223 : i32
    %238 = arith.index_cast %237 : i32 to index
    %c11_224 = arith.constant 11 : index
    %239 = memref.load %arg1[%238, %c11_224] : memref<8x16xi32, #tpu.memory_space<smem>>
    %240 = arith.index_cast %239 : i32 to index
    %c0_225 = arith.constant 0 : index
    %241 = vector.load %arg2[%240, %c0_225] : memref<1000x128xf32, #tpu.memory_space<vmem>>, vector<1x128xf32>
    %c27 = arith.constant 27 : index
    %c0_226 = arith.constant 0 : index
    %242 = vector.load %arg14[%c27, %c0_226] : memref<128x384xf32, #tpu.memory_space<vmem>>, vector<1x128xf32>
    tpu.vector_store %arg14[%c27, %c0_226], %241 {strides = array<i32>} : memref<128x384xf32, #tpu.memory_space<vmem>>, vector<1x128xf32>,
    %c26_227 = arith.constant 26 : index
    %c128_228 = arith.constant 128 : index
    %243 = vector.load %arg14[%c26_227, %c128_228] : memref<128x384xf32, #tpu.memory_space<vmem>>, vector<1x128xf32>
    tpu.vector_store %arg14[%c26_227, %c128_228], %241 {strides = array<i32>} : memref<128x384xf32, #tpu.memory_space<vmem>>, vector<1x128xf32>,
    %c25_229 = arith.constant 25 : index
    %c256_230 = arith.constant 256 : index
    %244 = vector.load %arg14[%c25_229, %c256_230] : memref<128x384xf32, #tpu.memory_space<vmem>>, vector<1x128xf32>
    tpu.vector_store %arg14[%c25_229, %c256_230], %241 {strides = array<i32>} : memref<128x384xf32, #tpu.memory_space<vmem>>, vector<1x128xf32>,
    %c8_i32_231 = arith.constant 8 : i32
    %245 = arith.muli %arg0, %c8_i32_231 : i32
    %c1_i32_232 = arith.constant 1 : i32
    %246 = arith.addi %245, %c1_i32_232 : i32
    %247 = arith.index_cast %246 : i32 to index
    %c12_233 = arith.constant 12 : index
    %248 = memref.load %arg1[%247, %c12_233] : memref<8x16xi32, #tpu.memory_space<smem>>
    %249 = arith.index_cast %248 : i32 to index
    %c0_234 = arith.constant 0 : index
    %250 = vector.load %arg2[%249, %c0_234] : memref<1000x128xf32, #tpu.memory_space<vmem>>, vector<1x128xf32>
    %c28 = arith.constant 28 : index
    %c0_235 = arith.constant 0 : index
    %251 = vector.load %arg14[%c28, %c0_235] : memref<128x384xf32, #tpu.memory_space<vmem>>, vector<1x128xf32>
    tpu.vector_store %arg14[%c28, %c0_235], %250 {strides = array<i32>} : memref<128x384xf32, #tpu.memory_space<vmem>>, vector<1x128xf32>,
    %c27_236 = arith.constant 27 : index
    %c128_237 = arith.constant 128 : index
    %252 = vector.load %arg14[%c27_236, %c128_237] : memref<128x384xf32, #tpu.memory_space<vmem>>, vector<1x128xf32>
    tpu.vector_store %arg14[%c27_236, %c128_237], %250 {strides = array<i32>} : memref<128x384xf32, #tpu.memory_space<vmem>>, vector<1x128xf32>,
    %c26_238 = arith.constant 26 : index
    %c256_239 = arith.constant 256 : index
    %253 = vector.load %arg14[%c26_238, %c256_239] : memref<128x384xf32, #tpu.memory_space<vmem>>, vector<1x128xf32>
    tpu.vector_store %arg14[%c26_238, %c256_239], %250 {strides = array<i32>} : memref<128x384xf32, #tpu.memory_space<vmem>>, vector<1x128xf32>,
    %c8_i32_240 = arith.constant 8 : i32
    %254 = arith.muli %arg0, %c8_i32_240 : i32
    %c1_i32_241 = arith.constant 1 : i32
    %255 = arith.addi %254, %c1_i32_241 : i32
    %256 = arith.index_cast %255 : i32 to index
    %c13_242 = arith.constant 13 : index
    %257 = memref.load %arg1[%256, %c13_242] : memref<8x16xi32, #tpu.memory_space<smem>>
    %258 = arith.index_cast %257 : i32 to index
    %c0_243 = arith.constant 0 : index
    %259 = vector.load %arg2[%258, %c0_243] : memref<1000x128xf32, #tpu.memory_space<vmem>>, vector<1x128xf32>
    %c29 = arith.constant 29 : index
    %c0_244 = arith.constant 0 : index
    %260 = vector.load %arg14[%c29, %c0_244] : memref<128x384xf32, #tpu.memory_space<vmem>>, vector<1x128xf32>
    tpu.vector_store %arg14[%c29, %c0_244], %259 {strides = array<i32>} : memref<128x384xf32, #tpu.memory_space<vmem>>, vector<1x128xf32>,
    %c28_245 = arith.constant 28 : index
    %c128_246 = arith.constant 128 : index
    %261 = vector.load %arg14[%c28_245, %c128_246] : memref<128x384xf32, #tpu.memory_space<vmem>>, vector<1x128xf32>
    tpu.vector_store %arg14[%c28_245, %c128_246], %259 {strides = array<i32>} : memref<128x384xf32, #tpu.memory_space<vmem>>, vector<1x128xf32>,
    %c27_247 = arith.constant 27 : index
    %c256_248 = arith.constant 256 : index
    %262 = vector.load %arg14[%c27_247, %c256_248] : memref<128x384xf32, #tpu.memory_space<vmem>>, vector<1x128xf32>
    tpu.vector_store %arg14[%c27_247, %c256_248], %259 {strides = array<i32>} : memref<128x384xf32, #tpu.memory_space<vmem>>, vector<1x128xf32>,
    %c8_i32_249 = arith.constant 8 : i32
    %263 = arith.muli %arg0, %c8_i32_249 : i32
    %c1_i32_250 = arith.constant 1 : i32
    %264 = arith.addi %263, %c1_i32_250 : i32
    %265 = arith.index_cast %264 : i32 to index
    %c14_251 = arith.constant 14 : index
    %266 = memref.load %arg1[%265, %c14_251] : memref<8x16xi32, #tpu.memory_space<smem>>
    %267 = arith.index_cast %266 : i32 to index
    %c0_252 = arith.constant 0 : index
    %268 = vector.load %arg2[%267, %c0_252] : memref<1000x128xf32, #tpu.memory_space<vmem>>, vector<1x128xf32>
    %c29_253 = arith.constant 29 : index
    %c128_254 = arith.constant 128 : index
    %269 = vector.load %arg14[%c29_253, %c128_254] : memref<128x384xf32, #tpu.memory_space<vmem>>, vector<1x128xf32>
    tpu.vector_store %arg14[%c29_253, %c128_254], %268 {strides = array<i32>} : memref<128x384xf32, #tpu.memory_space<vmem>>, vector<1x128xf32>,
    %c28_255 = arith.constant 28 : index
    %c256_256 = arith.constant 256 : index
    %270 = vector.load %arg14[%c28_255, %c256_256] : memref<128x384xf32, #tpu.memory_space<vmem>>, vector<1x128xf32>
    tpu.vector_store %arg14[%c28_255, %c256_256], %268 {strides = array<i32>} : memref<128x384xf32, #tpu.memory_space<vmem>>, vector<1x128xf32>,
    %c8_i32_257 = arith.constant 8 : i32
    %271 = arith.muli %arg0, %c8_i32_257 : i32
    %c1_i32_258 = arith.constant 1 : i32
    %272 = arith.addi %271, %c1_i32_258 : i32
    %273 = arith.index_cast %272 : i32 to index
    %c15_259 = arith.constant 15 : index
    %274 = memref.load %arg1[%273, %c15_259] : memref<8x16xi32, #tpu.memory_space<smem>>
    %275 = arith.index_cast %274 : i32 to index
    %c0_260 = arith.constant 0 : index
    %276 = vector.load %arg2[%275, %c0_260] : memref<1000x128xf32, #tpu.memory_space<vmem>>, vector<1x128xf32>
    %c29_261 = arith.constant 29 : index
    %c256_262 = arith.constant 256 : index
    %277 = vector.load %arg14[%c29_261, %c256_262] : memref<128x384xf32, #tpu.memory_space<vmem>>, vector<1x128xf32>
    tpu.vector_store %arg14[%c29_261, %c256_262], %276 {strides = array<i32>} : memref<128x384xf32, #tpu.memory_space<vmem>>, vector<1x128xf32>,
    %c8_i32_263 = arith.constant 8 : i32
    %278 = arith.muli %arg0, %c8_i32_263 : i32
    %c2_i32 = arith.constant 2 : i32
    %279 = arith.addi %278, %c2_i32 : i32
    %280 = arith.index_cast %279 : i32 to index
    %c0_264 = arith.constant 0 : index
    %281 = memref.load %arg1[%280, %c0_264] : memref<8x16xi32, #tpu.memory_space<smem>>
    %282 = arith.index_cast %281 : i32 to index
    %c0_265 = arith.constant 0 : index
    %283 = vector.load %arg2[%282, %c0_265] : memref<1000x128xf32, #tpu.memory_space<vmem>>, vector<1x128xf32>
    %c32 = arith.constant 32 : index
    %c0_266 = arith.constant 0 : index
    %284 = vector.load %arg14[%c32, %c0_266] : memref<128x384xf32, #tpu.memory_space<vmem>>, vector<1x128xf32>
    tpu.vector_store %arg14[%c32, %c0_266], %283 {strides = array<i32>} : memref<128x384xf32, #tpu.memory_space<vmem>>, vector<1x128xf32>,
    %c8_i32_267 = arith.constant 8 : i32
    %285 = arith.muli %arg0, %c8_i32_267 : i32
    %c2_i32_268 = arith.constant 2 : i32
    %286 = arith.addi %285, %c2_i32_268 : i32
    %287 = arith.index_cast %286 : i32 to index
    %c1_269 = arith.constant 1 : index
    %288 = memref.load %arg1[%287, %c1_269] : memref<8x16xi32, #tpu.memory_space<smem>>
    %289 = arith.index_cast %288 : i32 to index
    %c0_270 = arith.constant 0 : index
    %290 = vector.load %arg2[%289, %c0_270] : memref<1000x128xf32, #tpu.memory_space<vmem>>, vector<1x128xf32>
    %c33 = arith.constant 33 : index
    %c0_271 = arith.constant 0 : index
    %291 = vector.load %arg14[%c33, %c0_271] : memref<128x384xf32, #tpu.memory_space<vmem>>, vector<1x128xf32>
    tpu.vector_store %arg14[%c33, %c0_271], %290 {strides = array<i32>} : memref<128x384xf32, #tpu.memory_space<vmem>>, vector<1x128xf32>,
    %c32_272 = arith.constant 32 : index
    %c128_273 = arith.constant 128 : index
    %292 = vector.load %arg14[%c32_272, %c128_273] : memref<128x384xf32, #tpu.memory_space<vmem>>, vector<1x128xf32>
    tpu.vector_store %arg14[%c32_272, %c128_273], %290 {strides = array<i32>} : memref<128x384xf32, #tpu.memory_space<vmem>>, vector<1x128xf32>,
    %c8_i32_274 = arith.constant 8 : i32
    %293 = arith.muli %arg0, %c8_i32_274 : i32
    %c2_i32_275 = arith.constant 2 : i32
    %294 = arith.addi %293, %c2_i32_275 : i32
    %295 = arith.index_cast %294 : i32 to index
    %c2_276 = arith.constant 2 : index
    %296 = memref.load %arg1[%295, %c2_276] : memref<8x16xi32, #tpu.memory_space<smem>>
    %297 = arith.index_cast %296 : i32 to index
    %c0_277 = arith.constant 0 : index
    %298 = vector.load %arg2[%297, %c0_277] : memref<1000x128xf32, #tpu.memory_space<vmem>>, vector<1x128xf32>
    %c34 = arith.constant 34 : index
    %c0_278 = arith.constant 0 : index
    %299 = vector.load %arg14[%c34, %c0_278] : memref<128x384xf32, #tpu.memory_space<vmem>>, vector<1x128xf32>
    tpu.vector_store %arg14[%c34, %c0_278], %298 {strides = array<i32>} : memref<128x384xf32, #tpu.memory_space<vmem>>, vector<1x128xf32>,
    %c33_279 = arith.constant 33 : index
    %c128_280 = arith.constant 128 : index
    %300 = vector.load %arg14[%c33_279, %c128_280] : memref<128x384xf32, #tpu.memory_space<vmem>>, vector<1x128xf32>
    tpu.vector_store %arg14[%c33_279, %c128_280], %298 {strides = array<i32>} : memref<128x384xf32, #tpu.memory_space<vmem>>, vector<1x128xf32>,
    %c32_281 = arith.constant 32 : index
    %c256_282 = arith.constant 256 : index
    %301 = vector.load %arg14[%c32_281, %c256_282] : memref<128x384xf32, #tpu.memory_space<vmem>>, vector<1x128xf32>
    tpu.vector_store %arg14[%c32_281, %c256_282], %298 {strides = array<i32>} : memref<128x384xf32, #tpu.memory_space<vmem>>, vector<1x128xf32>,
    %c8_i32_283 = arith.constant 8 : i32
    %302 = arith.muli %arg0, %c8_i32_283 : i32
    %c2_i32_284 = arith.constant 2 : i32
    %303 = arith.addi %302, %c2_i32_284 : i32
    %304 = arith.index_cast %303 : i32 to index
    %c3_285 = arith.constant 3 : index
    %305 = memref.load %arg1[%304, %c3_285] : memref<8x16xi32, #tpu.memory_space<smem>>
    %306 = arith.index_cast %305 : i32 to index
    %c0_286 = arith.constant 0 : index
    %307 = vector.load %arg2[%306, %c0_286] : memref<1000x128xf32, #tpu.memory_space<vmem>>, vector<1x128xf32>
    %c35 = arith.constant 35 : index
    %c0_287 = arith.constant 0 : index
    %308 = vector.load %arg14[%c35, %c0_287] : memref<128x384xf32, #tpu.memory_space<vmem>>, vector<1x128xf32>
    tpu.vector_store %arg14[%c35, %c0_287], %307 {strides = array<i32>} : memref<128x384xf32, #tpu.memory_space<vmem>>, vector<1x128xf32>,
    %c34_288 = arith.constant 34 : index
    %c128_289 = arith.constant 128 : index
    %309 = vector.load %arg14[%c34_288, %c128_289] : memref<128x384xf32, #tpu.memory_space<vmem>>, vector<1x128xf32>
    tpu.vector_store %arg14[%c34_288, %c128_289], %307 {strides = array<i32>} : memref<128x384xf32, #tpu.memory_space<vmem>>, vector<1x128xf32>,
    %c33_290 = arith.constant 33 : index
    %c256_291 = arith.constant 256 : index
    %310 = vector.load %arg14[%c33_290, %c256_291] : memref<128x384xf32, #tpu.memory_space<vmem>>, vector<1x128xf32>
    tpu.vector_store %arg14[%c33_290, %c256_291], %307 {strides = array<i32>} : memref<128x384xf32, #tpu.memory_space<vmem>>, vector<1x128xf32>,
    %c8_i32_292 = arith.constant 8 : i32
    %311 = arith.muli %arg0, %c8_i32_292 : i32
    %c2_i32_293 = arith.constant 2 : i32
    %312 = arith.addi %311, %c2_i32_293 : i32
    %313 = arith.index_cast %312 : i32 to index
    %c4_294 = arith.constant 4 : index
    %314 = memref.load %arg1[%313, %c4_294] : memref<8x16xi32, #tpu.memory_space<smem>>
    %315 = arith.index_cast %314 : i32 to index
    %c0_295 = arith.constant 0 : index
    %316 = vector.load %arg2[%315, %c0_295] : memref<1000x128xf32, #tpu.memory_space<vmem>>, vector<1x128xf32>
    %c36 = arith.constant 36 : index
    %c0_296 = arith.constant 0 : index
    %317 = vector.load %arg14[%c36, %c0_296] : memref<128x384xf32, #tpu.memory_space<vmem>>, vector<1x128xf32>
    tpu.vector_store %arg14[%c36, %c0_296], %316 {strides = array<i32>} : memref<128x384xf32, #tpu.memory_space<vmem>>, vector<1x128xf32>,
    %c35_297 = arith.constant 35 : index
    %c128_298 = arith.constant 128 : index
    %318 = vector.load %arg14[%c35_297, %c128_298] : memref<128x384xf32, #tpu.memory_space<vmem>>, vector<1x128xf32>
    tpu.vector_store %arg14[%c35_297, %c128_298], %316 {strides = array<i32>} : memref<128x384xf32, #tpu.memory_space<vmem>>, vector<1x128xf32>,
    %c34_299 = arith.constant 34 : index
    %c256_300 = arith.constant 256 : index
    %319 = vector.load %arg14[%c34_299, %c256_300] : memref<128x384xf32, #tpu.memory_space<vmem>>, vector<1x128xf32>
    tpu.vector_store %arg14[%c34_299, %c256_300], %316 {strides = array<i32>} : memref<128x384xf32, #tpu.memory_space<vmem>>, vector<1x128xf32>,
    %c8_i32_301 = arith.constant 8 : i32
    %320 = arith.muli %arg0, %c8_i32_301 : i32
    %c2_i32_302 = arith.constant 2 : i32
    %321 = arith.addi %320, %c2_i32_302 : i32
    %322 = arith.index_cast %321 : i32 to index
    %c5_303 = arith.constant 5 : index
    %323 = memref.load %arg1[%322, %c5_303] : memref<8x16xi32, #tpu.memory_space<smem>>
    %324 = arith.index_cast %323 : i32 to index
    %c0_304 = arith.constant 0 : index
    %325 = vector.load %arg2[%324, %c0_304] : memref<1000x128xf32, #tpu.memory_space<vmem>>, vector<1x128xf32>
    %c37 = arith.constant 37 : index
    %c0_305 = arith.constant 0 : index
    %326 = vector.load %arg14[%c37, %c0_305] : memref<128x384xf32, #tpu.memory_space<vmem>>, vector<1x128xf32>
    tpu.vector_store %arg14[%c37, %c0_305], %325 {strides = array<i32>} : memref<128x384xf32, #tpu.memory_space<vmem>>, vector<1x128xf32>,
    %c36_306 = arith.constant 36 : index
    %c128_307 = arith.constant 128 : index
    %327 = vector.load %arg14[%c36_306, %c128_307] : memref<128x384xf32, #tpu.memory_space<vmem>>, vector<1x128xf32>
    tpu.vector_store %arg14[%c36_306, %c128_307], %325 {strides = array<i32>} : memref<128x384xf32, #tpu.memory_space<vmem>>, vector<1x128xf32>,
    %c35_308 = arith.constant 35 : index
    %c256_309 = arith.constant 256 : index
    %328 = vector.load %arg14[%c35_308, %c256_309] : memref<128x384xf32, #tpu.memory_space<vmem>>, vector<1x128xf32>
    tpu.vector_store %arg14[%c35_308, %c256_309], %325 {strides = array<i32>} : memref<128x384xf32, #tpu.memory_space<vmem>>, vector<1x128xf32>,
    %c8_i32_310 = arith.constant 8 : i32
    %329 = arith.muli %arg0, %c8_i32_310 : i32
    %c2_i32_311 = arith.constant 2 : i32
    %330 = arith.addi %329, %c2_i32_311 : i32
    %331 = arith.index_cast %330 : i32 to index
    %c6_312 = arith.constant 6 : index
    %332 = memref.load %arg1[%331, %c6_312] : memref<8x16xi32, #tpu.memory_space<smem>>
    %333 = arith.index_cast %332 : i32 to index
    %c0_313 = arith.constant 0 : index
    %334 = vector.load %arg2[%333, %c0_313] : memref<1000x128xf32, #tpu.memory_space<vmem>>, vector<1x128xf32>
    %c38 = arith.constant 38 : index
    %c0_314 = arith.constant 0 : index
    %335 = vector.load %arg14[%c38, %c0_314] : memref<128x384xf32, #tpu.memory_space<vmem>>, vector<1x128xf32>
    tpu.vector_store %arg14[%c38, %c0_314], %334 {strides = array<i32>} : memref<128x384xf32, #tpu.memory_space<vmem>>, vector<1x128xf32>,
    %c37_315 = arith.constant 37 : index
    %c128_316 = arith.constant 128 : index
    %336 = vector.load %arg14[%c37_315, %c128_316] : memref<128x384xf32, #tpu.memory_space<vmem>>, vector<1x128xf32>
    tpu.vector_store %arg14[%c37_315, %c128_316], %334 {strides = array<i32>} : memref<128x384xf32, #tpu.memory_space<vmem>>, vector<1x128xf32>,
    %c36_317 = arith.constant 36 : index
    %c256_318 = arith.constant 256 : index
    %337 = vector.load %arg14[%c36_317, %c256_318] : memref<128x384xf32, #tpu.memory_space<vmem>>, vector<1x128xf32>
    tpu.vector_store %arg14[%c36_317, %c256_318], %334 {strides = array<i32>} : memref<128x384xf32, #tpu.memory_space<vmem>>, vector<1x128xf32>,
    %c8_i32_319 = arith.constant 8 : i32
    %338 = arith.muli %arg0, %c8_i32_319 : i32
    %c2_i32_320 = arith.constant 2 : i32
    %339 = arith.addi %338, %c2_i32_320 : i32
    %340 = arith.index_cast %339 : i32 to index
    %c7_321 = arith.constant 7 : index
    %341 = memref.load %arg1[%340, %c7_321] : memref<8x16xi32, #tpu.memory_space<smem>>
    %342 = arith.index_cast %341 : i32 to index
    %c0_322 = arith.constant 0 : index
    %343 = vector.load %arg2[%342, %c0_322] : memref<1000x128xf32, #tpu.memory_space<vmem>>, vector<1x128xf32>
    %c39 = arith.constant 39 : index
    %c0_323 = arith.constant 0 : index
    %344 = vector.load %arg14[%c39, %c0_323] : memref<128x384xf32, #tpu.memory_space<vmem>>, vector<1x128xf32>
    tpu.vector_store %arg14[%c39, %c0_323], %343 {strides = array<i32>} : memref<128x384xf32, #tpu.memory_space<vmem>>, vector<1x128xf32>,
    %c38_324 = arith.constant 38 : index
    %c128_325 = arith.constant 128 : index
    %345 = vector.load %arg14[%c38_324, %c128_325] : memref<128x384xf32, #tpu.memory_space<vmem>>, vector<1x128xf32>
    tpu.vector_store %arg14[%c38_324, %c128_325], %343 {strides = array<i32>} : memref<128x384xf32, #tpu.memory_space<vmem>>, vector<1x128xf32>,
    %c37_326 = arith.constant 37 : index
    %c256_327 = arith.constant 256 : index
    %346 = vector.load %arg14[%c37_326, %c256_327] : memref<128x384xf32, #tpu.memory_space<vmem>>, vector<1x128xf32>
    tpu.vector_store %arg14[%c37_326, %c256_327], %343 {strides = array<i32>} : memref<128x384xf32, #tpu.memory_space<vmem>>, vector<1x128xf32>,
    %c8_i32_328 = arith.constant 8 : i32
    %347 = arith.muli %arg0, %c8_i32_328 : i32
    %c2_i32_329 = arith.constant 2 : i32
    %348 = arith.addi %347, %c2_i32_329 : i32
    %349 = arith.index_cast %348 : i32 to index
    %c8_330 = arith.constant 8 : index
    %350 = memref.load %arg1[%349, %c8_330] : memref<8x16xi32, #tpu.memory_space<smem>>
    %351 = arith.index_cast %350 : i32 to index
    %c0_331 = arith.constant 0 : index
    %352 = vector.load %arg2[%351, %c0_331] : memref<1000x128xf32, #tpu.memory_space<vmem>>, vector<1x128xf32>
    %c40 = arith.constant 40 : index
    %c0_332 = arith.constant 0 : index
    %353 = vector.load %arg14[%c40, %c0_332] : memref<128x384xf32, #tpu.memory_space<vmem>>, vector<1x128xf32>
    tpu.vector_store %arg14[%c40, %c0_332], %352 {strides = array<i32>} : memref<128x384xf32, #tpu.memory_space<vmem>>, vector<1x128xf32>,
    %c39_333 = arith.constant 39 : index
    %c128_334 = arith.constant 128 : index
    %354 = vector.load %arg14[%c39_333, %c128_334] : memref<128x384xf32, #tpu.memory_space<vmem>>, vector<1x128xf32>
    tpu.vector_store %arg14[%c39_333, %c128_334], %352 {strides = array<i32>} : memref<128x384xf32, #tpu.memory_space<vmem>>, vector<1x128xf32>,
    %c38_335 = arith.constant 38 : index
    %c256_336 = arith.constant 256 : index
    %355 = vector.load %arg14[%c38_335, %c256_336] : memref<128x384xf32, #tpu.memory_space<vmem>>, vector<1x128xf32>
    tpu.vector_store %arg14[%c38_335, %c256_336], %352 {strides = array<i32>} : memref<128x384xf32, #tpu.memory_space<vmem>>, vector<1x128xf32>,
    %c8_i32_337 = arith.constant 8 : i32
    %356 = arith.muli %arg0, %c8_i32_337 : i32
    %c2_i32_338 = arith.constant 2 : i32
    %357 = arith.addi %356, %c2_i32_338 : i32
    %358 = arith.index_cast %357 : i32 to index
    %c9_339 = arith.constant 9 : index
    %359 = memref.load %arg1[%358, %c9_339] : memref<8x16xi32, #tpu.memory_space<smem>>
    %360 = arith.index_cast %359 : i32 to index
    %c0_340 = arith.constant 0 : index
    %361 = vector.load %arg2[%360, %c0_340] : memref<1000x128xf32, #tpu.memory_space<vmem>>, vector<1x128xf32>
    %c41 = arith.constant 41 : index
    %c0_341 = arith.constant 0 : index
    %362 = vector.load %arg14[%c41, %c0_341] : memref<128x384xf32, #tpu.memory_space<vmem>>, vector<1x128xf32>
    tpu.vector_store %arg14[%c41, %c0_341], %361 {strides = array<i32>} : memref<128x384xf32, #tpu.memory_space<vmem>>, vector<1x128xf32>,
    %c40_342 = arith.constant 40 : index
    %c128_343 = arith.constant 128 : index
    %363 = vector.load %arg14[%c40_342, %c128_343] : memref<128x384xf32, #tpu.memory_space<vmem>>, vector<1x128xf32>
    tpu.vector_store %arg14[%c40_342, %c128_343], %361 {strides = array<i32>} : memref<128x384xf32, #tpu.memory_space<vmem>>, vector<1x128xf32>,
    %c39_344 = arith.constant 39 : index
    %c256_345 = arith.constant 256 : index
    %364 = vector.load %arg14[%c39_344, %c256_345] : memref<128x384xf32, #tpu.memory_space<vmem>>, vector<1x128xf32>
    tpu.vector_store %arg14[%c39_344, %c256_345], %361 {strides = array<i32>} : memref<128x384xf32, #tpu.memory_space<vmem>>, vector<1x128xf32>,
    %c8_i32_346 = arith.constant 8 : i32
    %365 = arith.muli %arg0, %c8_i32_346 : i32
    %c2_i32_347 = arith.constant 2 : i32
    %366 = arith.addi %365, %c2_i32_347 : i32
    %367 = arith.index_cast %366 : i32 to index
    %c10_348 = arith.constant 10 : index
    %368 = memref.load %arg1[%367, %c10_348] : memref<8x16xi32, #tpu.memory_space<smem>>
    %369 = arith.index_cast %368 : i32 to index
    %c0_349 = arith.constant 0 : index
    %370 = vector.load %arg2[%369, %c0_349] : memref<1000x128xf32, #tpu.memory_space<vmem>>, vector<1x128xf32>
    %c42 = arith.constant 42 : index
    %c0_350 = arith.constant 0 : index
    %371 = vector.load %arg14[%c42, %c0_350] : memref<128x384xf32, #tpu.memory_space<vmem>>, vector<1x128xf32>
    tpu.vector_store %arg14[%c42, %c0_350], %370 {strides = array<i32>} : memref<128x384xf32, #tpu.memory_space<vmem>>, vector<1x128xf32>,
    %c41_351 = arith.constant 41 : index
    %c128_352 = arith.constant 128 : index
    %372 = vector.load %arg14[%c41_351, %c128_352] : memref<128x384xf32, #tpu.memory_space<vmem>>, vector<1x128xf32>
    tpu.vector_store %arg14[%c41_351, %c128_352], %370 {strides = array<i32>} : memref<128x384xf32, #tpu.memory_space<vmem>>, vector<1x128xf32>,
    %c40_353 = arith.constant 40 : index
    %c256_354 = arith.constant 256 : index
    %373 = vector.load %arg14[%c40_353, %c256_354] : memref<128x384xf32, #tpu.memory_space<vmem>>, vector<1x128xf32>
    tpu.vector_store %arg14[%c40_353, %c256_354], %370 {strides = array<i32>} : memref<128x384xf32, #tpu.memory_space<vmem>>, vector<1x128xf32>,
    %c8_i32_355 = arith.constant 8 : i32
    %374 = arith.muli %arg0, %c8_i32_355 : i32
    %c2_i32_356 = arith.constant 2 : i32
    %375 = arith.addi %374, %c2_i32_356 : i32
    %376 = arith.index_cast %375 : i32 to index
    %c11_357 = arith.constant 11 : index
    %377 = memref.load %arg1[%376, %c11_357] : memref<8x16xi32, #tpu.memory_space<smem>>
    %378 = arith.index_cast %377 : i32 to index
    %c0_358 = arith.constant 0 : index
    %379 = vector.load %arg2[%378, %c0_358] : memref<1000x128xf32, #tpu.memory_space<vmem>>, vector<1x128xf32>
    %c43 = arith.constant 43 : index
    %c0_359 = arith.constant 0 : index
    %380 = vector.load %arg14[%c43, %c0_359] : memref<128x384xf32, #tpu.memory_space<vmem>>, vector<1x128xf32>
    tpu.vector_store %arg14[%c43, %c0_359], %379 {strides = array<i32>} : memref<128x384xf32, #tpu.memory_space<vmem>>, vector<1x128xf32>,
    %c42_360 = arith.constant 42 : index
    %c128_361 = arith.constant 128 : index
    %381 = vector.load %arg14[%c42_360, %c128_361] : memref<128x384xf32, #tpu.memory_space<vmem>>, vector<1x128xf32>
    tpu.vector_store %arg14[%c42_360, %c128_361], %379 {strides = array<i32>} : memref<128x384xf32, #tpu.memory_space<vmem>>, vector<1x128xf32>,
    %c41_362 = arith.constant 41 : index
    %c256_363 = arith.constant 256 : index
    %382 = vector.load %arg14[%c41_362, %c256_363] : memref<128x384xf32, #tpu.memory_space<vmem>>, vector<1x128xf32>
    tpu.vector_store %arg14[%c41_362, %c256_363], %379 {strides = array<i32>} : memref<128x384xf32, #tpu.memory_space<vmem>>, vector<1x128xf32>,
    %c8_i32_364 = arith.constant 8 : i32
    %383 = arith.muli %arg0, %c8_i32_364 : i32
    %c2_i32_365 = arith.constant 2 : i32
    %384 = arith.addi %383, %c2_i32_365 : i32
    %385 = arith.index_cast %384 : i32 to index
    %c12_366 = arith.constant 12 : index
    %386 = memref.load %arg1[%385, %c12_366] : memref<8x16xi32, #tpu.memory_space<smem>>
    %387 = arith.index_cast %386 : i32 to index
    %c0_367 = arith.constant 0 : index
    %388 = vector.load %arg2[%387, %c0_367] : memref<1000x128xf32, #tpu.memory_space<vmem>>, vector<1x128xf32>
    %c44 = arith.constant 44 : index
    %c0_368 = arith.constant 0 : index
    %389 = vector.load %arg14[%c44, %c0_368] : memref<128x384xf32, #tpu.memory_space<vmem>>, vector<1x128xf32>
    tpu.vector_store %arg14[%c44, %c0_368], %388 {strides = array<i32>} : memref<128x384xf32, #tpu.memory_space<vmem>>, vector<1x128xf32>,
    %c43_369 = arith.constant 43 : index
    %c128_370 = arith.constant 128 : index
    %390 = vector.load %arg14[%c43_369, %c128_370] : memref<128x384xf32, #tpu.memory_space<vmem>>, vector<1x128xf32>
    tpu.vector_store %arg14[%c43_369, %c128_370], %388 {strides = array<i32>} : memref<128x384xf32, #tpu.memory_space<vmem>>, vector<1x128xf32>,
    %c42_371 = arith.constant 42 : index
    %c256_372 = arith.constant 256 : index
    %391 = vector.load %arg14[%c42_371, %c256_372] : memref<128x384xf32, #tpu.memory_space<vmem>>, vector<1x128xf32>
    tpu.vector_store %arg14[%c42_371, %c256_372], %388 {strides = array<i32>} : memref<128x384xf32, #tpu.memory_space<vmem>>, vector<1x128xf32>,
    %c8_i32_373 = arith.constant 8 : i32
    %392 = arith.muli %arg0, %c8_i32_373 : i32
    %c2_i32_374 = arith.constant 2 : i32
    %393 = arith.addi %392, %c2_i32_374 : i32
    %394 = arith.index_cast %393 : i32 to index
    %c13_375 = arith.constant 13 : index
    %395 = memref.load %arg1[%394, %c13_375] : memref<8x16xi32, #tpu.memory_space<smem>>
    %396 = arith.index_cast %395 : i32 to index
    %c0_376 = arith.constant 0 : index
    %397 = vector.load %arg2[%396, %c0_376] : memref<1000x128xf32, #tpu.memory_space<vmem>>, vector<1x128xf32>
    %c45 = arith.constant 45 : index
    %c0_377 = arith.constant 0 : index
    %398 = vector.load %arg14[%c45, %c0_377] : memref<128x384xf32, #tpu.memory_space<vmem>>, vector<1x128xf32>
    tpu.vector_store %arg14[%c45, %c0_377], %397 {strides = array<i32>} : memref<128x384xf32, #tpu.memory_space<vmem>>, vector<1x128xf32>,
    %c44_378 = arith.constant 44 : index
    %c128_379 = arith.constant 128 : index
    %399 = vector.load %arg14[%c44_378, %c128_379] : memref<128x384xf32, #tpu.memory_space<vmem>>, vector<1x128xf32>
    tpu.vector_store %arg14[%c44_378, %c128_379], %397 {strides = array<i32>} : memref<128x384xf32, #tpu.memory_space<vmem>>, vector<1x128xf32>,
    %c43_380 = arith.constant 43 : index
    %c256_381 = arith.constant 256 : index
    %400 = vector.load %arg14[%c43_380, %c256_381] : memref<128x384xf32, #tpu.memory_space<vmem>>, vector<1x128xf32>
    tpu.vector_store %arg14[%c43_380, %c256_381], %397 {strides = array<i32>} : memref<128x384xf32, #tpu.memory_space<vmem>>, vector<1x128xf32>,
    %c8_i32_382 = arith.constant 8 : i32
    %401 = arith.muli %arg0, %c8_i32_382 : i32
    %c2_i32_383 = arith.constant 2 : i32
    %402 = arith.addi %401, %c2_i32_383 : i32
    %403 = arith.index_cast %402 : i32 to index
    %c14_384 = arith.constant 14 : index
    %404 = memref.load %arg1[%403, %c14_384] : memref<8x16xi32, #tpu.memory_space<smem>>
    %405 = arith.index_cast %404 : i32 to index
    %c0_385 = arith.constant 0 : index
    %406 = vector.load %arg2[%405, %c0_385] : memref<1000x128xf32, #tpu.memory_space<vmem>>, vector<1x128xf32>
    %c45_386 = arith.constant 45 : index
    %c128_387 = arith.constant 128 : index
    %407 = vector.load %arg14[%c45_386, %c128_387] : memref<128x384xf32, #tpu.memory_space<vmem>>, vector<1x128xf32>
    tpu.vector_store %arg14[%c45_386, %c128_387], %406 {strides = array<i32>} : memref<128x384xf32, #tpu.memory_space<vmem>>, vector<1x128xf32>,
    %c44_388 = arith.constant 44 : index
    %c256_389 = arith.constant 256 : index
    %408 = vector.load %arg14[%c44_388, %c256_389] : memref<128x384xf32, #tpu.memory_space<vmem>>, vector<1x128xf32>
    tpu.vector_store %arg14[%c44_388, %c256_389], %406 {strides = array<i32>} : memref<128x384xf32, #tpu.memory_space<vmem>>, vector<1x128xf32>,
    %c8_i32_390 = arith.constant 8 : i32
    %409 = arith.muli %arg0, %c8_i32_390 : i32
    %c2_i32_391 = arith.constant 2 : i32
    %410 = arith.addi %409, %c2_i32_391 : i32
    %411 = arith.index_cast %410 : i32 to index
    %c15_392 = arith.constant 15 : index
    %412 = memref.load %arg1[%411, %c15_392] : memref<8x16xi32, #tpu.memory_space<smem>>
    %413 = arith.index_cast %412 : i32 to index
    %c0_393 = arith.constant 0 : index
    %414 = vector.load %arg2[%413, %c0_393] : memref<1000x128xf32, #tpu.memory_space<vmem>>, vector<1x128xf32>
    %c45_394 = arith.constant 45 : index
    %c256_395 = arith.constant 256 : index
    %415 = vector.load %arg14[%c45_394, %c256_395] : memref<128x384xf32, #tpu.memory_space<vmem>>, vector<1x128xf32>
    tpu.vector_store %arg14[%c45_394, %c256_395], %414 {strides = array<i32>} : memref<128x384xf32, #tpu.memory_space<vmem>>, vector<1x128xf32>,
    %c8_i32_396 = arith.constant 8 : i32
    %416 = arith.muli %arg0, %c8_i32_396 : i32
    %c3_i32 = arith.constant 3 : i32
    %417 = arith.addi %416, %c3_i32 : i32
    %418 = arith.index_cast %417 : i32 to index
    %c0_397 = arith.constant 0 : index
    %419 = memref.load %arg1[%418, %c0_397] : memref<8x16xi32, #tpu.memory_space<smem>>
    %420 = arith.index_cast %419 : i32 to index
    %c0_398 = arith.constant 0 : index
    %421 = vector.load %arg2[%420, %c0_398] : memref<1000x128xf32, #tpu.memory_space<vmem>>, vector<1x128xf32>
    %c48 = arith.constant 48 : index
    %c0_399 = arith.constant 0 : index
    %422 = vector.load %arg14[%c48, %c0_399] : memref<128x384xf32, #tpu.memory_space<vmem>>, vector<1x128xf32>
    tpu.vector_store %arg14[%c48, %c0_399], %421 {strides = array<i32>} : memref<128x384xf32, #tpu.memory_space<vmem>>, vector<1x128xf32>,
    %c8_i32_400 = arith.constant 8 : i32
    %423 = arith.muli %arg0, %c8_i32_400 : i32
    %c3_i32_401 = arith.constant 3 : i32
    %424 = arith.addi %423, %c3_i32_401 : i32
    %425 = arith.index_cast %424 : i32 to index
    %c1_402 = arith.constant 1 : index
    %426 = memref.load %arg1[%425, %c1_402] : memref<8x16xi32, #tpu.memory_space<smem>>
    %427 = arith.index_cast %426 : i32 to index
    %c0_403 = arith.constant 0 : index
    %428 = vector.load %arg2[%427, %c0_403] : memref<1000x128xf32, #tpu.memory_space<vmem>>, vector<1x128xf32>
    %c49 = arith.constant 49 : index
    %c0_404 = arith.constant 0 : index
    %429 = vector.load %arg14[%c49, %c0_404] : memref<128x384xf32, #tpu.memory_space<vmem>>, vector<1x128xf32>
    tpu.vector_store %arg14[%c49, %c0_404], %428 {strides = array<i32>} : memref<128x384xf32, #tpu.memory_space<vmem>>, vector<1x128xf32>,
    %c48_405 = arith.constant 48 : index
    %c128_406 = arith.constant 128 : index
    %430 = vector.load %arg14[%c48_405, %c128_406] : memref<128x384xf32, #tpu.memory_space<vmem>>, vector<1x128xf32>
    tpu.vector_store %arg14[%c48_405, %c128_406], %428 {strides = array<i32>} : memref<128x384xf32, #tpu.memory_space<vmem>>, vector<1x128xf32>,
    %c8_i32_407 = arith.constant 8 : i32
    %431 = arith.muli %arg0, %c8_i32_407 : i32
    %c3_i32_408 = arith.constant 3 : i32
    %432 = arith.addi %431, %c3_i32_408 : i32
    %433 = arith.index_cast %432 : i32 to index
    %c2_409 = arith.constant 2 : index
    %434 = memref.load %arg1[%433, %c2_409] : memref<8x16xi32, #tpu.memory_space<smem>>
    %435 = arith.index_cast %434 : i32 to index
    %c0_410 = arith.constant 0 : index
    %436 = vector.load %arg2[%435, %c0_410] : memref<1000x128xf32, #tpu.memory_space<vmem>>, vector<1x128xf32>
    %c50 = arith.constant 50 : index
    %c0_411 = arith.constant 0 : index
    %437 = vector.load %arg14[%c50, %c0_411] : memref<128x384xf32, #tpu.memory_space<vmem>>, vector<1x128xf32>
    tpu.vector_store %arg14[%c50, %c0_411], %436 {strides = array<i32>} : memref<128x384xf32, #tpu.memory_space<vmem>>, vector<1x128xf32>,
    %c49_412 = arith.constant 49 : index
    %c128_413 = arith.constant 128 : index
    %438 = vector.load %arg14[%c49_412, %c128_413] : memref<128x384xf32, #tpu.memory_space<vmem>>, vector<1x128xf32>
    tpu.vector_store %arg14[%c49_412, %c128_413], %436 {strides = array<i32>} : memref<128x384xf32, #tpu.memory_space<vmem>>, vector<1x128xf32>,
    %c48_414 = arith.constant 48 : index
    %c256_415 = arith.constant 256 : index
    %439 = vector.load %arg14[%c48_414, %c256_415] : memref<128x384xf32, #tpu.memory_space<vmem>>, vector<1x128xf32>
    tpu.vector_store %arg14[%c48_414, %c256_415], %436 {strides = array<i32>} : memref<128x384xf32, #tpu.memory_space<vmem>>, vector<1x128xf32>,
    %c8_i32_416 = arith.constant 8 : i32
    %440 = arith.muli %arg0, %c8_i32_416 : i32
    %c3_i32_417 = arith.constant 3 : i32
    %441 = arith.addi %440, %c3_i32_417 : i32
    %442 = arith.index_cast %441 : i32 to index
    %c3_418 = arith.constant 3 : index
    %443 = memref.load %arg1[%442, %c3_418] : memref<8x16xi32, #tpu.memory_space<smem>>
    %444 = arith.index_cast %443 : i32 to index
    %c0_419 = arith.constant 0 : index
    %445 = vector.load %arg2[%444, %c0_419] : memref<1000x128xf32, #tpu.memory_space<vmem>>, vector<1x128xf32>
    %c51 = arith.constant 51 : index
    %c0_420 = arith.constant 0 : index
    %446 = vector.load %arg14[%c51, %c0_420] : memref<128x384xf32, #tpu.memory_space<vmem>>, vector<1x128xf32>
    tpu.vector_store %arg14[%c51, %c0_420], %445 {strides = array<i32>} : memref<128x384xf32, #tpu.memory_space<vmem>>, vector<1x128xf32>,
    %c50_421 = arith.constant 50 : index
    %c128_422 = arith.constant 128 : index
    %447 = vector.load %arg14[%c50_421, %c128_422] : memref<128x384xf32, #tpu.memory_space<vmem>>, vector<1x128xf32>
    tpu.vector_store %arg14[%c50_421, %c128_422], %445 {strides = array<i32>} : memref<128x384xf32, #tpu.memory_space<vmem>>, vector<1x128xf32>,
    %c49_423 = arith.constant 49 : index
    %c256_424 = arith.constant 256 : index
    %448 = vector.load %arg14[%c49_423, %c256_424] : memref<128x384xf32, #tpu.memory_space<vmem>>, vector<1x128xf32>
    tpu.vector_store %arg14[%c49_423, %c256_424], %445 {strides = array<i32>} : memref<128x384xf32, #tpu.memory_space<vmem>>, vector<1x128xf32>,
    %c8_i32_425 = arith.constant 8 : i32
    %449 = arith.muli %arg0, %c8_i32_425 : i32
    %c3_i32_426 = arith.constant 3 : i32
    %450 = arith.addi %449, %c3_i32_426 : i32
    %451 = arith.index_cast %450 : i32 to index
    %c4_427 = arith.constant 4 : index
    %452 = memref.load %arg1[%451, %c4_427] : memref<8x16xi32, #tpu.memory_space<smem>>
    %453 = arith.index_cast %452 : i32 to index
    %c0_428 = arith.constant 0 : index
    %454 = vector.load %arg2[%453, %c0_428] : memref<1000x128xf32, #tpu.memory_space<vmem>>, vector<1x128xf32>
    %c52 = arith.constant 52 : index
    %c0_429 = arith.constant 0 : index
    %455 = vector.load %arg14[%c52, %c0_429] : memref<128x384xf32, #tpu.memory_space<vmem>>, vector<1x128xf32>
    tpu.vector_store %arg14[%c52, %c0_429], %454 {strides = array<i32>} : memref<128x384xf32, #tpu.memory_space<vmem>>, vector<1x128xf32>,
    %c51_430 = arith.constant 51 : index
    %c128_431 = arith.constant 128 : index
    %456 = vector.load %arg14[%c51_430, %c128_431] : memref<128x384xf32, #tpu.memory_space<vmem>>, vector<1x128xf32>
    tpu.vector_store %arg14[%c51_430, %c128_431], %454 {strides = array<i32>} : memref<128x384xf32, #tpu.memory_space<vmem>>, vector<1x128xf32>,
    %c50_432 = arith.constant 50 : index
    %c256_433 = arith.constant 256 : index
    %457 = vector.load %arg14[%c50_432, %c256_433] : memref<128x384xf32, #tpu.memory_space<vmem>>, vector<1x128xf32>
    tpu.vector_store %arg14[%c50_432, %c256_433], %454 {strides = array<i32>} : memref<128x384xf32, #tpu.memory_space<vmem>>, vector<1x128xf32>,
    %c8_i32_434 = arith.constant 8 : i32
    %458 = arith.muli %arg0, %c8_i32_434 : i32
    %c3_i32_435 = arith.constant 3 : i32
    %459 = arith.addi %458, %c3_i32_435 : i32
    %460 = arith.index_cast %459 : i32 to index
    %c5_436 = arith.constant 5 : index
    %461 = memref.load %arg1[%460, %c5_436] : memref<8x16xi32, #tpu.memory_space<smem>>
    %462 = arith.index_cast %461 : i32 to index
    %c0_437 = arith.constant 0 : index
    %463 = vector.load %arg2[%462, %c0_437] : memref<1000x128xf32, #tpu.memory_space<vmem>>, vector<1x128xf32>
    %c53 = arith.constant 53 : index
    %c0_438 = arith.constant 0 : index
    %464 = vector.load %arg14[%c53, %c0_438] : memref<128x384xf32, #tpu.memory_space<vmem>>, vector<1x128xf32>
    tpu.vector_store %arg14[%c53, %c0_438], %463 {strides = array<i32>} : memref<128x384xf32, #tpu.memory_space<vmem>>, vector<1x128xf32>,
    %c52_439 = arith.constant 52 : index
    %c128_440 = arith.constant 128 : index
    %465 = vector.load %arg14[%c52_439, %c128_440] : memref<128x384xf32, #tpu.memory_space<vmem>>, vector<1x128xf32>
    tpu.vector_store %arg14[%c52_439, %c128_440], %463 {strides = array<i32>} : memref<128x384xf32, #tpu.memory_space<vmem>>, vector<1x128xf32>,
    %c51_441 = arith.constant 51 : index
    %c256_442 = arith.constant 256 : index
    %466 = vector.load %arg14[%c51_441, %c256_442] : memref<128x384xf32, #tpu.memory_space<vmem>>, vector<1x128xf32>
    tpu.vector_store %arg14[%c51_441, %c256_442], %463 {strides = array<i32>} : memref<128x384xf32, #tpu.memory_space<vmem>>, vector<1x128xf32>,
    %c8_i32_443 = arith.constant 8 : i32
    %467 = arith.muli %arg0, %c8_i32_443 : i32
    %c3_i32_444 = arith.constant 3 : i32
    %468 = arith.addi %467, %c3_i32_444 : i32
    %469 = arith.index_cast %468 : i32 to index
    %c6_445 = arith.constant 6 : index
    %470 = memref.load %arg1[%469, %c6_445] : memref<8x16xi32, #tpu.memory_space<smem>>
    %471 = arith.index_cast %470 : i32 to index
    %c0_446 = arith.constant 0 : index
    %472 = vector.load %arg2[%471, %c0_446] : memref<1000x128xf32, #tpu.memory_space<vmem>>, vector<1x128xf32>
    %c54 = arith.constant 54 : index
    %c0_447 = arith.constant 0 : index
    %473 = vector.load %arg14[%c54, %c0_447] : memref<128x384xf32, #tpu.memory_space<vmem>>, vector<1x128xf32>
    tpu.vector_store %arg14[%c54, %c0_447], %472 {strides = array<i32>} : memref<128x384xf32, #tpu.memory_space<vmem>>, vector<1x128xf32>,
    %c53_448 = arith.constant 53 : index
    %c128_449 = arith.constant 128 : index
    %474 = vector.load %arg14[%c53_448, %c128_449] : memref<128x384xf32, #tpu.memory_space<vmem>>, vector<1x128xf32>
    tpu.vector_store %arg14[%c53_448, %c128_449], %472 {strides = array<i32>} : memref<128x384xf32, #tpu.memory_space<vmem>>, vector<1x128xf32>,
    %c52_450 = arith.constant 52 : index
    %c256_451 = arith.constant 256 : index
    %475 = vector.load %arg14[%c52_450, %c256_451] : memref<128x384xf32, #tpu.memory_space<vmem>>, vector<1x128xf32>
    tpu.vector_store %arg14[%c52_450, %c256_451], %472 {strides = array<i32>} : memref<128x384xf32, #tpu.memory_space<vmem>>, vector<1x128xf32>,
    %c8_i32_452 = arith.constant 8 : i32
    %476 = arith.muli %arg0, %c8_i32_452 : i32
    %c3_i32_453 = arith.constant 3 : i32
    %477 = arith.addi %476, %c3_i32_453 : i32
    %478 = arith.index_cast %477 : i32 to index
    %c7_454 = arith.constant 7 : index
    %479 = memref.load %arg1[%478, %c7_454] : memref<8x16xi32, #tpu.memory_space<smem>>
    %480 = arith.index_cast %479 : i32 to index
    %c0_455 = arith.constant 0 : index
    %481 = vector.load %arg2[%480, %c0_455] : memref<1000x128xf32, #tpu.memory_space<vmem>>, vector<1x128xf32>
    %c55 = arith.constant 55 : index
    %c0_456 = arith.constant 0 : index
    %482 = vector.load %arg14[%c55, %c0_456] : memref<128x384xf32, #tpu.memory_space<vmem>>, vector<1x128xf32>
    tpu.vector_store %arg14[%c55, %c0_456], %481 {strides = array<i32>} : memref<128x384xf32, #tpu.memory_space<vmem>>, vector<1x128xf32>,
    %c54_457 = arith.constant 54 : index
    %c128_458 = arith.constant 128 : index
    %483 = vector.load %arg14[%c54_457, %c128_458] : memref<128x384xf32, #tpu.memory_space<vmem>>, vector<1x128xf32>
    tpu.vector_store %arg14[%c54_457, %c128_458], %481 {strides = array<i32>} : memref<128x384xf32, #tpu.memory_space<vmem>>, vector<1x128xf32>,
    %c53_459 = arith.constant 53 : index
    %c256_460 = arith.constant 256 : index
    %484 = vector.load %arg14[%c53_459, %c256_460] : memref<128x384xf32, #tpu.memory_space<vmem>>, vector<1x128xf32>
    tpu.vector_store %arg14[%c53_459, %c256_460], %481 {strides = array<i32>} : memref<128x384xf32, #tpu.memory_space<vmem>>, vector<1x128xf32>,
    %c8_i32_461 = arith.constant 8 : i32
    %485 = arith.muli %arg0, %c8_i32_461 : i32
    %c3_i32_462 = arith.constant 3 : i32
    %486 = arith.addi %485, %c3_i32_462 : i32
    %487 = arith.index_cast %486 : i32 to index
    %c8_463 = arith.constant 8 : index
    %488 = memref.load %arg1[%487, %c8_463] : memref<8x16xi32, #tpu.memory_space<smem>>
    %489 = arith.index_cast %488 : i32 to index
    %c0_464 = arith.constant 0 : index
    %490 = vector.load %arg2[%489, %c0_464] : memref<1000x128xf32, #tpu.memory_space<vmem>>, vector<1x128xf32>
    %c56 = arith.constant 56 : index
    %c0_465 = arith.constant 0 : index
    %491 = vector.load %arg14[%c56, %c0_465] : memref<128x384xf32, #tpu.memory_space<vmem>>, vector<1x128xf32>
    tpu.vector_store %arg14[%c56, %c0_465], %490 {strides = array<i32>} : memref<128x384xf32, #tpu.memory_space<vmem>>, vector<1x128xf32>,
    %c55_466 = arith.constant 55 : index
    %c128_467 = arith.constant 128 : index
    %492 = vector.load %arg14[%c55_466, %c128_467] : memref<128x384xf32, #tpu.memory_space<vmem>>, vector<1x128xf32>
    tpu.vector_store %arg14[%c55_466, %c128_467], %490 {strides = array<i32>} : memref<128x384xf32, #tpu.memory_space<vmem>>, vector<1x128xf32>,
    %c54_468 = arith.constant 54 : index
    %c256_469 = arith.constant 256 : index
    %493 = vector.load %arg14[%c54_468, %c256_469] : memref<128x384xf32, #tpu.memory_space<vmem>>, vector<1x128xf32>
    tpu.vector_store %arg14[%c54_468, %c256_469], %490 {strides = array<i32>} : memref<128x384xf32, #tpu.memory_space<vmem>>, vector<1x128xf32>,
    %c8_i32_470 = arith.constant 8 : i32
    %494 = arith.muli %arg0, %c8_i32_470 : i32
    %c3_i32_471 = arith.constant 3 : i32
    %495 = arith.addi %494, %c3_i32_471 : i32
    %496 = arith.index_cast %495 : i32 to index
    %c9_472 = arith.constant 9 : index
    %497 = memref.load %arg1[%496, %c9_472] : memref<8x16xi32, #tpu.memory_space<smem>>
    %498 = arith.index_cast %497 : i32 to index
    %c0_473 = arith.constant 0 : index
    %499 = vector.load %arg2[%498, %c0_473] : memref<1000x128xf32, #tpu.memory_space<vmem>>, vector<1x128xf32>
    %c57 = arith.constant 57 : index
    %c0_474 = arith.constant 0 : index
    %500 = vector.load %arg14[%c57, %c0_474] : memref<128x384xf32, #tpu.memory_space<vmem>>, vector<1x128xf32>
    tpu.vector_store %arg14[%c57, %c0_474], %499 {strides = array<i32>} : memref<128x384xf32, #tpu.memory_space<vmem>>, vector<1x128xf32>,
    %c56_475 = arith.constant 56 : index
    %c128_476 = arith.constant 128 : index
    %501 = vector.load %arg14[%c56_475, %c128_476] : memref<128x384xf32, #tpu.memory_space<vmem>>, vector<1x128xf32>
    tpu.vector_store %arg14[%c56_475, %c128_476], %499 {strides = array<i32>} : memref<128x384xf32, #tpu.memory_space<vmem>>, vector<1x128xf32>,
    %c55_477 = arith.constant 55 : index
    %c256_478 = arith.constant 256 : index
    %502 = vector.load %arg14[%c55_477, %c256_478] : memref<128x384xf32, #tpu.memory_space<vmem>>, vector<1x128xf32>
    tpu.vector_store %arg14[%c55_477, %c256_478], %499 {strides = array<i32>} : memref<128x384xf32, #tpu.memory_space<vmem>>, vector<1x128xf32>,
    %c8_i32_479 = arith.constant 8 : i32
    %503 = arith.muli %arg0, %c8_i32_479 : i32
    %c3_i32_480 = arith.constant 3 : i32
    %504 = arith.addi %503, %c3_i32_480 : i32
    %505 = arith.index_cast %504 : i32 to index
    %c10_481 = arith.constant 10 : index
    %506 = memref.load %arg1[%505, %c10_481] : memref<8x16xi32, #tpu.memory_space<smem>>
    %507 = arith.index_cast %506 : i32 to index
    %c0_482 = arith.constant 0 : index
    %508 = vector.load %arg2[%507, %c0_482] : memref<1000x128xf32, #tpu.memory_space<vmem>>, vector<1x128xf32>
    %c58 = arith.constant 58 : index
    %c0_483 = arith.constant 0 : index
    %509 = vector.load %arg14[%c58, %c0_483] : memref<128x384xf32, #tpu.memory_space<vmem>>, vector<1x128xf32>
    tpu.vector_store %arg14[%c58, %c0_483], %508 {strides = array<i32>} : memref<128x384xf32, #tpu.memory_space<vmem>>, vector<1x128xf32>,
    %c57_484 = arith.constant 57 : index
    %c128_485 = arith.constant 128 : index
    %510 = vector.load %arg14[%c57_484, %c128_485] : memref<128x384xf32, #tpu.memory_space<vmem>>, vector<1x128xf32>
    tpu.vector_store %arg14[%c57_484, %c128_485], %508 {strides = array<i32>} : memref<128x384xf32, #tpu.memory_space<vmem>>, vector<1x128xf32>,
    %c56_486 = arith.constant 56 : index
    %c256_487 = arith.constant 256 : index
    %511 = vector.load %arg14[%c56_486, %c256_487] : memref<128x384xf32, #tpu.memory_space<vmem>>, vector<1x128xf32>
    tpu.vector_store %arg14[%c56_486, %c256_487], %508 {strides = array<i32>} : memref<128x384xf32, #tpu.memory_space<vmem>>, vector<1x128xf32>,
    %c8_i32_488 = arith.constant 8 : i32
    %512 = arith.muli %arg0, %c8_i32_488 : i32
    %c3_i32_489 = arith.constant 3 : i32
    %513 = arith.addi %512, %c3_i32_489 : i32
    %514 = arith.index_cast %513 : i32 to index
    %c11_490 = arith.constant 11 : index
    %515 = memref.load %arg1[%514, %c11_490] : memref<8x16xi32, #tpu.memory_space<smem>>
    %516 = arith.index_cast %515 : i32 to index
    %c0_491 = arith.constant 0 : index
    %517 = vector.load %arg2[%516, %c0_491] : memref<1000x128xf32, #tpu.memory_space<vmem>>, vector<1x128xf32>
    %c59 = arith.constant 59 : index
    %c0_492 = arith.constant 0 : index
    %518 = vector.load %arg14[%c59, %c0_492] : memref<128x384xf32, #tpu.memory_space<vmem>>, vector<1x128xf32>
    tpu.vector_store %arg14[%c59, %c0_492], %517 {strides = array<i32>} : memref<128x384xf32, #tpu.memory_space<vmem>>, vector<1x128xf32>,
    %c58_493 = arith.constant 58 : index
    %c128_494 = arith.constant 128 : index
    %519 = vector.load %arg14[%c58_493, %c128_494] : memref<128x384xf32, #tpu.memory_space<vmem>>, vector<1x128xf32>
    tpu.vector_store %arg14[%c58_493, %c128_494], %517 {strides = array<i32>} : memref<128x384xf32, #tpu.memory_space<vmem>>, vector<1x128xf32>,
    %c57_495 = arith.constant 57 : index
    %c256_496 = arith.constant 256 : index
    %520 = vector.load %arg14[%c57_495, %c256_496] : memref<128x384xf32, #tpu.memory_space<vmem>>, vector<1x128xf32>
    tpu.vector_store %arg14[%c57_495, %c256_496], %517 {strides = array<i32>} : memref<128x384xf32, #tpu.memory_space<vmem>>, vector<1x128xf32>,
    %c8_i32_497 = arith.constant 8 : i32
    %521 = arith.muli %arg0, %c8_i32_497 : i32
    %c3_i32_498 = arith.constant 3 : i32
    %522 = arith.addi %521, %c3_i32_498 : i32
    %523 = arith.index_cast %522 : i32 to index
    %c12_499 = arith.constant 12 : index
    %524 = memref.load %arg1[%523, %c12_499] : memref<8x16xi32, #tpu.memory_space<smem>>
    %525 = arith.index_cast %524 : i32 to index
    %c0_500 = arith.constant 0 : index
    %526 = vector.load %arg2[%525, %c0_500] : memref<1000x128xf32, #tpu.memory_space<vmem>>, vector<1x128xf32>
    %c60 = arith.constant 60 : index
    %c0_501 = arith.constant 0 : index
    %527 = vector.load %arg14[%c60, %c0_501] : memref<128x384xf32, #tpu.memory_space<vmem>>, vector<1x128xf32>
    tpu.vector_store %arg14[%c60, %c0_501], %526 {strides = array<i32>} : memref<128x384xf32, #tpu.memory_space<vmem>>, vector<1x128xf32>,
    %c59_502 = arith.constant 59 : index
    %c128_503 = arith.constant 128 : index
    %528 = vector.load %arg14[%c59_502, %c128_503] : memref<128x384xf32, #tpu.memory_space<vmem>>, vector<1x128xf32>
    tpu.vector_store %arg14[%c59_502, %c128_503], %526 {strides = array<i32>} : memref<128x384xf32, #tpu.memory_space<vmem>>, vector<1x128xf32>,
    %c58_504 = arith.constant 58 : index
    %c256_505 = arith.constant 256 : index
    %529 = vector.load %arg14[%c58_504, %c256_505] : memref<128x384xf32, #tpu.memory_space<vmem>>, vector<1x128xf32>
    tpu.vector_store %arg14[%c58_504, %c256_505], %526 {strides = array<i32>} : memref<128x384xf32, #tpu.memory_space<vmem>>, vector<1x128xf32>,
    %c8_i32_506 = arith.constant 8 : i32
    %530 = arith.muli %arg0, %c8_i32_506 : i32
    %c3_i32_507 = arith.constant 3 : i32
    %531 = arith.addi %530, %c3_i32_507 : i32
    %532 = arith.index_cast %531 : i32 to index
    %c13_508 = arith.constant 13 : index
    %533 = memref.load %arg1[%532, %c13_508] : memref<8x16xi32, #tpu.memory_space<smem>>
    %534 = arith.index_cast %533 : i32 to index
    %c0_509 = arith.constant 0 : index
    %535 = vector.load %arg2[%534, %c0_509] : memref<1000x128xf32, #tpu.memory_space<vmem>>, vector<1x128xf32>
    %c61 = arith.constant 61 : index
    %c0_510 = arith.constant 0 : index
    %536 = vector.load %arg14[%c61, %c0_510] : memref<128x384xf32, #tpu.memory_space<vmem>>, vector<1x128xf32>
    tpu.vector_store %arg14[%c61, %c0_510], %535 {strides = array<i32>} : memref<128x384xf32, #tpu.memory_space<vmem>>, vector<1x128xf32>,
    %c60_511 = arith.constant 60 : index
    %c128_512 = arith.constant 128 : index
    %537 = vector.load %arg14[%c60_511, %c128_512] : memref<128x384xf32, #tpu.memory_space<vmem>>, vector<1x128xf32>
    tpu.vector_store %arg14[%c60_511, %c128_512], %535 {strides = array<i32>} : memref<128x384xf32, #tpu.memory_space<vmem>>, vector<1x128xf32>,
    %c59_513 = arith.constant 59 : index
    %c256_514 = arith.constant 256 : index
    %538 = vector.load %arg14[%c59_513, %c256_514] : memref<128x384xf32, #tpu.memory_space<vmem>>, vector<1x128xf32>
    tpu.vector_store %arg14[%c59_513, %c256_514], %535 {strides = array<i32>} : memref<128x384xf32, #tpu.memory_space<vmem>>, vector<1x128xf32>,
    %c8_i32_515 = arith.constant 8 : i32
    %539 = arith.muli %arg0, %c8_i32_515 : i32
    %c3_i32_516 = arith.constant 3 : i32
    %540 = arith.addi %539, %c3_i32_516 : i32
    %541 = arith.index_cast %540 : i32 to index
    %c14_517 = arith.constant 14 : index
    %542 = memref.load %arg1[%541, %c14_517] : memref<8x16xi32, #tpu.memory_space<smem>>
    %543 = arith.index_cast %542 : i32 to index
    %c0_518 = arith.constant 0 : index
    %544 = vector.load %arg2[%543, %c0_518] : memref<1000x128xf32, #tpu.memory_space<vmem>>, vector<1x128xf32>
    %c61_519 = arith.constant 61 : index
    %c128_520 = arith.constant 128 : index
    %545 = vector.load %arg14[%c61_519, %c128_520] : memref<128x384xf32, #tpu.memory_space<vmem>>, vector<1x128xf32>
    tpu.vector_store %arg14[%c61_519, %c128_520], %544 {strides = array<i32>} : memref<128x384xf32, #tpu.memory_space<vmem>>, vector<1x128xf32>,
    %c60_521 = arith.constant 60 : index
    %c256_522 = arith.constant 256 : index
    %546 = vector.load %arg14[%c60_521, %c256_522] : memref<128x384xf32, #tpu.memory_space<vmem>>, vector<1x128xf32>
    tpu.vector_store %arg14[%c60_521, %c256_522], %544 {strides = array<i32>} : memref<128x384xf32, #tpu.memory_space<vmem>>, vector<1x128xf32>,
    %c8_i32_523 = arith.constant 8 : i32
    %547 = arith.muli %arg0, %c8_i32_523 : i32
    %c3_i32_524 = arith.constant 3 : i32
    %548 = arith.addi %547, %c3_i32_524 : i32
    %549 = arith.index_cast %548 : i32 to index
    %c15_525 = arith.constant 15 : index
    %550 = memref.load %arg1[%549, %c15_525] : memref<8x16xi32, #tpu.memory_space<smem>>
    %551 = arith.index_cast %550 : i32 to index
    %c0_526 = arith.constant 0 : index
    %552 = vector.load %arg2[%551, %c0_526] : memref<1000x128xf32, #tpu.memory_space<vmem>>, vector<1x128xf32>
    %c61_527 = arith.constant 61 : index
    %c256_528 = arith.constant 256 : index
    %553 = vector.load %arg14[%c61_527, %c256_528] : memref<128x384xf32, #tpu.memory_space<vmem>>, vector<1x128xf32>
    tpu.vector_store %arg14[%c61_527, %c256_528], %552 {strides = array<i32>} : memref<128x384xf32, #tpu.memory_space<vmem>>, vector<1x128xf32>,
    %c8_i32_529 = arith.constant 8 : i32
    %554 = arith.muli %arg0, %c8_i32_529 : i32
    %c4_i32 = arith.constant 4 : i32
    %555 = arith.addi %554, %c4_i32 : i32
    %556 = arith.index_cast %555 : i32 to index
    %c0_530 = arith.constant 0 : index
    %557 = memref.load %arg1[%556, %c0_530] : memref<8x16xi32, #tpu.memory_space<smem>>
    %558 = arith.index_cast %557 : i32 to index
    %c0_531 = arith.constant 0 : index
    %559 = vector.load %arg2[%558, %c0_531] : memref<1000x128xf32, #tpu.memory_space<vmem>>, vector<1x128xf32>
    %c64 = arith.constant 64 : index
    %c0_532 = arith.constant 0 : index
    %560 = vector.load %arg14[%c64, %c0_532] : memref<128x384xf32, #tpu.memory_space<vmem>>, vector<1x128xf32>
    tpu.vector_store %arg14[%c64, %c0_532], %559 {strides = array<i32>} : memref<128x384xf32, #tpu.memory_space<vmem>>, vector<1x128xf32>,
    %c8_i32_533 = arith.constant 8 : i32
    %561 = arith.muli %arg0, %c8_i32_533 : i32
    %c4_i32_534 = arith.constant 4 : i32
    %562 = arith.addi %561, %c4_i32_534 : i32
    %563 = arith.index_cast %562 : i32 to index
    %c1_535 = arith.constant 1 : index
    %564 = memref.load %arg1[%563, %c1_535] : memref<8x16xi32, #tpu.memory_space<smem>>
    %565 = arith.index_cast %564 : i32 to index
    %c0_536 = arith.constant 0 : index
    %566 = vector.load %arg2[%565, %c0_536] : memref<1000x128xf32, #tpu.memory_space<vmem>>, vector<1x128xf32>
    %c65 = arith.constant 65 : index
    %c0_537 = arith.constant 0 : index
    %567 = vector.load %arg14[%c65, %c0_537] : memref<128x384xf32, #tpu.memory_space<vmem>>, vector<1x128xf32>
    tpu.vector_store %arg14[%c65, %c0_537], %566 {strides = array<i32>} : memref<128x384xf32, #tpu.memory_space<vmem>>, vector<1x128xf32>,
    %c64_538 = arith.constant 64 : index
    %c128_539 = arith.constant 128 : index
    %568 = vector.load %arg14[%c64_538, %c128_539] : memref<128x384xf32, #tpu.memory_space<vmem>>, vector<1x128xf32>
    tpu.vector_store %arg14[%c64_538, %c128_539], %566 {strides = array<i32>} : memref<128x384xf32, #tpu.memory_space<vmem>>, vector<1x128xf32>,
    %c8_i32_540 = arith.constant 8 : i32
    %569 = arith.muli %arg0, %c8_i32_540 : i32
    %c4_i32_541 = arith.constant 4 : i32
    %570 = arith.addi %569, %c4_i32_541 : i32
    %571 = arith.index_cast %570 : i32 to index
    %c2_542 = arith.constant 2 : index
    %572 = memref.load %arg1[%571, %c2_542] : memref<8x16xi32, #tpu.memory_space<smem>>
    %573 = arith.index_cast %572 : i32 to index
    %c0_543 = arith.constant 0 : index
    %574 = vector.load %arg2[%573, %c0_543] : memref<1000x128xf32, #tpu.memory_space<vmem>>, vector<1x128xf32>
    %c66 = arith.constant 66 : index
    %c0_544 = arith.constant 0 : index
    %575 = vector.load %arg14[%c66, %c0_544] : memref<128x384xf32, #tpu.memory_space<vmem>>, vector<1x128xf32>
    tpu.vector_store %arg14[%c66, %c0_544], %574 {strides = array<i32>} : memref<128x384xf32, #tpu.memory_space<vmem>>, vector<1x128xf32>,
    %c65_545 = arith.constant 65 : index
    %c128_546 = arith.constant 128 : index
    %576 = vector.load %arg14[%c65_545, %c128_546] : memref<128x384xf32, #tpu.memory_space<vmem>>, vector<1x128xf32>
    tpu.vector_store %arg14[%c65_545, %c128_546], %574 {strides = array<i32>} : memref<128x384xf32, #tpu.memory_space<vmem>>, vector<1x128xf32>,
    %c64_547 = arith.constant 64 : index
    %c256_548 = arith.constant 256 : index
    %577 = vector.load %arg14[%c64_547, %c256_548] : memref<128x384xf32, #tpu.memory_space<vmem>>, vector<1x128xf32>
    tpu.vector_store %arg14[%c64_547, %c256_548], %574 {strides = array<i32>} : memref<128x384xf32, #tpu.memory_space<vmem>>, vector<1x128xf32>,
    %c8_i32_549 = arith.constant 8 : i32
    %578 = arith.muli %arg0, %c8_i32_549 : i32
    %c4_i32_550 = arith.constant 4 : i32
    %579 = arith.addi %578, %c4_i32_550 : i32
    %580 = arith.index_cast %579 : i32 to index
    %c3_551 = arith.constant 3 : index
    %581 = memref.load %arg1[%580, %c3_551] : memref<8x16xi32, #tpu.memory_space<smem>>
    %582 = arith.index_cast %581 : i32 to index
    %c0_552 = arith.constant 0 : index
    %583 = vector.load %arg2[%582, %c0_552] : memref<1000x128xf32, #tpu.memory_space<vmem>>, vector<1x128xf32>
    %c67 = arith.constant 67 : index
    %c0_553 = arith.constant 0 : index
    %584 = vector.load %arg14[%c67, %c0_553] : memref<128x384xf32, #tpu.memory_space<vmem>>, vector<1x128xf32>
    tpu.vector_store %arg14[%c67, %c0_553], %583 {strides = array<i32>} : memref<128x384xf32, #tpu.memory_space<vmem>>, vector<1x128xf32>,
    %c66_554 = arith.constant 66 : index
    %c128_555 = arith.constant 128 : index
    %585 = vector.load %arg14[%c66_554, %c128_555] : memref<128x384xf32, #tpu.memory_space<vmem>>, vector<1x128xf32>
    tpu.vector_store %arg14[%c66_554, %c128_555], %583 {strides = array<i32>} : memref<128x384xf32, #tpu.memory_space<vmem>>, vector<1x128xf32>,
    %c65_556 = arith.constant 65 : index
    %c256_557 = arith.constant 256 : index
    %586 = vector.load %arg14[%c65_556, %c256_557] : memref<128x384xf32, #tpu.memory_space<vmem>>, vector<1x128xf32>
    tpu.vector_store %arg14[%c65_556, %c256_557], %583 {strides = array<i32>} : memref<128x384xf32, #tpu.memory_space<vmem>>, vector<1x128xf32>,
    %c8_i32_558 = arith.constant 8 : i32
    %587 = arith.muli %arg0, %c8_i32_558 : i32
    %c4_i32_559 = arith.constant 4 : i32
    %588 = arith.addi %587, %c4_i32_559 : i32
    %589 = arith.index_cast %588 : i32 to index
    %c4_560 = arith.constant 4 : index
    %590 = memref.load %arg1[%589, %c4_560] : memref<8x16xi32, #tpu.memory_space<smem>>
    %591 = arith.index_cast %590 : i32 to index
    %c0_561 = arith.constant 0 : index
    %592 = vector.load %arg2[%591, %c0_561] : memref<1000x128xf32, #tpu.memory_space<vmem>>, vector<1x128xf32>
    %c68 = arith.constant 68 : index
    %c0_562 = arith.constant 0 : index
    %593 = vector.load %arg14[%c68, %c0_562] : memref<128x384xf32, #tpu.memory_space<vmem>>, vector<1x128xf32>
    tpu.vector_store %arg14[%c68, %c0_562], %592 {strides = array<i32>} : memref<128x384xf32, #tpu.memory_space<vmem>>, vector<1x128xf32>,
    %c67_563 = arith.constant 67 : index
    %c128_564 = arith.constant 128 : index
    %594 = vector.load %arg14[%c67_563, %c128_564] : memref<128x384xf32, #tpu.memory_space<vmem>>, vector<1x128xf32>
    tpu.vector_store %arg14[%c67_563, %c128_564], %592 {strides = array<i32>} : memref<128x384xf32, #tpu.memory_space<vmem>>, vector<1x128xf32>,
    %c66_565 = arith.constant 66 : index
    %c256_566 = arith.constant 256 : index
    %595 = vector.load %arg14[%c66_565, %c256_566] : memref<128x384xf32, #tpu.memory_space<vmem>>, vector<1x128xf32>
    tpu.vector_store %arg14[%c66_565, %c256_566], %592 {strides = array<i32>} : memref<128x384xf32, #tpu.memory_space<vmem>>, vector<1x128xf32>,
    %c8_i32_567 = arith.constant 8 : i32
    %596 = arith.muli %arg0, %c8_i32_567 : i32
    %c4_i32_568 = arith.constant 4 : i32
    %597 = arith.addi %596, %c4_i32_568 : i32
    %598 = arith.index_cast %597 : i32 to index
    %c5_569 = arith.constant 5 : index
    %599 = memref.load %arg1[%598, %c5_569] : memref<8x16xi32, #tpu.memory_space<smem>>
    %600 = arith.index_cast %599 : i32 to index
    %c0_570 = arith.constant 0 : index
    %601 = vector.load %arg2[%600, %c0_570] : memref<1000x128xf32, #tpu.memory_space<vmem>>, vector<1x128xf32>
    %c69 = arith.constant 69 : index
    %c0_571 = arith.constant 0 : index
    %602 = vector.load %arg14[%c69, %c0_571] : memref<128x384xf32, #tpu.memory_space<vmem>>, vector<1x128xf32>
    tpu.vector_store %arg14[%c69, %c0_571], %601 {strides = array<i32>} : memref<128x384xf32, #tpu.memory_space<vmem>>, vector<1x128xf32>,
    %c68_572 = arith.constant 68 : index
    %c128_573 = arith.constant 128 : index
    %603 = vector.load %arg14[%c68_572, %c128_573] : memref<128x384xf32, #tpu.memory_space<vmem>>, vector<1x128xf32>
    tpu.vector_store %arg14[%c68_572, %c128_573], %601 {strides = array<i32>} : memref<128x384xf32, #tpu.memory_space<vmem>>, vector<1x128xf32>,
    %c67_574 = arith.constant 67 : index
    %c256_575 = arith.constant 256 : index
    %604 = vector.load %arg14[%c67_574, %c256_575] : memref<128x384xf32, #tpu.memory_space<vmem>>, vector<1x128xf32>
    tpu.vector_store %arg14[%c67_574, %c256_575], %601 {strides = array<i32>} : memref<128x384xf32, #tpu.memory_space<vmem>>, vector<1x128xf32>,
    %c8_i32_576 = arith.constant 8 : i32
    %605 = arith.muli %arg0, %c8_i32_576 : i32
    %c4_i32_577 = arith.constant 4 : i32
    %606 = arith.addi %605, %c4_i32_577 : i32
    %607 = arith.index_cast %606 : i32 to index
    %c6_578 = arith.constant 6 : index
    %608 = memref.load %arg1[%607, %c6_578] : memref<8x16xi32, #tpu.memory_space<smem>>
    %609 = arith.index_cast %608 : i32 to index
    %c0_579 = arith.constant 0 : index
    %610 = vector.load %arg2[%609, %c0_579] : memref<1000x128xf32, #tpu.memory_space<vmem>>, vector<1x128xf32>
    %c70 = arith.constant 70 : index
    %c0_580 = arith.constant 0 : index
    %611 = vector.load %arg14[%c70, %c0_580] : memref<128x384xf32, #tpu.memory_space<vmem>>, vector<1x128xf32>
    tpu.vector_store %arg14[%c70, %c0_580], %610 {strides = array<i32>} : memref<128x384xf32, #tpu.memory_space<vmem>>, vector<1x128xf32>,
    %c69_581 = arith.constant 69 : index
    %c128_582 = arith.constant 128 : index
    %612 = vector.load %arg14[%c69_581, %c128_582] : memref<128x384xf32, #tpu.memory_space<vmem>>, vector<1x128xf32>
    tpu.vector_store %arg14[%c69_581, %c128_582], %610 {strides = array<i32>} : memref<128x384xf32, #tpu.memory_space<vmem>>, vector<1x128xf32>,
    %c68_583 = arith.constant 68 : index
    %c256_584 = arith.constant 256 : index
    %613 = vector.load %arg14[%c68_583, %c256_584] : memref<128x384xf32, #tpu.memory_space<vmem>>, vector<1x128xf32>
    tpu.vector_store %arg14[%c68_583, %c256_584], %610 {strides = array<i32>} : memref<128x384xf32, #tpu.memory_space<vmem>>, vector<1x128xf32>,
    %c8_i32_585 = arith.constant 8 : i32
    %614 = arith.muli %arg0, %c8_i32_585 : i32
    %c4_i32_586 = arith.constant 4 : i32
    %615 = arith.addi %614, %c4_i32_586 : i32
    %616 = arith.index_cast %615 : i32 to index
    %c7_587 = arith.constant 7 : index
    %617 = memref.load %arg1[%616, %c7_587] : memref<8x16xi32, #tpu.memory_space<smem>>
    %618 = arith.index_cast %617 : i32 to index
    %c0_588 = arith.constant 0 : index
    %619 = vector.load %arg2[%618, %c0_588] : memref<1000x128xf32, #tpu.memory_space<vmem>>, vector<1x128xf32>
    %c71 = arith.constant 71 : index
    %c0_589 = arith.constant 0 : index
    %620 = vector.load %arg14[%c71, %c0_589] : memref<128x384xf32, #tpu.memory_space<vmem>>, vector<1x128xf32>
    tpu.vector_store %arg14[%c71, %c0_589], %619 {strides = array<i32>} : memref<128x384xf32, #tpu.memory_space<vmem>>, vector<1x128xf32>,
    %c70_590 = arith.constant 70 : index
    %c128_591 = arith.constant 128 : index
    %621 = vector.load %arg14[%c70_590, %c128_591] : memref<128x384xf32, #tpu.memory_space<vmem>>, vector<1x128xf32>
    tpu.vector_store %arg14[%c70_590, %c128_591], %619 {strides = array<i32>} : memref<128x384xf32, #tpu.memory_space<vmem>>, vector<1x128xf32>,
    %c69_592 = arith.constant 69 : index
    %c256_593 = arith.constant 256 : index
    %622 = vector.load %arg14[%c69_592, %c256_593] : memref<128x384xf32, #tpu.memory_space<vmem>>, vector<1x128xf32>
    tpu.vector_store %arg14[%c69_592, %c256_593], %619 {strides = array<i32>} : memref<128x384xf32, #tpu.memory_space<vmem>>, vector<1x128xf32>,
    %c8_i32_594 = arith.constant 8 : i32
    %623 = arith.muli %arg0, %c8_i32_594 : i32
    %c4_i32_595 = arith.constant 4 : i32
    %624 = arith.addi %623, %c4_i32_595 : i32
    %625 = arith.index_cast %624 : i32 to index
    %c8_596 = arith.constant 8 : index
    %626 = memref.load %arg1[%625, %c8_596] : memref<8x16xi32, #tpu.memory_space<smem>>
    %627 = arith.index_cast %626 : i32 to index
    %c0_597 = arith.constant 0 : index
    %628 = vector.load %arg2[%627, %c0_597] : memref<1000x128xf32, #tpu.memory_space<vmem>>, vector<1x128xf32>
    %c72 = arith.constant 72 : index
    %c0_598 = arith.constant 0 : index
    %629 = vector.load %arg14[%c72, %c0_598] : memref<128x384xf32, #tpu.memory_space<vmem>>, vector<1x128xf32>
    tpu.vector_store %arg14[%c72, %c0_598], %628 {strides = array<i32>} : memref<128x384xf32, #tpu.memory_space<vmem>>, vector<1x128xf32>,
    %c71_599 = arith.constant 71 : index
    %c128_600 = arith.constant 128 : index
    %630 = vector.load %arg14[%c71_599, %c128_600] : memref<128x384xf32, #tpu.memory_space<vmem>>, vector<1x128xf32>
    tpu.vector_store %arg14[%c71_599, %c128_600], %628 {strides = array<i32>} : memref<128x384xf32, #tpu.memory_space<vmem>>, vector<1x128xf32>,
    %c70_601 = arith.constant 70 : index
    %c256_602 = arith.constant 256 : index
    %631 = vector.load %arg14[%c70_601, %c256_602] : memref<128x384xf32, #tpu.memory_space<vmem>>, vector<1x128xf32>
    tpu.vector_store %arg14[%c70_601, %c256_602], %628 {strides = array<i32>} : memref<128x384xf32, #tpu.memory_space<vmem>>, vector<1x128xf32>,
    %c8_i32_603 = arith.constant 8 : i32
    %632 = arith.muli %arg0, %c8_i32_603 : i32
    %c4_i32_604 = arith.constant 4 : i32
    %633 = arith.addi %632, %c4_i32_604 : i32
    %634 = arith.index_cast %633 : i32 to index
    %c9_605 = arith.constant 9 : index
    %635 = memref.load %arg1[%634, %c9_605] : memref<8x16xi32, #tpu.memory_space<smem>>
    %636 = arith.index_cast %635 : i32 to index
    %c0_606 = arith.constant 0 : index
    %637 = vector.load %arg2[%636, %c0_606] : memref<1000x128xf32, #tpu.memory_space<vmem>>, vector<1x128xf32>
    %c73 = arith.constant 73 : index
    %c0_607 = arith.constant 0 : index
    %638 = vector.load %arg14[%c73, %c0_607] : memref<128x384xf32, #tpu.memory_space<vmem>>, vector<1x128xf32>
    tpu.vector_store %arg14[%c73, %c0_607], %637 {strides = array<i32>} : memref<128x384xf32, #tpu.memory_space<vmem>>, vector<1x128xf32>,
    %c72_608 = arith.constant 72 : index
    %c128_609 = arith.constant 128 : index
    %639 = vector.load %arg14[%c72_608, %c128_609] : memref<128x384xf32, #tpu.memory_space<vmem>>, vector<1x128xf32>
    tpu.vector_store %arg14[%c72_608, %c128_609], %637 {strides = array<i32>} : memref<128x384xf32, #tpu.memory_space<vmem>>, vector<1x128xf32>,
    %c71_610 = arith.constant 71 : index
    %c256_611 = arith.constant 256 : index
    %640 = vector.load %arg14[%c71_610, %c256_611] : memref<128x384xf32, #tpu.memory_space<vmem>>, vector<1x128xf32>
    tpu.vector_store %arg14[%c71_610, %c256_611], %637 {strides = array<i32>} : memref<128x384xf32, #tpu.memory_space<vmem>>, vector<1x128xf32>,
    %c8_i32_612 = arith.constant 8 : i32
    %641 = arith.muli %arg0, %c8_i32_612 : i32
    %c4_i32_613 = arith.constant 4 : i32
    %642 = arith.addi %641, %c4_i32_613 : i32
    %643 = arith.index_cast %642 : i32 to index
    %c10_614 = arith.constant 10 : index
    %644 = memref.load %arg1[%643, %c10_614] : memref<8x16xi32, #tpu.memory_space<smem>>
    %645 = arith.index_cast %644 : i32 to index
    %c0_615 = arith.constant 0 : index
    %646 = vector.load %arg2[%645, %c0_615] : memref<1000x128xf32, #tpu.memory_space<vmem>>, vector<1x128xf32>
    %c74 = arith.constant 74 : index
    %c0_616 = arith.constant 0 : index
    %647 = vector.load %arg14[%c74, %c0_616] : memref<128x384xf32, #tpu.memory_space<vmem>>, vector<1x128xf32>
    tpu.vector_store %arg14[%c74, %c0_616], %646 {strides = array<i32>} : memref<128x384xf32, #tpu.memory_space<vmem>>, vector<1x128xf32>,
    %c73_617 = arith.constant 73 : index
    %c128_618 = arith.constant 128 : index
    %648 = vector.load %arg14[%c73_617, %c128_618] : memref<128x384xf32, #tpu.memory_space<vmem>>, vector<1x128xf32>
    tpu.vector_store %arg14[%c73_617, %c128_618], %646 {strides = array<i32>} : memref<128x384xf32, #tpu.memory_space<vmem>>, vector<1x128xf32>,
    %c72_619 = arith.constant 72 : index
    %c256_620 = arith.constant 256 : index
    %649 = vector.load %arg14[%c72_619, %c256_620] : memref<128x384xf32, #tpu.memory_space<vmem>>, vector<1x128xf32>
    tpu.vector_store %arg14[%c72_619, %c256_620], %646 {strides = array<i32>} : memref<128x384xf32, #tpu.memory_space<vmem>>, vector<1x128xf32>,
    %c8_i32_621 = arith.constant 8 : i32
    %650 = arith.muli %arg0, %c8_i32_621 : i32
    %c4_i32_622 = arith.constant 4 : i32
    %651 = arith.addi %650, %c4_i32_622 : i32
    %652 = arith.index_cast %651 : i32 to index
    %c11_623 = arith.constant 11 : index
    %653 = memref.load %arg1[%652, %c11_623] : memref<8x16xi32, #tpu.memory_space<smem>>
    %654 = arith.index_cast %653 : i32 to index
    %c0_624 = arith.constant 0 : index
    %655 = vector.load %arg2[%654, %c0_624] : memref<1000x128xf32, #tpu.memory_space<vmem>>, vector<1x128xf32>
    %c75 = arith.constant 75 : index
    %c0_625 = arith.constant 0 : index
    %656 = vector.load %arg14[%c75, %c0_625] : memref<128x384xf32, #tpu.memory_space<vmem>>, vector<1x128xf32>
    tpu.vector_store %arg14[%c75, %c0_625], %655 {strides = array<i32>} : memref<128x384xf32, #tpu.memory_space<vmem>>, vector<1x128xf32>,
    %c74_626 = arith.constant 74 : index
    %c128_627 = arith.constant 128 : index
    %657 = vector.load %arg14[%c74_626, %c128_627] : memref<128x384xf32, #tpu.memory_space<vmem>>, vector<1x128xf32>
    tpu.vector_store %arg14[%c74_626, %c128_627], %655 {strides = array<i32>} : memref<128x384xf32, #tpu.memory_space<vmem>>, vector<1x128xf32>,
    %c73_628 = arith.constant 73 : index
    %c256_629 = arith.constant 256 : index
    %658 = vector.load %arg14[%c73_628, %c256_629] : memref<128x384xf32, #tpu.memory_space<vmem>>, vector<1x128xf32>
    tpu.vector_store %arg14[%c73_628, %c256_629], %655 {strides = array<i32>} : memref<128x384xf32, #tpu.memory_space<vmem>>, vector<1x128xf32>,
    %c8_i32_630 = arith.constant 8 : i32
    %659 = arith.muli %arg0, %c8_i32_630 : i32
    %c4_i32_631 = arith.constant 4 : i32
    %660 = arith.addi %659, %c4_i32_631 : i32
    %661 = arith.index_cast %660 : i32 to index
    %c12_632 = arith.constant 12 : index
    %662 = memref.load %arg1[%661, %c12_632] : memref<8x16xi32, #tpu.memory_space<smem>>
    %663 = arith.index_cast %662 : i32 to index
    %c0_633 = arith.constant 0 : index
    %664 = vector.load %arg2[%663, %c0_633] : memref<1000x128xf32, #tpu.memory_space<vmem>>, vector<1x128xf32>
    %c76 = arith.constant 76 : index
    %c0_634 = arith.constant 0 : index
    %665 = vector.load %arg14[%c76, %c0_634] : memref<128x384xf32, #tpu.memory_space<vmem>>, vector<1x128xf32>
    tpu.vector_store %arg14[%c76, %c0_634], %664 {strides = array<i32>} : memref<128x384xf32, #tpu.memory_space<vmem>>, vector<1x128xf32>,
    %c75_635 = arith.constant 75 : index
    %c128_636 = arith.constant 128 : index
    %666 = vector.load %arg14[%c75_635, %c128_636] : memref<128x384xf32, #tpu.memory_space<vmem>>, vector<1x128xf32>
    tpu.vector_store %arg14[%c75_635, %c128_636], %664 {strides = array<i32>} : memref<128x384xf32, #tpu.memory_space<vmem>>, vector<1x128xf32>,
    %c74_637 = arith.constant 74 : index
    %c256_638 = arith.constant 256 : index
    %667 = vector.load %arg14[%c74_637, %c256_638] : memref<128x384xf32, #tpu.memory_space<vmem>>, vector<1x128xf32>
    tpu.vector_store %arg14[%c74_637, %c256_638], %664 {strides = array<i32>} : memref<128x384xf32, #tpu.memory_space<vmem>>, vector<1x128xf32>,
    %c8_i32_639 = arith.constant 8 : i32
    %668 = arith.muli %arg0, %c8_i32_639 : i32
    %c4_i32_640 = arith.constant 4 : i32
    %669 = arith.addi %668, %c4_i32_640 : i32
    %670 = arith.index_cast %669 : i32 to index
    %c13_641 = arith.constant 13 : index
    %671 = memref.load %arg1[%670, %c13_641] : memref<8x16xi32, #tpu.memory_space<smem>>
    %672 = arith.index_cast %671 : i32 to index
    %c0_642 = arith.constant 0 : index
    %673 = vector.load %arg2[%672, %c0_642] : memref<1000x128xf32, #tpu.memory_space<vmem>>, vector<1x128xf32>
    %c77 = arith.constant 77 : index
    %c0_643 = arith.constant 0 : index
    %674 = vector.load %arg14[%c77, %c0_643] : memref<128x384xf32, #tpu.memory_space<vmem>>, vector<1x128xf32>
    tpu.vector_store %arg14[%c77, %c0_643], %673 {strides = array<i32>} : memref<128x384xf32, #tpu.memory_space<vmem>>, vector<1x128xf32>,
    %c76_644 = arith.constant 76 : index
    %c128_645 = arith.constant 128 : index
    %675 = vector.load %arg14[%c76_644, %c128_645] : memref<128x384xf32, #tpu.memory_space<vmem>>, vector<1x128xf32>
    tpu.vector_store %arg14[%c76_644, %c128_645], %673 {strides = array<i32>} : memref<128x384xf32, #tpu.memory_space<vmem>>, vector<1x128xf32>,
    %c75_646 = arith.constant 75 : index
    %c256_647 = arith.constant 256 : index
    %676 = vector.load %arg14[%c75_646, %c256_647] : memref<128x384xf32, #tpu.memory_space<vmem>>, vector<1x128xf32>
    tpu.vector_store %arg14[%c75_646, %c256_647], %673 {strides = array<i32>} : memref<128x384xf32, #tpu.memory_space<vmem>>, vector<1x128xf32>,
    %c8_i32_648 = arith.constant 8 : i32
    %677 = arith.muli %arg0, %c8_i32_648 : i32
    %c4_i32_649 = arith.constant 4 : i32
    %678 = arith.addi %677, %c4_i32_649 : i32
    %679 = arith.index_cast %678 : i32 to index
    %c14_650 = arith.constant 14 : index
    %680 = memref.load %arg1[%679, %c14_650] : memref<8x16xi32, #tpu.memory_space<smem>>
    %681 = arith.index_cast %680 : i32 to index
    %c0_651 = arith.constant 0 : index
    %682 = vector.load %arg2[%681, %c0_651] : memref<1000x128xf32, #tpu.memory_space<vmem>>, vector<1x128xf32>
    %c77_652 = arith.constant 77 : index
    %c128_653 = arith.constant 128 : index
    %683 = vector.load %arg14[%c77_652, %c128_653] : memref<128x384xf32, #tpu.memory_space<vmem>>, vector<1x128xf32>
    tpu.vector_store %arg14[%c77_652, %c128_653], %682 {strides = array<i32>} : memref<128x384xf32, #tpu.memory_space<vmem>>, vector<1x128xf32>,
    %c76_654 = arith.constant 76 : index
    %c256_655 = arith.constant 256 : index
    %684 = vector.load %arg14[%c76_654, %c256_655] : memref<128x384xf32, #tpu.memory_space<vmem>>, vector<1x128xf32>
    tpu.vector_store %arg14[%c76_654, %c256_655], %682 {strides = array<i32>} : memref<128x384xf32, #tpu.memory_space<vmem>>, vector<1x128xf32>,
    %c8_i32_656 = arith.constant 8 : i32
    %685 = arith.muli %arg0, %c8_i32_656 : i32
    %c4_i32_657 = arith.constant 4 : i32
    %686 = arith.addi %685, %c4_i32_657 : i32
    %687 = arith.index_cast %686 : i32 to index
    %c15_658 = arith.constant 15 : index
    %688 = memref.load %arg1[%687, %c15_658] : memref<8x16xi32, #tpu.memory_space<smem>>
    %689 = arith.index_cast %688 : i32 to index
    %c0_659 = arith.constant 0 : index
    %690 = vector.load %arg2[%689, %c0_659] : memref<1000x128xf32, #tpu.memory_space<vmem>>, vector<1x128xf32>
    %c77_660 = arith.constant 77 : index
    %c256_661 = arith.constant 256 : index
    %691 = vector.load %arg14[%c77_660, %c256_661] : memref<128x384xf32, #tpu.memory_space<vmem>>, vector<1x128xf32>
    tpu.vector_store %arg14[%c77_660, %c256_661], %690 {strides = array<i32>} : memref<128x384xf32, #tpu.memory_space<vmem>>, vector<1x128xf32>,
    %c8_i32_662 = arith.constant 8 : i32
    %692 = arith.muli %arg0, %c8_i32_662 : i32
    %c5_i32 = arith.constant 5 : i32
    %693 = arith.addi %692, %c5_i32 : i32
    %694 = arith.index_cast %693 : i32 to index
    %c0_663 = arith.constant 0 : index
    %695 = memref.load %arg1[%694, %c0_663] : memref<8x16xi32, #tpu.memory_space<smem>>
    %696 = arith.index_cast %695 : i32 to index
    %c0_664 = arith.constant 0 : index
    %697 = vector.load %arg2[%696, %c0_664] : memref<1000x128xf32, #tpu.memory_space<vmem>>, vector<1x128xf32>
    %c80 = arith.constant 80 : index
    %c0_665 = arith.constant 0 : index
    %698 = vector.load %arg14[%c80, %c0_665] : memref<128x384xf32, #tpu.memory_space<vmem>>, vector<1x128xf32>
    tpu.vector_store %arg14[%c80, %c0_665], %697 {strides = array<i32>} : memref<128x384xf32, #tpu.memory_space<vmem>>, vector<1x128xf32>,
    %c8_i32_666 = arith.constant 8 : i32
    %699 = arith.muli %arg0, %c8_i32_666 : i32
    %c5_i32_667 = arith.constant 5 : i32
    %700 = arith.addi %699, %c5_i32_667 : i32
    %701 = arith.index_cast %700 : i32 to index
    %c1_668 = arith.constant 1 : index
    %702 = memref.load %arg1[%701, %c1_668] : memref<8x16xi32, #tpu.memory_space<smem>>
    %703 = arith.index_cast %702 : i32 to index
    %c0_669 = arith.constant 0 : index
    %704 = vector.load %arg2[%703, %c0_669] : memref<1000x128xf32, #tpu.memory_space<vmem>>, vector<1x128xf32>
    %c81 = arith.constant 81 : index
    %c0_670 = arith.constant 0 : index
    %705 = vector.load %arg14[%c81, %c0_670] : memref<128x384xf32, #tpu.memory_space<vmem>>, vector<1x128xf32>
    tpu.vector_store %arg14[%c81, %c0_670], %704 {strides = array<i32>} : memref<128x384xf32, #tpu.memory_space<vmem>>, vector<1x128xf32>,
    %c80_671 = arith.constant 80 : index
    %c128_672 = arith.constant 128 : index
    %706 = vector.load %arg14[%c80_671, %c128_672] : memref<128x384xf32, #tpu.memory_space<vmem>>, vector<1x128xf32>
    tpu.vector_store %arg14[%c80_671, %c128_672], %704 {strides = array<i32>} : memref<128x384xf32, #tpu.memory_space<vmem>>, vector<1x128xf32>,
    %c8_i32_673 = arith.constant 8 : i32
    %707 = arith.muli %arg0, %c8_i32_673 : i32
    %c5_i32_674 = arith.constant 5 : i32
    %708 = arith.addi %707, %c5_i32_674 : i32
    %709 = arith.index_cast %708 : i32 to index
    %c2_675 = arith.constant 2 : index
    %710 = memref.load %arg1[%709, %c2_675] : memref<8x16xi32, #tpu.memory_space<smem>>
    %711 = arith.index_cast %710 : i32 to index
    %c0_676 = arith.constant 0 : index
    %712 = vector.load %arg2[%711, %c0_676] : memref<1000x128xf32, #tpu.memory_space<vmem>>, vector<1x128xf32>
    %c82 = arith.constant 82 : index
    %c0_677 = arith.constant 0 : index
    %713 = vector.load %arg14[%c82, %c0_677] : memref<128x384xf32, #tpu.memory_space<vmem>>, vector<1x128xf32>
    tpu.vector_store %arg14[%c82, %c0_677], %712 {strides = array<i32>} : memref<128x384xf32, #tpu.memory_space<vmem>>, vector<1x128xf32>,
    %c81_678 = arith.constant 81 : index
    %c128_679 = arith.constant 128 : index
    %714 = vector.load %arg14[%c81_678, %c128_679] : memref<128x384xf32, #tpu.memory_space<vmem>>, vector<1x128xf32>
    tpu.vector_store %arg14[%c81_678, %c128_679], %712 {strides = array<i32>} : memref<128x384xf32, #tpu.memory_space<vmem>>, vector<1x128xf32>,
    %c80_680 = arith.constant 80 : index
    %c256_681 = arith.constant 256 : index
    %715 = vector.load %arg14[%c80_680, %c256_681] : memref<128x384xf32, #tpu.memory_space<vmem>>, vector<1x128xf32>
    tpu.vector_store %arg14[%c80_680, %c256_681], %712 {strides = array<i32>} : memref<128x384xf32, #tpu.memory_space<vmem>>, vector<1x128xf32>,
    %c8_i32_682 = arith.constant 8 : i32
    %716 = arith.muli %arg0, %c8_i32_682 : i32
    %c5_i32_683 = arith.constant 5 : i32
    %717 = arith.addi %716, %c5_i32_683 : i32
    %718 = arith.index_cast %717 : i32 to index
    %c3_684 = arith.constant 3 : index
    %719 = memref.load %arg1[%718, %c3_684] : memref<8x16xi32, #tpu.memory_space<smem>>
    %720 = arith.index_cast %719 : i32 to index
    %c0_685 = arith.constant 0 : index
    %721 = vector.load %arg2[%720, %c0_685] : memref<1000x128xf32, #tpu.memory_space<vmem>>, vector<1x128xf32>
    %c83 = arith.constant 83 : index
    %c0_686 = arith.constant 0 : index
    %722 = vector.load %arg14[%c83, %c0_686] : memref<128x384xf32, #tpu.memory_space<vmem>>, vector<1x128xf32>
    tpu.vector_store %arg14[%c83, %c0_686], %721 {strides = array<i32>} : memref<128x384xf32, #tpu.memory_space<vmem>>, vector<1x128xf32>,
    %c82_687 = arith.constant 82 : index
    %c128_688 = arith.constant 128 : index
    %723 = vector.load %arg14[%c82_687, %c128_688] : memref<128x384xf32, #tpu.memory_space<vmem>>, vector<1x128xf32>
    tpu.vector_store %arg14[%c82_687, %c128_688], %721 {strides = array<i32>} : memref<128x384xf32, #tpu.memory_space<vmem>>, vector<1x128xf32>,
    %c81_689 = arith.constant 81 : index
    %c256_690 = arith.constant 256 : index
    %724 = vector.load %arg14[%c81_689, %c256_690] : memref<128x384xf32, #tpu.memory_space<vmem>>, vector<1x128xf32>
    tpu.vector_store %arg14[%c81_689, %c256_690], %721 {strides = array<i32>} : memref<128x384xf32, #tpu.memory_space<vmem>>, vector<1x128xf32>,
    %c8_i32_691 = arith.constant 8 : i32
    %725 = arith.muli %arg0, %c8_i32_691 : i32
    %c5_i32_692 = arith.constant 5 : i32
    %726 = arith.addi %725, %c5_i32_692 : i32
    %727 = arith.index_cast %726 : i32 to index
    %c4_693 = arith.constant 4 : index
    %728 = memref.load %arg1[%727, %c4_693] : memref<8x16xi32, #tpu.memory_space<smem>>
    %729 = arith.index_cast %728 : i32 to index
    %c0_694 = arith.constant 0 : index
    %730 = vector.load %arg2[%729, %c0_694] : memref<1000x128xf32, #tpu.memory_space<vmem>>, vector<1x128xf32>
    %c84 = arith.constant 84 : index
    %c0_695 = arith.constant 0 : index
    %731 = vector.load %arg14[%c84, %c0_695] : memref<128x384xf32, #tpu.memory_space<vmem>>, vector<1x128xf32>
    tpu.vector_store %arg14[%c84, %c0_695], %730 {strides = array<i32>} : memref<128x384xf32, #tpu.memory_space<vmem>>, vector<1x128xf32>,
    %c83_696 = arith.constant 83 : index
    %c128_697 = arith.constant 128 : index
    %732 = vector.load %arg14[%c83_696, %c128_697] : memref<128x384xf32, #tpu.memory_space<vmem>>, vector<1x128xf32>
    tpu.vector_store %arg14[%c83_696, %c128_697], %730 {strides = array<i32>} : memref<128x384xf32, #tpu.memory_space<vmem>>, vector<1x128xf32>,
    %c82_698 = arith.constant 82 : index
    %c256_699 = arith.constant 256 : index
    %733 = vector.load %arg14[%c82_698, %c256_699] : memref<128x384xf32, #tpu.memory_space<vmem>>, vector<1x128xf32>
    tpu.vector_store %arg14[%c82_698, %c256_699], %730 {strides = array<i32>} : memref<128x384xf32, #tpu.memory_space<vmem>>, vector<1x128xf32>,
    %c8_i32_700 = arith.constant 8 : i32
    %734 = arith.muli %arg0, %c8_i32_700 : i32
    %c5_i32_701 = arith.constant 5 : i32
    %735 = arith.addi %734, %c5_i32_701 : i32
    %736 = arith.index_cast %735 : i32 to index
    %c5_702 = arith.constant 5 : index
    %737 = memref.load %arg1[%736, %c5_702] : memref<8x16xi32, #tpu.memory_space<smem>>
    %738 = arith.index_cast %737 : i32 to index
    %c0_703 = arith.constant 0 : index
    %739 = vector.load %arg2[%738, %c0_703] : memref<1000x128xf32, #tpu.memory_space<vmem>>, vector<1x128xf32>
    %c85 = arith.constant 85 : index
    %c0_704 = arith.constant 0 : index
    %740 = vector.load %arg14[%c85, %c0_704] : memref<128x384xf32, #tpu.memory_space<vmem>>, vector<1x128xf32>
    tpu.vector_store %arg14[%c85, %c0_704], %739 {strides = array<i32>} : memref<128x384xf32, #tpu.memory_space<vmem>>, vector<1x128xf32>,
    %c84_705 = arith.constant 84 : index
    %c128_706 = arith.constant 128 : index
    %741 = vector.load %arg14[%c84_705, %c128_706] : memref<128x384xf32, #tpu.memory_space<vmem>>, vector<1x128xf32>
    tpu.vector_store %arg14[%c84_705, %c128_706], %739 {strides = array<i32>} : memref<128x384xf32, #tpu.memory_space<vmem>>, vector<1x128xf32>,
    %c83_707 = arith.constant 83 : index
    %c256_708 = arith.constant 256 : index
    %742 = vector.load %arg14[%c83_707, %c256_708] : memref<128x384xf32, #tpu.memory_space<vmem>>, vector<1x128xf32>
    tpu.vector_store %arg14[%c83_707, %c256_708], %739 {strides = array<i32>} : memref<128x384xf32, #tpu.memory_space<vmem>>, vector<1x128xf32>,
    %c8_i32_709 = arith.constant 8 : i32
    %743 = arith.muli %arg0, %c8_i32_709 : i32
    %c5_i32_710 = arith.constant 5 : i32
    %744 = arith.addi %743, %c5_i32_710 : i32
    %745 = arith.index_cast %744 : i32 to index
    %c6_711 = arith.constant 6 : index
    %746 = memref.load %arg1[%745, %c6_711] : memref<8x16xi32, #tpu.memory_space<smem>>
    %747 = arith.index_cast %746 : i32 to index
    %c0_712 = arith.constant 0 : index
    %748 = vector.load %arg2[%747, %c0_712] : memref<1000x128xf32, #tpu.memory_space<vmem>>, vector<1x128xf32>
    %c86 = arith.constant 86 : index
    %c0_713 = arith.constant 0 : index
    %749 = vector.load %arg14[%c86, %c0_713] : memref<128x384xf32, #tpu.memory_space<vmem>>, vector<1x128xf32>
    tpu.vector_store %arg14[%c86, %c0_713], %748 {strides = array<i32>} : memref<128x384xf32, #tpu.memory_space<vmem>>, vector<1x128xf32>,
    %c85_714 = arith.constant 85 : index
    %c128_715 = arith.constant 128 : index
    %750 = vector.load %arg14[%c85_714, %c128_715] : memref<128x384xf32, #tpu.memory_space<vmem>>, vector<1x128xf32>
    tpu.vector_store %arg14[%c85_714, %c128_715], %748 {strides = array<i32>} : memref<128x384xf32, #tpu.memory_space<vmem>>, vector<1x128xf32>,
    %c84_716 = arith.constant 84 : index
    %c256_717 = arith.constant 256 : index
    %751 = vector.load %arg14[%c84_716, %c256_717] : memref<128x384xf32, #tpu.memory_space<vmem>>, vector<1x128xf32>
    tpu.vector_store %arg14[%c84_716, %c256_717], %748 {strides = array<i32>} : memref<128x384xf32, #tpu.memory_space<vmem>>, vector<1x128xf32>,
    %c8_i32_718 = arith.constant 8 : i32
    %752 = arith.muli %arg0, %c8_i32_718 : i32
    %c5_i32_719 = arith.constant 5 : i32
    %753 = arith.addi %752, %c5_i32_719 : i32
    %754 = arith.index_cast %753 : i32 to index
    %c7_720 = arith.constant 7 : index
    %755 = memref.load %arg1[%754, %c7_720] : memref<8x16xi32, #tpu.memory_space<smem>>
    %756 = arith.index_cast %755 : i32 to index
    %c0_721 = arith.constant 0 : index
    %757 = vector.load %arg2[%756, %c0_721] : memref<1000x128xf32, #tpu.memory_space<vmem>>, vector<1x128xf32>
    %c87 = arith.constant 87 : index
    %c0_722 = arith.constant 0 : index
    %758 = vector.load %arg14[%c87, %c0_722] : memref<128x384xf32, #tpu.memory_space<vmem>>, vector<1x128xf32>
    tpu.vector_store %arg14[%c87, %c0_722], %757 {strides = array<i32>} : memref<128x384xf32, #tpu.memory_space<vmem>>, vector<1x128xf32>,
    %c86_723 = arith.constant 86 : index
    %c128_724 = arith.constant 128 : index
    %759 = vector.load %arg14[%c86_723, %c128_724] : memref<128x384xf32, #tpu.memory_space<vmem>>, vector<1x128xf32>
    tpu.vector_store %arg14[%c86_723, %c128_724], %757 {strides = array<i32>} : memref<128x384xf32, #tpu.memory_space<vmem>>, vector<1x128xf32>,
    %c85_725 = arith.constant 85 : index
    %c256_726 = arith.constant 256 : index
    %760 = vector.load %arg14[%c85_725, %c256_726] : memref<128x384xf32, #tpu.memory_space<vmem>>, vector<1x128xf32>
    tpu.vector_store %arg14[%c85_725, %c256_726], %757 {strides = array<i32>} : memref<128x384xf32, #tpu.memory_space<vmem>>, vector<1x128xf32>,
    %c8_i32_727 = arith.constant 8 : i32
    %761 = arith.muli %arg0, %c8_i32_727 : i32
    %c5_i32_728 = arith.constant 5 : i32
    %762 = arith.addi %761, %c5_i32_728 : i32
    %763 = arith.index_cast %762 : i32 to index
    %c8_729 = arith.constant 8 : index
    %764 = memref.load %arg1[%763, %c8_729] : memref<8x16xi32, #tpu.memory_space<smem>>
    %765 = arith.index_cast %764 : i32 to index
    %c0_730 = arith.constant 0 : index
    %766 = vector.load %arg2[%765, %c0_730] : memref<1000x128xf32, #tpu.memory_space<vmem>>, vector<1x128xf32>
    %c88 = arith.constant 88 : index
    %c0_731 = arith.constant 0 : index
    %767 = vector.load %arg14[%c88, %c0_731] : memref<128x384xf32, #tpu.memory_space<vmem>>, vector<1x128xf32>
    tpu.vector_store %arg14[%c88, %c0_731], %766 {strides = array<i32>} : memref<128x384xf32, #tpu.memory_space<vmem>>, vector<1x128xf32>,
    %c87_732 = arith.constant 87 : index
    %c128_733 = arith.constant 128 : index
    %768 = vector.load %arg14[%c87_732, %c128_733] : memref<128x384xf32, #tpu.memory_space<vmem>>, vector<1x128xf32>
    tpu.vector_store %arg14[%c87_732, %c128_733], %766 {strides = array<i32>} : memref<128x384xf32, #tpu.memory_space<vmem>>, vector<1x128xf32>,
    %c86_734 = arith.constant 86 : index
    %c256_735 = arith.constant 256 : index
    %769 = vector.load %arg14[%c86_734, %c256_735] : memref<128x384xf32, #tpu.memory_space<vmem>>, vector<1x128xf32>
    tpu.vector_store %arg14[%c86_734, %c256_735], %766 {strides = array<i32>} : memref<128x384xf32, #tpu.memory_space<vmem>>, vector<1x128xf32>,
    %c8_i32_736 = arith.constant 8 : i32
    %770 = arith.muli %arg0, %c8_i32_736 : i32
    %c5_i32_737 = arith.constant 5 : i32
    %771 = arith.addi %770, %c5_i32_737 : i32
    %772 = arith.index_cast %771 : i32 to index
    %c9_738 = arith.constant 9 : index
    %773 = memref.load %arg1[%772, %c9_738] : memref<8x16xi32, #tpu.memory_space<smem>>
    %774 = arith.index_cast %773 : i32 to index
    %c0_739 = arith.constant 0 : index
    %775 = vector.load %arg2[%774, %c0_739] : memref<1000x128xf32, #tpu.memory_space<vmem>>, vector<1x128xf32>
    %c89 = arith.constant 89 : index
    %c0_740 = arith.constant 0 : index
    %776 = vector.load %arg14[%c89, %c0_740] : memref<128x384xf32, #tpu.memory_space<vmem>>, vector<1x128xf32>
    tpu.vector_store %arg14[%c89, %c0_740], %775 {strides = array<i32>} : memref<128x384xf32, #tpu.memory_space<vmem>>, vector<1x128xf32>,
    %c88_741 = arith.constant 88 : index
    %c128_742 = arith.constant 128 : index
    %777 = vector.load %arg14[%c88_741, %c128_742] : memref<128x384xf32, #tpu.memory_space<vmem>>, vector<1x128xf32>
    tpu.vector_store %arg14[%c88_741, %c128_742], %775 {strides = array<i32>} : memref<128x384xf32, #tpu.memory_space<vmem>>, vector<1x128xf32>,
    %c87_743 = arith.constant 87 : index
    %c256_744 = arith.constant 256 : index
    %778 = vector.load %arg14[%c87_743, %c256_744] : memref<128x384xf32, #tpu.memory_space<vmem>>, vector<1x128xf32>
    tpu.vector_store %arg14[%c87_743, %c256_744], %775 {strides = array<i32>} : memref<128x384xf32, #tpu.memory_space<vmem>>, vector<1x128xf32>,
    %c8_i32_745 = arith.constant 8 : i32
    %779 = arith.muli %arg0, %c8_i32_745 : i32
    %c5_i32_746 = arith.constant 5 : i32
    %780 = arith.addi %779, %c5_i32_746 : i32
    %781 = arith.index_cast %780 : i32 to index
    %c10_747 = arith.constant 10 : index
    %782 = memref.load %arg1[%781, %c10_747] : memref<8x16xi32, #tpu.memory_space<smem>>
    %783 = arith.index_cast %782 : i32 to index
    %c0_748 = arith.constant 0 : index
    %784 = vector.load %arg2[%783, %c0_748] : memref<1000x128xf32, #tpu.memory_space<vmem>>, vector<1x128xf32>
    %c90 = arith.constant 90 : index
    %c0_749 = arith.constant 0 : index
    %785 = vector.load %arg14[%c90, %c0_749] : memref<128x384xf32, #tpu.memory_space<vmem>>, vector<1x128xf32>
    tpu.vector_store %arg14[%c90, %c0_749], %784 {strides = array<i32>} : memref<128x384xf32, #tpu.memory_space<vmem>>, vector<1x128xf32>,
    %c89_750 = arith.constant 89 : index
    %c128_751 = arith.constant 128 : index
    %786 = vector.load %arg14[%c89_750, %c128_751] : memref<128x384xf32, #tpu.memory_space<vmem>>, vector<1x128xf32>
    tpu.vector_store %arg14[%c89_750, %c128_751], %784 {strides = array<i32>} : memref<128x384xf32, #tpu.memory_space<vmem>>, vector<1x128xf32>,
    %c88_752 = arith.constant 88 : index
    %c256_753 = arith.constant 256 : index
    %787 = vector.load %arg14[%c88_752, %c256_753] : memref<128x384xf32, #tpu.memory_space<vmem>>, vector<1x128xf32>
    tpu.vector_store %arg14[%c88_752, %c256_753], %784 {strides = array<i32>} : memref<128x384xf32, #tpu.memory_space<vmem>>, vector<1x128xf32>,
    %c8_i32_754 = arith.constant 8 : i32
    %788 = arith.muli %arg0, %c8_i32_754 : i32
    %c5_i32_755 = arith.constant 5 : i32
    %789 = arith.addi %788, %c5_i32_755 : i32
    %790 = arith.index_cast %789 : i32 to index
    %c11_756 = arith.constant 11 : index
    %791 = memref.load %arg1[%790, %c11_756] : memref<8x16xi32, #tpu.memory_space<smem>>
    %792 = arith.index_cast %791 : i32 to index
    %c0_757 = arith.constant 0 : index
    %793 = vector.load %arg2[%792, %c0_757] : memref<1000x128xf32, #tpu.memory_space<vmem>>, vector<1x128xf32>
    %c91 = arith.constant 91 : index
    %c0_758 = arith.constant 0 : index
    %794 = vector.load %arg14[%c91, %c0_758] : memref<128x384xf32, #tpu.memory_space<vmem>>, vector<1x128xf32>
    tpu.vector_store %arg14[%c91, %c0_758], %793 {strides = array<i32>} : memref<128x384xf32, #tpu.memory_space<vmem>>, vector<1x128xf32>,
    %c90_759 = arith.constant 90 : index
    %c128_760 = arith.constant 128 : index
    %795 = vector.load %arg14[%c90_759, %c128_760] : memref<128x384xf32, #tpu.memory_space<vmem>>, vector<1x128xf32>
    tpu.vector_store %arg14[%c90_759, %c128_760], %793 {strides = array<i32>} : memref<128x384xf32, #tpu.memory_space<vmem>>, vector<1x128xf32>,
    %c89_761 = arith.constant 89 : index
    %c256_762 = arith.constant 256 : index
    %796 = vector.load %arg14[%c89_761, %c256_762] : memref<128x384xf32, #tpu.memory_space<vmem>>, vector<1x128xf32>
    tpu.vector_store %arg14[%c89_761, %c256_762], %793 {strides = array<i32>} : memref<128x384xf32, #tpu.memory_space<vmem>>, vector<1x128xf32>,
    %c8_i32_763 = arith.constant 8 : i32
    %797 = arith.muli %arg0, %c8_i32_763 : i32
    %c5_i32_764 = arith.constant 5 : i32
    %798 = arith.addi %797, %c5_i32_764 : i32
    %799 = arith.index_cast %798 : i32 to index
    %c12_765 = arith.constant 12 : index
    %800 = memref.load %arg1[%799, %c12_765] : memref<8x16xi32, #tpu.memory_space<smem>>
    %801 = arith.index_cast %800 : i32 to index
    %c0_766 = arith.constant 0 : index
    %802 = vector.load %arg2[%801, %c0_766] : memref<1000x128xf32, #tpu.memory_space<vmem>>, vector<1x128xf32>
    %c92 = arith.constant 92 : index
    %c0_767 = arith.constant 0 : index
    %803 = vector.load %arg14[%c92, %c0_767] : memref<128x384xf32, #tpu.memory_space<vmem>>, vector<1x128xf32>
    tpu.vector_store %arg14[%c92, %c0_767], %802 {strides = array<i32>} : memref<128x384xf32, #tpu.memory_space<vmem>>, vector<1x128xf32>,
    %c91_768 = arith.constant 91 : index
    %c128_769 = arith.constant 128 : index
    %804 = vector.load %arg14[%c91_768, %c128_769] : memref<128x384xf32, #tpu.memory_space<vmem>>, vector<1x128xf32>
    tpu.vector_store %arg14[%c91_768, %c128_769], %802 {strides = array<i32>} : memref<128x384xf32, #tpu.memory_space<vmem>>, vector<1x128xf32>,
    %c90_770 = arith.constant 90 : index
    %c256_771 = arith.constant 256 : index
    %805 = vector.load %arg14[%c90_770, %c256_771] : memref<128x384xf32, #tpu.memory_space<vmem>>, vector<1x128xf32>
    tpu.vector_store %arg14[%c90_770, %c256_771], %802 {strides = array<i32>} : memref<128x384xf32, #tpu.memory_space<vmem>>, vector<1x128xf32>,
    %c8_i32_772 = arith.constant 8 : i32
    %806 = arith.muli %arg0, %c8_i32_772 : i32
    %c5_i32_773 = arith.constant 5 : i32
    %807 = arith.addi %806, %c5_i32_773 : i32
    %808 = arith.index_cast %807 : i32 to index
    %c13_774 = arith.constant 13 : index
    %809 = memref.load %arg1[%808, %c13_774] : memref<8x16xi32, #tpu.memory_space<smem>>
    %810 = arith.index_cast %809 : i32 to index
    %c0_775 = arith.constant 0 : index
    %811 = vector.load %arg2[%810, %c0_775] : memref<1000x128xf32, #tpu.memory_space<vmem>>, vector<1x128xf32>
    %c93 = arith.constant 93 : index
    %c0_776 = arith.constant 0 : index
    %812 = vector.load %arg14[%c93, %c0_776] : memref<128x384xf32, #tpu.memory_space<vmem>>, vector<1x128xf32>
    tpu.vector_store %arg14[%c93, %c0_776], %811 {strides = array<i32>} : memref<128x384xf32, #tpu.memory_space<vmem>>, vector<1x128xf32>,
    %c92_777 = arith.constant 92 : index
    %c128_778 = arith.constant 128 : index
    %813 = vector.load %arg14[%c92_777, %c128_778] : memref<128x384xf32, #tpu.memory_space<vmem>>, vector<1x128xf32>
    tpu.vector_store %arg14[%c92_777, %c128_778], %811 {strides = array<i32>} : memref<128x384xf32, #tpu.memory_space<vmem>>, vector<1x128xf32>,
    %c91_779 = arith.constant 91 : index
    %c256_780 = arith.constant 256 : index
    %814 = vector.load %arg14[%c91_779, %c256_780] : memref<128x384xf32, #tpu.memory_space<vmem>>, vector<1x128xf32>
    tpu.vector_store %arg14[%c91_779, %c256_780], %811 {strides = array<i32>} : memref<128x384xf32, #tpu.memory_space<vmem>>, vector<1x128xf32>,
    %c8_i32_781 = arith.constant 8 : i32
    %815 = arith.muli %arg0, %c8_i32_781 : i32
    %c5_i32_782 = arith.constant 5 : i32
    %816 = arith.addi %815, %c5_i32_782 : i32
    %817 = arith.index_cast %816 : i32 to index
    %c14_783 = arith.constant 14 : index
    %818 = memref.load %arg1[%817, %c14_783] : memref<8x16xi32, #tpu.memory_space<smem>>
    %819 = arith.index_cast %818 : i32 to index
    %c0_784 = arith.constant 0 : index
    %820 = vector.load %arg2[%819, %c0_784] : memref<1000x128xf32, #tpu.memory_space<vmem>>, vector<1x128xf32>
    %c93_785 = arith.constant 93 : index
    %c128_786 = arith.constant 128 : index
    %821 = vector.load %arg14[%c93_785, %c128_786] : memref<128x384xf32, #tpu.memory_space<vmem>>, vector<1x128xf32>
    tpu.vector_store %arg14[%c93_785, %c128_786], %820 {strides = array<i32>} : memref<128x384xf32, #tpu.memory_space<vmem>>, vector<1x128xf32>,
    %c92_787 = arith.constant 92 : index
    %c256_788 = arith.constant 256 : index
    %822 = vector.load %arg14[%c92_787, %c256_788] : memref<128x384xf32, #tpu.memory_space<vmem>>, vector<1x128xf32>
    tpu.vector_store %arg14[%c92_787, %c256_788], %820 {strides = array<i32>} : memref<128x384xf32, #tpu.memory_space<vmem>>, vector<1x128xf32>,
    %c8_i32_789 = arith.constant 8 : i32
    %823 = arith.muli %arg0, %c8_i32_789 : i32
    %c5_i32_790 = arith.constant 5 : i32
    %824 = arith.addi %823, %c5_i32_790 : i32
    %825 = arith.index_cast %824 : i32 to index
    %c15_791 = arith.constant 15 : index
    %826 = memref.load %arg1[%825, %c15_791] : memref<8x16xi32, #tpu.memory_space<smem>>
    %827 = arith.index_cast %826 : i32 to index
    %c0_792 = arith.constant 0 : index
    %828 = vector.load %arg2[%827, %c0_792] : memref<1000x128xf32, #tpu.memory_space<vmem>>, vector<1x128xf32>
    %c93_793 = arith.constant 93 : index
    %c256_794 = arith.constant 256 : index
    %829 = vector.load %arg14[%c93_793, %c256_794] : memref<128x384xf32, #tpu.memory_space<vmem>>, vector<1x128xf32>
    tpu.vector_store %arg14[%c93_793, %c256_794], %828 {strides = array<i32>} : memref<128x384xf32, #tpu.memory_space<vmem>>, vector<1x128xf32>,
    %c8_i32_795 = arith.constant 8 : i32
    %830 = arith.muli %arg0, %c8_i32_795 : i32
    %c6_i32 = arith.constant 6 : i32
    %831 = arith.addi %830, %c6_i32 : i32
    %832 = arith.index_cast %831 : i32 to index
    %c0_796 = arith.constant 0 : index
    %833 = memref.load %arg1[%832, %c0_796] : memref<8x16xi32, #tpu.memory_space<smem>>
    %834 = arith.index_cast %833 : i32 to index
    %c0_797 = arith.constant 0 : index
    %835 = vector.load %arg2[%834, %c0_797] : memref<1000x128xf32, #tpu.memory_space<vmem>>, vector<1x128xf32>
    %c96 = arith.constant 96 : index
    %c0_798 = arith.constant 0 : index
    %836 = vector.load %arg14[%c96, %c0_798] : memref<128x384xf32, #tpu.memory_space<vmem>>, vector<1x128xf32>
    tpu.vector_store %arg14[%c96, %c0_798], %835 {strides = array<i32>} : memref<128x384xf32, #tpu.memory_space<vmem>>, vector<1x128xf32>,
    %c8_i32_799 = arith.constant 8 : i32
    %837 = arith.muli %arg0, %c8_i32_799 : i32
    %c6_i32_800 = arith.constant 6 : i32
    %838 = arith.addi %837, %c6_i32_800 : i32
    %839 = arith.index_cast %838 : i32 to index
    %c1_801 = arith.constant 1 : index
    %840 = memref.load %arg1[%839, %c1_801] : memref<8x16xi32, #tpu.memory_space<smem>>
    %841 = arith.index_cast %840 : i32 to index
    %c0_802 = arith.constant 0 : index
    %842 = vector.load %arg2[%841, %c0_802] : memref<1000x128xf32, #tpu.memory_space<vmem>>, vector<1x128xf32>
    %c97 = arith.constant 97 : index
    %c0_803 = arith.constant 0 : index
    %843 = vector.load %arg14[%c97, %c0_803] : memref<128x384xf32, #tpu.memory_space<vmem>>, vector<1x128xf32>
    tpu.vector_store %arg14[%c97, %c0_803], %842 {strides = array<i32>} : memref<128x384xf32, #tpu.memory_space<vmem>>, vector<1x128xf32>,
    %c96_804 = arith.constant 96 : index
    %c128_805 = arith.constant 128 : index
    %844 = vector.load %arg14[%c96_804, %c128_805] : memref<128x384xf32, #tpu.memory_space<vmem>>, vector<1x128xf32>
    tpu.vector_store %arg14[%c96_804, %c128_805], %842 {strides = array<i32>} : memref<128x384xf32, #tpu.memory_space<vmem>>, vector<1x128xf32>,
    %c8_i32_806 = arith.constant 8 : i32
    %845 = arith.muli %arg0, %c8_i32_806 : i32
    %c6_i32_807 = arith.constant 6 : i32
    %846 = arith.addi %845, %c6_i32_807 : i32
    %847 = arith.index_cast %846 : i32 to index
    %c2_808 = arith.constant 2 : index
    %848 = memref.load %arg1[%847, %c2_808] : memref<8x16xi32, #tpu.memory_space<smem>>
    %849 = arith.index_cast %848 : i32 to index
    %c0_809 = arith.constant 0 : index
    %850 = vector.load %arg2[%849, %c0_809] : memref<1000x128xf32, #tpu.memory_space<vmem>>, vector<1x128xf32>
    %c98 = arith.constant 98 : index
    %c0_810 = arith.constant 0 : index
    %851 = vector.load %arg14[%c98, %c0_810] : memref<128x384xf32, #tpu.memory_space<vmem>>, vector<1x128xf32>
    tpu.vector_store %arg14[%c98, %c0_810], %850 {strides = array<i32>} : memref<128x384xf32, #tpu.memory_space<vmem>>, vector<1x128xf32>,
    %c97_811 = arith.constant 97 : index
    %c128_812 = arith.constant 128 : index
    %852 = vector.load %arg14[%c97_811, %c128_812] : memref<128x384xf32, #tpu.memory_space<vmem>>, vector<1x128xf32>
    tpu.vector_store %arg14[%c97_811, %c128_812], %850 {strides = array<i32>} : memref<128x384xf32, #tpu.memory_space<vmem>>, vector<1x128xf32>,
    %c96_813 = arith.constant 96 : index
    %c256_814 = arith.constant 256 : index
    %853 = vector.load %arg14[%c96_813, %c256_814] : memref<128x384xf32, #tpu.memory_space<vmem>>, vector<1x128xf32>
    tpu.vector_store %arg14[%c96_813, %c256_814], %850 {strides = array<i32>} : memref<128x384xf32, #tpu.memory_space<vmem>>, vector<1x128xf32>,
    %c8_i32_815 = arith.constant 8 : i32
    %854 = arith.muli %arg0, %c8_i32_815 : i32
    %c6_i32_816 = arith.constant 6 : i32
    %855 = arith.addi %854, %c6_i32_816 : i32
    %856 = arith.index_cast %855 : i32 to index
    %c3_817 = arith.constant 3 : index
    %857 = memref.load %arg1[%856, %c3_817] : memref<8x16xi32, #tpu.memory_space<smem>>
    %858 = arith.index_cast %857 : i32 to index
    %c0_818 = arith.constant 0 : index
    %859 = vector.load %arg2[%858, %c0_818] : memref<1000x128xf32, #tpu.memory_space<vmem>>, vector<1x128xf32>
    %c99 = arith.constant 99 : index
    %c0_819 = arith.constant 0 : index
    %860 = vector.load %arg14[%c99, %c0_819] : memref<128x384xf32, #tpu.memory_space<vmem>>, vector<1x128xf32>
    tpu.vector_store %arg14[%c99, %c0_819], %859 {strides = array<i32>} : memref<128x384xf32, #tpu.memory_space<vmem>>, vector<1x128xf32>,
    %c98_820 = arith.constant 98 : index
    %c128_821 = arith.constant 128 : index
    %861 = vector.load %arg14[%c98_820, %c128_821] : memref<128x384xf32, #tpu.memory_space<vmem>>, vector<1x128xf32>
    tpu.vector_store %arg14[%c98_820, %c128_821], %859 {strides = array<i32>} : memref<128x384xf32, #tpu.memory_space<vmem>>, vector<1x128xf32>,
    %c97_822 = arith.constant 97 : index
    %c256_823 = arith.constant 256 : index
    %862 = vector.load %arg14[%c97_822, %c256_823] : memref<128x384xf32, #tpu.memory_space<vmem>>, vector<1x128xf32>
    tpu.vector_store %arg14[%c97_822, %c256_823], %859 {strides = array<i32>} : memref<128x384xf32, #tpu.memory_space<vmem>>, vector<1x128xf32>,
    %c8_i32_824 = arith.constant 8 : i32
    %863 = arith.muli %arg0, %c8_i32_824 : i32
    %c6_i32_825 = arith.constant 6 : i32
    %864 = arith.addi %863, %c6_i32_825 : i32
    %865 = arith.index_cast %864 : i32 to index
    %c4_826 = arith.constant 4 : index
    %866 = memref.load %arg1[%865, %c4_826] : memref<8x16xi32, #tpu.memory_space<smem>>
    %867 = arith.index_cast %866 : i32 to index
    %c0_827 = arith.constant 0 : index
    %868 = vector.load %arg2[%867, %c0_827] : memref<1000x128xf32, #tpu.memory_space<vmem>>, vector<1x128xf32>
    %c100 = arith.constant 100 : index
    %c0_828 = arith.constant 0 : index
    %869 = vector.load %arg14[%c100, %c0_828] : memref<128x384xf32, #tpu.memory_space<vmem>>, vector<1x128xf32>
    tpu.vector_store %arg14[%c100, %c0_828], %868 {strides = array<i32>} : memref<128x384xf32, #tpu.memory_space<vmem>>, vector<1x128xf32>,
    %c99_829 = arith.constant 99 : index
    %c128_830 = arith.constant 128 : index
    %870 = vector.load %arg14[%c99_829, %c128_830] : memref<128x384xf32, #tpu.memory_space<vmem>>, vector<1x128xf32>
    tpu.vector_store %arg14[%c99_829, %c128_830], %868 {strides = array<i32>} : memref<128x384xf32, #tpu.memory_space<vmem>>, vector<1x128xf32>,
    %c98_831 = arith.constant 98 : index
    %c256_832 = arith.constant 256 : index
    %871 = vector.load %arg14[%c98_831, %c256_832] : memref<128x384xf32, #tpu.memory_space<vmem>>, vector<1x128xf32>
    tpu.vector_store %arg14[%c98_831, %c256_832], %868 {strides = array<i32>} : memref<128x384xf32, #tpu.memory_space<vmem>>, vector<1x128xf32>,
    %c8_i32_833 = arith.constant 8 : i32
    %872 = arith.muli %arg0, %c8_i32_833 : i32
    %c6_i32_834 = arith.constant 6 : i32
    %873 = arith.addi %872, %c6_i32_834 : i32
    %874 = arith.index_cast %873 : i32 to index
    %c5_835 = arith.constant 5 : index
    %875 = memref.load %arg1[%874, %c5_835] : memref<8x16xi32, #tpu.memory_space<smem>>
    %876 = arith.index_cast %875 : i32 to index
    %c0_836 = arith.constant 0 : index
    %877 = vector.load %arg2[%876, %c0_836] : memref<1000x128xf32, #tpu.memory_space<vmem>>, vector<1x128xf32>
    %c101 = arith.constant 101 : index
    %c0_837 = arith.constant 0 : index
    %878 = vector.load %arg14[%c101, %c0_837] : memref<128x384xf32, #tpu.memory_space<vmem>>, vector<1x128xf32>
    tpu.vector_store %arg14[%c101, %c0_837], %877 {strides = array<i32>} : memref<128x384xf32, #tpu.memory_space<vmem>>, vector<1x128xf32>,
    %c100_838 = arith.constant 100 : index
    %c128_839 = arith.constant 128 : index
    %879 = vector.load %arg14[%c100_838, %c128_839] : memref<128x384xf32, #tpu.memory_space<vmem>>, vector<1x128xf32>
    tpu.vector_store %arg14[%c100_838, %c128_839], %877 {strides = array<i32>} : memref<128x384xf32, #tpu.memory_space<vmem>>, vector<1x128xf32>,
    %c99_840 = arith.constant 99 : index
    %c256_841 = arith.constant 256 : index
    %880 = vector.load %arg14[%c99_840, %c256_841] : memref<128x384xf32, #tpu.memory_space<vmem>>, vector<1x128xf32>
    tpu.vector_store %arg14[%c99_840, %c256_841], %877 {strides = array<i32>} : memref<128x384xf32, #tpu.memory_space<vmem>>, vector<1x128xf32>,
    %c8_i32_842 = arith.constant 8 : i32
    %881 = arith.muli %arg0, %c8_i32_842 : i32
    %c6_i32_843 = arith.constant 6 : i32
    %882 = arith.addi %881, %c6_i32_843 : i32
    %883 = arith.index_cast %882 : i32 to index
    %c6_844 = arith.constant 6 : index
    %884 = memref.load %arg1[%883, %c6_844] : memref<8x16xi32, #tpu.memory_space<smem>>
    %885 = arith.index_cast %884 : i32 to index
    %c0_845 = arith.constant 0 : index
    %886 = vector.load %arg2[%885, %c0_845] : memref<1000x128xf32, #tpu.memory_space<vmem>>, vector<1x128xf32>
    %c102 = arith.constant 102 : index
    %c0_846 = arith.constant 0 : index
    %887 = vector.load %arg14[%c102, %c0_846] : memref<128x384xf32, #tpu.memory_space<vmem>>, vector<1x128xf32>
    tpu.vector_store %arg14[%c102, %c0_846], %886 {strides = array<i32>} : memref<128x384xf32, #tpu.memory_space<vmem>>, vector<1x128xf32>,
    %c101_847 = arith.constant 101 : index
    %c128_848 = arith.constant 128 : index
    %888 = vector.load %arg14[%c101_847, %c128_848] : memref<128x384xf32, #tpu.memory_space<vmem>>, vector<1x128xf32>
    tpu.vector_store %arg14[%c101_847, %c128_848], %886 {strides = array<i32>} : memref<128x384xf32, #tpu.memory_space<vmem>>, vector<1x128xf32>,
    %c100_849 = arith.constant 100 : index
    %c256_850 = arith.constant 256 : index
    %889 = vector.load %arg14[%c100_849, %c256_850] : memref<128x384xf32, #tpu.memory_space<vmem>>, vector<1x128xf32>
    tpu.vector_store %arg14[%c100_849, %c256_850], %886 {strides = array<i32>} : memref<128x384xf32, #tpu.memory_space<vmem>>, vector<1x128xf32>,
    %c8_i32_851 = arith.constant 8 : i32
    %890 = arith.muli %arg0, %c8_i32_851 : i32
    %c6_i32_852 = arith.constant 6 : i32
    %891 = arith.addi %890, %c6_i32_852 : i32
    %892 = arith.index_cast %891 : i32 to index
    %c7_853 = arith.constant 7 : index
    %893 = memref.load %arg1[%892, %c7_853] : memref<8x16xi32, #tpu.memory_space<smem>>
    %894 = arith.index_cast %893 : i32 to index
    %c0_854 = arith.constant 0 : index
    %895 = vector.load %arg2[%894, %c0_854] : memref<1000x128xf32, #tpu.memory_space<vmem>>, vector<1x128xf32>
    %c103 = arith.constant 103 : index
    %c0_855 = arith.constant 0 : index
    %896 = vector.load %arg14[%c103, %c0_855] : memref<128x384xf32, #tpu.memory_space<vmem>>, vector<1x128xf32>
    tpu.vector_store %arg14[%c103, %c0_855], %895 {strides = array<i32>} : memref<128x384xf32, #tpu.memory_space<vmem>>, vector<1x128xf32>,
    %c102_856 = arith.constant 102 : index
    %c128_857 = arith.constant 128 : index
    %897 = vector.load %arg14[%c102_856, %c128_857] : memref<128x384xf32, #tpu.memory_space<vmem>>, vector<1x128xf32>
    tpu.vector_store %arg14[%c102_856, %c128_857], %895 {strides = array<i32>} : memref<128x384xf32, #tpu.memory_space<vmem>>, vector<1x128xf32>,
    %c101_858 = arith.constant 101 : index
    %c256_859 = arith.constant 256 : index
    %898 = vector.load %arg14[%c101_858, %c256_859] : memref<128x384xf32, #tpu.memory_space<vmem>>, vector<1x128xf32>
    tpu.vector_store %arg14[%c101_858, %c256_859], %895 {strides = array<i32>} : memref<128x384xf32, #tpu.memory_space<vmem>>, vector<1x128xf32>,
    %c8_i32_860 = arith.constant 8 : i32
    %899 = arith.muli %arg0, %c8_i32_860 : i32
    %c6_i32_861 = arith.constant 6 : i32
    %900 = arith.addi %899, %c6_i32_861 : i32
    %901 = arith.index_cast %900 : i32 to index
    %c8_862 = arith.constant 8 : index
    %902 = memref.load %arg1[%901, %c8_862] : memref<8x16xi32, #tpu.memory_space<smem>>
    %903 = arith.index_cast %902 : i32 to index
    %c0_863 = arith.constant 0 : index
    %904 = vector.load %arg2[%903, %c0_863] : memref<1000x128xf32, #tpu.memory_space<vmem>>, vector<1x128xf32>
    %c104 = arith.constant 104 : index
    %c0_864 = arith.constant 0 : index
    %905 = vector.load %arg14[%c104, %c0_864] : memref<128x384xf32, #tpu.memory_space<vmem>>, vector<1x128xf32>
    tpu.vector_store %arg14[%c104, %c0_864], %904 {strides = array<i32>} : memref<128x384xf32, #tpu.memory_space<vmem>>, vector<1x128xf32>,
    %c103_865 = arith.constant 103 : index
    %c128_866 = arith.constant 128 : index
    %906 = vector.load %arg14[%c103_865, %c128_866] : memref<128x384xf32, #tpu.memory_space<vmem>>, vector<1x128xf32>
    tpu.vector_store %arg14[%c103_865, %c128_866], %904 {strides = array<i32>} : memref<128x384xf32, #tpu.memory_space<vmem>>, vector<1x128xf32>,
    %c102_867 = arith.constant 102 : index
    %c256_868 = arith.constant 256 : index
    %907 = vector.load %arg14[%c102_867, %c256_868] : memref<128x384xf32, #tpu.memory_space<vmem>>, vector<1x128xf32>
    tpu.vector_store %arg14[%c102_867, %c256_868], %904 {strides = array<i32>} : memref<128x384xf32, #tpu.memory_space<vmem>>, vector<1x128xf32>,
    %c8_i32_869 = arith.constant 8 : i32
    %908 = arith.muli %arg0, %c8_i32_869 : i32
    %c6_i32_870 = arith.constant 6 : i32
    %909 = arith.addi %908, %c6_i32_870 : i32
    %910 = arith.index_cast %909 : i32 to index
    %c9_871 = arith.constant 9 : index
    %911 = memref.load %arg1[%910, %c9_871] : memref<8x16xi32, #tpu.memory_space<smem>>
    %912 = arith.index_cast %911 : i32 to index
    %c0_872 = arith.constant 0 : index
    %913 = vector.load %arg2[%912, %c0_872] : memref<1000x128xf32, #tpu.memory_space<vmem>>, vector<1x128xf32>
    %c105 = arith.constant 105 : index
    %c0_873 = arith.constant 0 : index
    %914 = vector.load %arg14[%c105, %c0_873] : memref<128x384xf32, #tpu.memory_space<vmem>>, vector<1x128xf32>
    tpu.vector_store %arg14[%c105, %c0_873], %913 {strides = array<i32>} : memref<128x384xf32, #tpu.memory_space<vmem>>, vector<1x128xf32>,
    %c104_874 = arith.constant 104 : index
    %c128_875 = arith.constant 128 : index
    %915 = vector.load %arg14[%c104_874, %c128_875] : memref<128x384xf32, #tpu.memory_space<vmem>>, vector<1x128xf32>
    tpu.vector_store %arg14[%c104_874, %c128_875], %913 {strides = array<i32>} : memref<128x384xf32, #tpu.memory_space<vmem>>, vector<1x128xf32>,
    %c103_876 = arith.constant 103 : index
    %c256_877 = arith.constant 256 : index
    %916 = vector.load %arg14[%c103_876, %c256_877] : memref<128x384xf32, #tpu.memory_space<vmem>>, vector<1x128xf32>
    tpu.vector_store %arg14[%c103_876, %c256_877], %913 {strides = array<i32>} : memref<128x384xf32, #tpu.memory_space<vmem>>, vector<1x128xf32>,
    %c8_i32_878 = arith.constant 8 : i32
    %917 = arith.muli %arg0, %c8_i32_878 : i32
    %c6_i32_879 = arith.constant 6 : i32
    %918 = arith.addi %917, %c6_i32_879 : i32
    %919 = arith.index_cast %918 : i32 to index
    %c10_880 = arith.constant 10 : index
    %920 = memref.load %arg1[%919, %c10_880] : memref<8x16xi32, #tpu.memory_space<smem>>
    %921 = arith.index_cast %920 : i32 to index
    %c0_881 = arith.constant 0 : index
    %922 = vector.load %arg2[%921, %c0_881] : memref<1000x128xf32, #tpu.memory_space<vmem>>, vector<1x128xf32>
    %c106 = arith.constant 106 : index
    %c0_882 = arith.constant 0 : index
    %923 = vector.load %arg14[%c106, %c0_882] : memref<128x384xf32, #tpu.memory_space<vmem>>, vector<1x128xf32>
    tpu.vector_store %arg14[%c106, %c0_882], %922 {strides = array<i32>} : memref<128x384xf32, #tpu.memory_space<vmem>>, vector<1x128xf32>,
    %c105_883 = arith.constant 105 : index
    %c128_884 = arith.constant 128 : index
    %924 = vector.load %arg14[%c105_883, %c128_884] : memref<128x384xf32, #tpu.memory_space<vmem>>, vector<1x128xf32>
    tpu.vector_store %arg14[%c105_883, %c128_884], %922 {strides = array<i32>} : memref<128x384xf32, #tpu.memory_space<vmem>>, vector<1x128xf32>,
    %c104_885 = arith.constant 104 : index
    %c256_886 = arith.constant 256 : index
    %925 = vector.load %arg14[%c104_885, %c256_886] : memref<128x384xf32, #tpu.memory_space<vmem>>, vector<1x128xf32>
    tpu.vector_store %arg14[%c104_885, %c256_886], %922 {strides = array<i32>} : memref<128x384xf32, #tpu.memory_space<vmem>>, vector<1x128xf32>,
    %c8_i32_887 = arith.constant 8 : i32
    %926 = arith.muli %arg0, %c8_i32_887 : i32
    %c6_i32_888 = arith.constant 6 : i32
    %927 = arith.addi %926, %c6_i32_888 : i32
    %928 = arith.index_cast %927 : i32 to index
    %c11_889 = arith.constant 11 : index
    %929 = memref.load %arg1[%928, %c11_889] : memref<8x16xi32, #tpu.memory_space<smem>>
    %930 = arith.index_cast %929 : i32 to index
    %c0_890 = arith.constant 0 : index
    %931 = vector.load %arg2[%930, %c0_890] : memref<1000x128xf32, #tpu.memory_space<vmem>>, vector<1x128xf32>
    %c107 = arith.constant 107 : index
    %c0_891 = arith.constant 0 : index
    %932 = vector.load %arg14[%c107, %c0_891] : memref<128x384xf32, #tpu.memory_space<vmem>>, vector<1x128xf32>
    tpu.vector_store %arg14[%c107, %c0_891], %931 {strides = array<i32>} : memref<128x384xf32, #tpu.memory_space<vmem>>, vector<1x128xf32>,
    %c106_892 = arith.constant 106 : index
    %c128_893 = arith.constant 128 : index
    %933 = vector.load %arg14[%c106_892, %c128_893] : memref<128x384xf32, #tpu.memory_space<vmem>>, vector<1x128xf32>
    tpu.vector_store %arg14[%c106_892, %c128_893], %931 {strides = array<i32>} : memref<128x384xf32, #tpu.memory_space<vmem>>, vector<1x128xf32>,
    %c105_894 = arith.constant 105 : index
    %c256_895 = arith.constant 256 : index
    %934 = vector.load %arg14[%c105_894, %c256_895] : memref<128x384xf32, #tpu.memory_space<vmem>>, vector<1x128xf32>
    tpu.vector_store %arg14[%c105_894, %c256_895], %931 {strides = array<i32>} : memref<128x384xf32, #tpu.memory_space<vmem>>, vector<1x128xf32>,
    %c8_i32_896 = arith.constant 8 : i32
    %935 = arith.muli %arg0, %c8_i32_896 : i32
    %c6_i32_897 = arith.constant 6 : i32
    %936 = arith.addi %935, %c6_i32_897 : i32
    %937 = arith.index_cast %936 : i32 to index
    %c12_898 = arith.constant 12 : index
    %938 = memref.load %arg1[%937, %c12_898] : memref<8x16xi32, #tpu.memory_space<smem>>
    %939 = arith.index_cast %938 : i32 to index
    %c0_899 = arith.constant 0 : index
    %940 = vector.load %arg2[%939, %c0_899] : memref<1000x128xf32, #tpu.memory_space<vmem>>, vector<1x128xf32>
    %c108 = arith.constant 108 : index
    %c0_900 = arith.constant 0 : index
    %941 = vector.load %arg14[%c108, %c0_900] : memref<128x384xf32, #tpu.memory_space<vmem>>, vector<1x128xf32>
    tpu.vector_store %arg14[%c108, %c0_900], %940 {strides = array<i32>} : memref<128x384xf32, #tpu.memory_space<vmem>>, vector<1x128xf32>,
    %c107_901 = arith.constant 107 : index
    %c128_902 = arith.constant 128 : index
    %942 = vector.load %arg14[%c107_901, %c128_902] : memref<128x384xf32, #tpu.memory_space<vmem>>, vector<1x128xf32>
    tpu.vector_store %arg14[%c107_901, %c128_902], %940 {strides = array<i32>} : memref<128x384xf32, #tpu.memory_space<vmem>>, vector<1x128xf32>,
    %c106_903 = arith.constant 106 : index
    %c256_904 = arith.constant 256 : index
    %943 = vector.load %arg14[%c106_903, %c256_904] : memref<128x384xf32, #tpu.memory_space<vmem>>, vector<1x128xf32>
    tpu.vector_store %arg14[%c106_903, %c256_904], %940 {strides = array<i32>} : memref<128x384xf32, #tpu.memory_space<vmem>>, vector<1x128xf32>,
    %c8_i32_905 = arith.constant 8 : i32
    %944 = arith.muli %arg0, %c8_i32_905 : i32
    %c6_i32_906 = arith.constant 6 : i32
    %945 = arith.addi %944, %c6_i32_906 : i32
    %946 = arith.index_cast %945 : i32 to index
    %c13_907 = arith.constant 13 : index
    %947 = memref.load %arg1[%946, %c13_907] : memref<8x16xi32, #tpu.memory_space<smem>>
    %948 = arith.index_cast %947 : i32 to index
    %c0_908 = arith.constant 0 : index
    %949 = vector.load %arg2[%948, %c0_908] : memref<1000x128xf32, #tpu.memory_space<vmem>>, vector<1x128xf32>
    %c109 = arith.constant 109 : index
    %c0_909 = arith.constant 0 : index
    %950 = vector.load %arg14[%c109, %c0_909] : memref<128x384xf32, #tpu.memory_space<vmem>>, vector<1x128xf32>
    tpu.vector_store %arg14[%c109, %c0_909], %949 {strides = array<i32>} : memref<128x384xf32, #tpu.memory_space<vmem>>, vector<1x128xf32>,
    %c108_910 = arith.constant 108 : index
    %c128_911 = arith.constant 128 : index
    %951 = vector.load %arg14[%c108_910, %c128_911] : memref<128x384xf32, #tpu.memory_space<vmem>>, vector<1x128xf32>
    tpu.vector_store %arg14[%c108_910, %c128_911], %949 {strides = array<i32>} : memref<128x384xf32, #tpu.memory_space<vmem>>, vector<1x128xf32>,
    %c107_912 = arith.constant 107 : index
    %c256_913 = arith.constant 256 : index
    %952 = vector.load %arg14[%c107_912, %c256_913] : memref<128x384xf32, #tpu.memory_space<vmem>>, vector<1x128xf32>
    tpu.vector_store %arg14[%c107_912, %c256_913], %949 {strides = array<i32>} : memref<128x384xf32, #tpu.memory_space<vmem>>, vector<1x128xf32>,
    %c8_i32_914 = arith.constant 8 : i32
    %953 = arith.muli %arg0, %c8_i32_914 : i32
    %c6_i32_915 = arith.constant 6 : i32
    %954 = arith.addi %953, %c6_i32_915 : i32
    %955 = arith.index_cast %954 : i32 to index
    %c14_916 = arith.constant 14 : index
    %956 = memref.load %arg1[%955, %c14_916] : memref<8x16xi32, #tpu.memory_space<smem>>
    %957 = arith.index_cast %956 : i32 to index
    %c0_917 = arith.constant 0 : index
    %958 = vector.load %arg2[%957, %c0_917] : memref<1000x128xf32, #tpu.memory_space<vmem>>, vector<1x128xf32>
    %c109_918 = arith.constant 109 : index
    %c128_919 = arith.constant 128 : index
    %959 = vector.load %arg14[%c109_918, %c128_919] : memref<128x384xf32, #tpu.memory_space<vmem>>, vector<1x128xf32>
    tpu.vector_store %arg14[%c109_918, %c128_919], %958 {strides = array<i32>} : memref<128x384xf32, #tpu.memory_space<vmem>>, vector<1x128xf32>,
    %c108_920 = arith.constant 108 : index
    %c256_921 = arith.constant 256 : index
    %960 = vector.load %arg14[%c108_920, %c256_921] : memref<128x384xf32, #tpu.memory_space<vmem>>, vector<1x128xf32>
    tpu.vector_store %arg14[%c108_920, %c256_921], %958 {strides = array<i32>} : memref<128x384xf32, #tpu.memory_space<vmem>>, vector<1x128xf32>,
    %c8_i32_922 = arith.constant 8 : i32
    %961 = arith.muli %arg0, %c8_i32_922 : i32
    %c6_i32_923 = arith.constant 6 : i32
    %962 = arith.addi %961, %c6_i32_923 : i32
    %963 = arith.index_cast %962 : i32 to index
    %c15_924 = arith.constant 15 : index
    %964 = memref.load %arg1[%963, %c15_924] : memref<8x16xi32, #tpu.memory_space<smem>>
    %965 = arith.index_cast %964 : i32 to index
    %c0_925 = arith.constant 0 : index
    %966 = vector.load %arg2[%965, %c0_925] : memref<1000x128xf32, #tpu.memory_space<vmem>>, vector<1x128xf32>
    %c109_926 = arith.constant 109 : index
    %c256_927 = arith.constant 256 : index
    %967 = vector.load %arg14[%c109_926, %c256_927] : memref<128x384xf32, #tpu.memory_space<vmem>>, vector<1x128xf32>
    tpu.vector_store %arg14[%c109_926, %c256_927], %966 {strides = array<i32>} : memref<128x384xf32, #tpu.memory_space<vmem>>, vector<1x128xf32>,
    %c8_i32_928 = arith.constant 8 : i32
    %968 = arith.muli %arg0, %c8_i32_928 : i32
    %c7_i32 = arith.constant 7 : i32
    %969 = arith.addi %968, %c7_i32 : i32
    %970 = arith.index_cast %969 : i32 to index
    %c0_929 = arith.constant 0 : index
    %971 = memref.load %arg1[%970, %c0_929] : memref<8x16xi32, #tpu.memory_space<smem>>
    %972 = arith.index_cast %971 : i32 to index
    %c0_930 = arith.constant 0 : index
    %973 = vector.load %arg2[%972, %c0_930] : memref<1000x128xf32, #tpu.memory_space<vmem>>, vector<1x128xf32>
    %c112 = arith.constant 112 : index
    %c0_931 = arith.constant 0 : index
    %974 = vector.load %arg14[%c112, %c0_931] : memref<128x384xf32, #tpu.memory_space<vmem>>, vector<1x128xf32>
    tpu.vector_store %arg14[%c112, %c0_931], %973 {strides = array<i32>} : memref<128x384xf32, #tpu.memory_space<vmem>>, vector<1x128xf32>,
    %c8_i32_932 = arith.constant 8 : i32
    %975 = arith.muli %arg0, %c8_i32_932 : i32
    %c7_i32_933 = arith.constant 7 : i32
    %976 = arith.addi %975, %c7_i32_933 : i32
    %977 = arith.index_cast %976 : i32 to index
    %c1_934 = arith.constant 1 : index
    %978 = memref.load %arg1[%977, %c1_934] : memref<8x16xi32, #tpu.memory_space<smem>>
    %979 = arith.index_cast %978 : i32 to index
    %c0_935 = arith.constant 0 : index
    %980 = vector.load %arg2[%979, %c0_935] : memref<1000x128xf32, #tpu.memory_space<vmem>>, vector<1x128xf32>
    %c113 = arith.constant 113 : index
    %c0_936 = arith.constant 0 : index
    %981 = vector.load %arg14[%c113, %c0_936] : memref<128x384xf32, #tpu.memory_space<vmem>>, vector<1x128xf32>
    tpu.vector_store %arg14[%c113, %c0_936], %980 {strides = array<i32>} : memref<128x384xf32, #tpu.memory_space<vmem>>, vector<1x128xf32>,
    %c112_937 = arith.constant 112 : index
    %c128_938 = arith.constant 128 : index
    %982 = vector.load %arg14[%c112_937, %c128_938] : memref<128x384xf32, #tpu.memory_space<vmem>>, vector<1x128xf32>
    tpu.vector_store %arg14[%c112_937, %c128_938], %980 {strides = array<i32>} : memref<128x384xf32, #tpu.memory_space<vmem>>, vector<1x128xf32>,
    %c8_i32_939 = arith.constant 8 : i32
    %983 = arith.muli %arg0, %c8_i32_939 : i32
    %c7_i32_940 = arith.constant 7 : i32
    %984 = arith.addi %983, %c7_i32_940 : i32
    %985 = arith.index_cast %984 : i32 to index
    %c2_941 = arith.constant 2 : index
    %986 = memref.load %arg1[%985, %c2_941] : memref<8x16xi32, #tpu.memory_space<smem>>
    %987 = arith.index_cast %986 : i32 to index
    %c0_942 = arith.constant 0 : index
    %988 = vector.load %arg2[%987, %c0_942] : memref<1000x128xf32, #tpu.memory_space<vmem>>, vector<1x128xf32>
    %c114 = arith.constant 114 : index
    %c0_943 = arith.constant 0 : index
    %989 = vector.load %arg14[%c114, %c0_943] : memref<128x384xf32, #tpu.memory_space<vmem>>, vector<1x128xf32>
    tpu.vector_store %arg14[%c114, %c0_943], %988 {strides = array<i32>} : memref<128x384xf32, #tpu.memory_space<vmem>>, vector<1x128xf32>,
    %c113_944 = arith.constant 113 : index
    %c128_945 = arith.constant 128 : index
    %990 = vector.load %arg14[%c113_944, %c128_945] : memref<128x384xf32, #tpu.memory_space<vmem>>, vector<1x128xf32>
    tpu.vector_store %arg14[%c113_944, %c128_945], %988 {strides = array<i32>} : memref<128x384xf32, #tpu.memory_space<vmem>>, vector<1x128xf32>,
    %c112_946 = arith.constant 112 : index
    %c256_947 = arith.constant 256 : index
    %991 = vector.load %arg14[%c112_946, %c256_947] : memref<128x384xf32, #tpu.memory_space<vmem>>, vector<1x128xf32>
    tpu.vector_store %arg14[%c112_946, %c256_947], %988 {strides = array<i32>} : memref<128x384xf32, #tpu.memory_space<vmem>>, vector<1x128xf32>,
    %c8_i32_948 = arith.constant 8 : i32
    %992 = arith.muli %arg0, %c8_i32_948 : i32
    %c7_i32_949 = arith.constant 7 : i32
    %993 = arith.addi %992, %c7_i32_949 : i32
    %994 = arith.index_cast %993 : i32 to index
    %c3_950 = arith.constant 3 : index
    %995 = memref.load %arg1[%994, %c3_950] : memref<8x16xi32, #tpu.memory_space<smem>>
    %996 = arith.index_cast %995 : i32 to index
    %c0_951 = arith.constant 0 : index
    %997 = vector.load %arg2[%996, %c0_951] : memref<1000x128xf32, #tpu.memory_space<vmem>>, vector<1x128xf32>
    %c115 = arith.constant 115 : index
    %c0_952 = arith.constant 0 : index
    %998 = vector.load %arg14[%c115, %c0_952] : memref<128x384xf32, #tpu.memory_space<vmem>>, vector<1x128xf32>
    tpu.vector_store %arg14[%c115, %c0_952], %997 {strides = array<i32>} : memref<128x384xf32, #tpu.memory_space<vmem>>, vector<1x128xf32>,
    %c114_953 = arith.constant 114 : index
    %c128_954 = arith.constant 128 : index
    %999 = vector.load %arg14[%c114_953, %c128_954] : memref<128x384xf32, #tpu.memory_space<vmem>>, vector<1x128xf32>
    tpu.vector_store %arg14[%c114_953, %c128_954], %997 {strides = array<i32>} : memref<128x384xf32, #tpu.memory_space<vmem>>, vector<1x128xf32>,
    %c113_955 = arith.constant 113 : index
    %c256_956 = arith.constant 256 : index
    %1000 = vector.load %arg14[%c113_955, %c256_956] : memref<128x384xf32, #tpu.memory_space<vmem>>, vector<1x128xf32>
    tpu.vector_store %arg14[%c113_955, %c256_956], %997 {strides = array<i32>} : memref<128x384xf32, #tpu.memory_space<vmem>>, vector<1x128xf32>,
    %c8_i32_957 = arith.constant 8 : i32
    %1001 = arith.muli %arg0, %c8_i32_957 : i32
    %c7_i32_958 = arith.constant 7 : i32
    %1002 = arith.addi %1001, %c7_i32_958 : i32
    %1003 = arith.index_cast %1002 : i32 to index
    %c4_959 = arith.constant 4 : index
    %1004 = memref.load %arg1[%1003, %c4_959] : memref<8x16xi32, #tpu.memory_space<smem>>
    %1005 = arith.index_cast %1004 : i32 to index
    %c0_960 = arith.constant 0 : index
    %1006 = vector.load %arg2[%1005, %c0_960] : memref<1000x128xf32, #tpu.memory_space<vmem>>, vector<1x128xf32>
    %c116 = arith.constant 116 : index
    %c0_961 = arith.constant 0 : index
    %1007 = vector.load %arg14[%c116, %c0_961] : memref<128x384xf32, #tpu.memory_space<vmem>>, vector<1x128xf32>
    tpu.vector_store %arg14[%c116, %c0_961], %1006 {strides = array<i32>} : memref<128x384xf32, #tpu.memory_space<vmem>>, vector<1x128xf32>,
    %c115_962 = arith.constant 115 : index
    %c128_963 = arith.constant 128 : index
    %1008 = vector.load %arg14[%c115_962, %c128_963] : memref<128x384xf32, #tpu.memory_space<vmem>>, vector<1x128xf32>
    tpu.vector_store %arg14[%c115_962, %c128_963], %1006 {strides = array<i32>} : memref<128x384xf32, #tpu.memory_space<vmem>>, vector<1x128xf32>,
    %c114_964 = arith.constant 114 : index
    %c256_965 = arith.constant 256 : index
    %1009 = vector.load %arg14[%c114_964, %c256_965] : memref<128x384xf32, #tpu.memory_space<vmem>>, vector<1x128xf32>
    tpu.vector_store %arg14[%c114_964, %c256_965], %1006 {strides = array<i32>} : memref<128x384xf32, #tpu.memory_space<vmem>>, vector<1x128xf32>,
    %c8_i32_966 = arith.constant 8 : i32
    %1010 = arith.muli %arg0, %c8_i32_966 : i32
    %c7_i32_967 = arith.constant 7 : i32
    %1011 = arith.addi %1010, %c7_i32_967 : i32
    %1012 = arith.index_cast %1011 : i32 to index
    %c5_968 = arith.constant 5 : index
    %1013 = memref.load %arg1[%1012, %c5_968] : memref<8x16xi32, #tpu.memory_space<smem>>
    %1014 = arith.index_cast %1013 : i32 to index
    %c0_969 = arith.constant 0 : index
    %1015 = vector.load %arg2[%1014, %c0_969] : memref<1000x128xf32, #tpu.memory_space<vmem>>, vector<1x128xf32>
    %c117 = arith.constant 117 : index
    %c0_970 = arith.constant 0 : index
    %1016 = vector.load %arg14[%c117, %c0_970] : memref<128x384xf32, #tpu.memory_space<vmem>>, vector<1x128xf32>
    tpu.vector_store %arg14[%c117, %c0_970], %1015 {strides = array<i32>} : memref<128x384xf32, #tpu.memory_space<vmem>>, vector<1x128xf32>,
    %c116_971 = arith.constant 116 : index
    %c128_972 = arith.constant 128 : index
    %1017 = vector.load %arg14[%c116_971, %c128_972] : memref<128x384xf32, #tpu.memory_space<vmem>>, vector<1x128xf32>
    tpu.vector_store %arg14[%c116_971, %c128_972], %1015 {strides = array<i32>} : memref<128x384xf32, #tpu.memory_space<vmem>>, vector<1x128xf32>,
    %c115_973 = arith.constant 115 : index
    %c256_974 = arith.constant 256 : index
    %1018 = vector.load %arg14[%c115_973, %c256_974] : memref<128x384xf32, #tpu.memory_space<vmem>>, vector<1x128xf32>
    tpu.vector_store %arg14[%c115_973, %c256_974], %1015 {strides = array<i32>} : memref<128x384xf32, #tpu.memory_space<vmem>>, vector<1x128xf32>,
    %c8_i32_975 = arith.constant 8 : i32
    %1019 = arith.muli %arg0, %c8_i32_975 : i32
    %c7_i32_976 = arith.constant 7 : i32
    %1020 = arith.addi %1019, %c7_i32_976 : i32
    %1021 = arith.index_cast %1020 : i32 to index
    %c6_977 = arith.constant 6 : index
    %1022 = memref.load %arg1[%1021, %c6_977] : memref<8x16xi32, #tpu.memory_space<smem>>
    %1023 = arith.index_cast %1022 : i32 to index
    %c0_978 = arith.constant 0 : index
    %1024 = vector.load %arg2[%1023, %c0_978] : memref<1000x128xf32, #tpu.memory_space<vmem>>, vector<1x128xf32>
    %c118 = arith.constant 118 : index
    %c0_979 = arith.constant 0 : index
    %1025 = vector.load %arg14[%c118, %c0_979] : memref<128x384xf32, #tpu.memory_space<vmem>>, vector<1x128xf32>
    tpu.vector_store %arg14[%c118, %c0_979], %1024 {strides = array<i32>} : memref<128x384xf32, #tpu.memory_space<vmem>>, vector<1x128xf32>,
    %c117_980 = arith.constant 117 : index
    %c128_981 = arith.constant 128 : index
    %1026 = vector.load %arg14[%c117_980, %c128_981] : memref<128x384xf32, #tpu.memory_space<vmem>>, vector<1x128xf32>
    tpu.vector_store %arg14[%c117_980, %c128_981], %1024 {strides = array<i32>} : memref<128x384xf32, #tpu.memory_space<vmem>>, vector<1x128xf32>,
    %c116_982 = arith.constant 116 : index
    %c256_983 = arith.constant 256 : index
    %1027 = vector.load %arg14[%c116_982, %c256_983] : memref<128x384xf32, #tpu.memory_space<vmem>>, vector<1x128xf32>
    tpu.vector_store %arg14[%c116_982, %c256_983], %1024 {strides = array<i32>} : memref<128x384xf32, #tpu.memory_space<vmem>>, vector<1x128xf32>,
    %c8_i32_984 = arith.constant 8 : i32
    %1028 = arith.muli %arg0, %c8_i32_984 : i32
    %c7_i32_985 = arith.constant 7 : i32
    %1029 = arith.addi %1028, %c7_i32_985 : i32
    %1030 = arith.index_cast %1029 : i32 to index
    %c7_986 = arith.constant 7 : index
    %1031 = memref.load %arg1[%1030, %c7_986] : memref<8x16xi32, #tpu.memory_space<smem>>
    %1032 = arith.index_cast %1031 : i32 to index
    %c0_987 = arith.constant 0 : index
    %1033 = vector.load %arg2[%1032, %c0_987] : memref<1000x128xf32, #tpu.memory_space<vmem>>, vector<1x128xf32>
    %c119 = arith.constant 119 : index
    %c0_988 = arith.constant 0 : index
    %1034 = vector.load %arg14[%c119, %c0_988] : memref<128x384xf32, #tpu.memory_space<vmem>>, vector<1x128xf32>
    tpu.vector_store %arg14[%c119, %c0_988], %1033 {strides = array<i32>} : memref<128x384xf32, #tpu.memory_space<vmem>>, vector<1x128xf32>,
    %c118_989 = arith.constant 118 : index
    %c128_990 = arith.constant 128 : index
    %1035 = vector.load %arg14[%c118_989, %c128_990] : memref<128x384xf32, #tpu.memory_space<vmem>>, vector<1x128xf32>
    tpu.vector_store %arg14[%c118_989, %c128_990], %1033 {strides = array<i32>} : memref<128x384xf32, #tpu.memory_space<vmem>>, vector<1x128xf32>,
    %c117_991 = arith.constant 117 : index
    %c256_992 = arith.constant 256 : index
    %1036 = vector.load %arg14[%c117_991, %c256_992] : memref<128x384xf32, #tpu.memory_space<vmem>>, vector<1x128xf32>
    tpu.vector_store %arg14[%c117_991, %c256_992], %1033 {strides = array<i32>} : memref<128x384xf32, #tpu.memory_space<vmem>>, vector<1x128xf32>,
    %c8_i32_993 = arith.constant 8 : i32
    %1037 = arith.muli %arg0, %c8_i32_993 : i32
    %c7_i32_994 = arith.constant 7 : i32
    %1038 = arith.addi %1037, %c7_i32_994 : i32
    %1039 = arith.index_cast %1038 : i32 to index
    %c8_995 = arith.constant 8 : index
    %1040 = memref.load %arg1[%1039, %c8_995] : memref<8x16xi32, #tpu.memory_space<smem>>
    %1041 = arith.index_cast %1040 : i32 to index
    %c0_996 = arith.constant 0 : index
    %1042 = vector.load %arg2[%1041, %c0_996] : memref<1000x128xf32, #tpu.memory_space<vmem>>, vector<1x128xf32>
    %c120 = arith.constant 120 : index
    %c0_997 = arith.constant 0 : index
    %1043 = vector.load %arg14[%c120, %c0_997] : memref<128x384xf32, #tpu.memory_space<vmem>>, vector<1x128xf32>
    tpu.vector_store %arg14[%c120, %c0_997], %1042 {strides = array<i32>} : memref<128x384xf32, #tpu.memory_space<vmem>>, vector<1x128xf32>,
    %c119_998 = arith.constant 119 : index
    %c128_999 = arith.constant 128 : index
    %1044 = vector.load %arg14[%c119_998, %c128_999] : memref<128x384xf32, #tpu.memory_space<vmem>>, vector<1x128xf32>
    tpu.vector_store %arg14[%c119_998, %c128_999], %1042 {strides = array<i32>} : memref<128x384xf32, #tpu.memory_space<vmem>>, vector<1x128xf32>,
    %c118_1000 = arith.constant 118 : index
    %c256_1001 = arith.constant 256 : index
    %1045 = vector.load %arg14[%c118_1000, %c256_1001] : memref<128x384xf32, #tpu.memory_space<vmem>>, vector<1x128xf32>
    tpu.vector_store %arg14[%c118_1000, %c256_1001], %1042 {strides = array<i32>} : memref<128x384xf32, #tpu.memory_space<vmem>>, vector<1x128xf32>,
    %c8_i32_1002 = arith.constant 8 : i32
    %1046 = arith.muli %arg0, %c8_i32_1002 : i32
    %c7_i32_1003 = arith.constant 7 : i32
    %1047 = arith.addi %1046, %c7_i32_1003 : i32
    %1048 = arith.index_cast %1047 : i32 to index
    %c9_1004 = arith.constant 9 : index
    %1049 = memref.load %arg1[%1048, %c9_1004] : memref<8x16xi32, #tpu.memory_space<smem>>
    %1050 = arith.index_cast %1049 : i32 to index
    %c0_1005 = arith.constant 0 : index
    %1051 = vector.load %arg2[%1050, %c0_1005] : memref<1000x128xf32, #tpu.memory_space<vmem>>, vector<1x128xf32>
    %c121 = arith.constant 121 : index
    %c0_1006 = arith.constant 0 : index
    %1052 = vector.load %arg14[%c121, %c0_1006] : memref<128x384xf32, #tpu.memory_space<vmem>>, vector<1x128xf32>
    tpu.vector_store %arg14[%c121, %c0_1006], %1051 {strides = array<i32>} : memref<128x384xf32, #tpu.memory_space<vmem>>, vector<1x128xf32>,
    %c120_1007 = arith.constant 120 : index
    %c128_1008 = arith.constant 128 : index
    %1053 = vector.load %arg14[%c120_1007, %c128_1008] : memref<128x384xf32, #tpu.memory_space<vmem>>, vector<1x128xf32>
    tpu.vector_store %arg14[%c120_1007, %c128_1008], %1051 {strides = array<i32>} : memref<128x384xf32, #tpu.memory_space<vmem>>, vector<1x128xf32>,
    %c119_1009 = arith.constant 119 : index
    %c256_1010 = arith.constant 256 : index
    %1054 = vector.load %arg14[%c119_1009, %c256_1010] : memref<128x384xf32, #tpu.memory_space<vmem>>, vector<1x128xf32>
    tpu.vector_store %arg14[%c119_1009, %c256_1010], %1051 {strides = array<i32>} : memref<128x384xf32, #tpu.memory_space<vmem>>, vector<1x128xf32>,
    %c8_i32_1011 = arith.constant 8 : i32
    %1055 = arith.muli %arg0, %c8_i32_1011 : i32
    %c7_i32_1012 = arith.constant 7 : i32
    %1056 = arith.addi %1055, %c7_i32_1012 : i32
    %1057 = arith.index_cast %1056 : i32 to index
    %c10_1013 = arith.constant 10 : index
    %1058 = memref.load %arg1[%1057, %c10_1013] : memref<8x16xi32, #tpu.memory_space<smem>>
    %1059 = arith.index_cast %1058 : i32 to index
    %c0_1014 = arith.constant 0 : index
    %1060 = vector.load %arg2[%1059, %c0_1014] : memref<1000x128xf32, #tpu.memory_space<vmem>>, vector<1x128xf32>
    %c122 = arith.constant 122 : index
    %c0_1015 = arith.constant 0 : index
    %1061 = vector.load %arg14[%c122, %c0_1015] : memref<128x384xf32, #tpu.memory_space<vmem>>, vector<1x128xf32>
    tpu.vector_store %arg14[%c122, %c0_1015], %1060 {strides = array<i32>} : memref<128x384xf32, #tpu.memory_space<vmem>>, vector<1x128xf32>,
    %c121_1016 = arith.constant 121 : index
    %c128_1017 = arith.constant 128 : index
    %1062 = vector.load %arg14[%c121_1016, %c128_1017] : memref<128x384xf32, #tpu.memory_space<vmem>>, vector<1x128xf32>
    tpu.vector_store %arg14[%c121_1016, %c128_1017], %1060 {strides = array<i32>} : memref<128x384xf32, #tpu.memory_space<vmem>>, vector<1x128xf32>,
    %c120_1018 = arith.constant 120 : index
    %c256_1019 = arith.constant 256 : index
    %1063 = vector.load %arg14[%c120_1018, %c256_1019] : memref<128x384xf32, #tpu.memory_space<vmem>>, vector<1x128xf32>
    tpu.vector_store %arg14[%c120_1018, %c256_1019], %1060 {strides = array<i32>} : memref<128x384xf32, #tpu.memory_space<vmem>>, vector<1x128xf32>,
    %c8_i32_1020 = arith.constant 8 : i32
    %1064 = arith.muli %arg0, %c8_i32_1020 : i32
    %c7_i32_1021 = arith.constant 7 : i32
    %1065 = arith.addi %1064, %c7_i32_1021 : i32
    %1066 = arith.index_cast %1065 : i32 to index
    %c11_1022 = arith.constant 11 : index
    %1067 = memref.load %arg1[%1066, %c11_1022] : memref<8x16xi32, #tpu.memory_space<smem>>
    %1068 = arith.index_cast %1067 : i32 to index
    %c0_1023 = arith.constant 0 : index
    %1069 = vector.load %arg2[%1068, %c0_1023] : memref<1000x128xf32, #tpu.memory_space<vmem>>, vector<1x128xf32>
    %c123 = arith.constant 123 : index
    %c0_1024 = arith.constant 0 : index
    %1070 = vector.load %arg14[%c123, %c0_1024] : memref<128x384xf32, #tpu.memory_space<vmem>>, vector<1x128xf32>
    tpu.vector_store %arg14[%c123, %c0_1024], %1069 {strides = array<i32>} : memref<128x384xf32, #tpu.memory_space<vmem>>, vector<1x128xf32>,
    %c122_1025 = arith.constant 122 : index
    %c128_1026 = arith.constant 128 : index
    %1071 = vector.load %arg14[%c122_1025, %c128_1026] : memref<128x384xf32, #tpu.memory_space<vmem>>, vector<1x128xf32>
    tpu.vector_store %arg14[%c122_1025, %c128_1026], %1069 {strides = array<i32>} : memref<128x384xf32, #tpu.memory_space<vmem>>, vector<1x128xf32>,
    %c121_1027 = arith.constant 121 : index
    %c256_1028 = arith.constant 256 : index
    %1072 = vector.load %arg14[%c121_1027, %c256_1028] : memref<128x384xf32, #tpu.memory_space<vmem>>, vector<1x128xf32>
    tpu.vector_store %arg14[%c121_1027, %c256_1028], %1069 {strides = array<i32>} : memref<128x384xf32, #tpu.memory_space<vmem>>, vector<1x128xf32>,
    %c8_i32_1029 = arith.constant 8 : i32
    %1073 = arith.muli %arg0, %c8_i32_1029 : i32
    %c7_i32_1030 = arith.constant 7 : i32
    %1074 = arith.addi %1073, %c7_i32_1030 : i32
    %1075 = arith.index_cast %1074 : i32 to index
    %c12_1031 = arith.constant 12 : index
    %1076 = memref.load %arg1[%1075, %c12_1031] : memref<8x16xi32, #tpu.memory_space<smem>>
    %1077 = arith.index_cast %1076 : i32 to index
    %c0_1032 = arith.constant 0 : index
    %1078 = vector.load %arg2[%1077, %c0_1032] : memref<1000x128xf32, #tpu.memory_space<vmem>>, vector<1x128xf32>
    %c124 = arith.constant 124 : index
    %c0_1033 = arith.constant 0 : index
    %1079 = vector.load %arg14[%c124, %c0_1033] : memref<128x384xf32, #tpu.memory_space<vmem>>, vector<1x128xf32>
    tpu.vector_store %arg14[%c124, %c0_1033], %1078 {strides = array<i32>} : memref<128x384xf32, #tpu.memory_space<vmem>>, vector<1x128xf32>,
    %c123_1034 = arith.constant 123 : index
    %c128_1035 = arith.constant 128 : index
    %1080 = vector.load %arg14[%c123_1034, %c128_1035] : memref<128x384xf32, #tpu.memory_space<vmem>>, vector<1x128xf32>
    tpu.vector_store %arg14[%c123_1034, %c128_1035], %1078 {strides = array<i32>} : memref<128x384xf32, #tpu.memory_space<vmem>>, vector<1x128xf32>,
    %c122_1036 = arith.constant 122 : index
    %c256_1037 = arith.constant 256 : index
    %1081 = vector.load %arg14[%c122_1036, %c256_1037] : memref<128x384xf32, #tpu.memory_space<vmem>>, vector<1x128xf32>
    tpu.vector_store %arg14[%c122_1036, %c256_1037], %1078 {strides = array<i32>} : memref<128x384xf32, #tpu.memory_space<vmem>>, vector<1x128xf32>,
    %c8_i32_1038 = arith.constant 8 : i32
    %1082 = arith.muli %arg0, %c8_i32_1038 : i32
    %c7_i32_1039 = arith.constant 7 : i32
    %1083 = arith.addi %1082, %c7_i32_1039 : i32
    %1084 = arith.index_cast %1083 : i32 to index
    %c13_1040 = arith.constant 13 : index
    %1085 = memref.load %arg1[%1084, %c13_1040] : memref<8x16xi32, #tpu.memory_space<smem>>
    %1086 = arith.index_cast %1085 : i32 to index
    %c0_1041 = arith.constant 0 : index
    %1087 = vector.load %arg2[%1086, %c0_1041] : memref<1000x128xf32, #tpu.memory_space<vmem>>, vector<1x128xf32>
    %c125 = arith.constant 125 : index
    %c0_1042 = arith.constant 0 : index
    %1088 = vector.load %arg14[%c125, %c0_1042] : memref<128x384xf32, #tpu.memory_space<vmem>>, vector<1x128xf32>
    tpu.vector_store %arg14[%c125, %c0_1042], %1087 {strides = array<i32>} : memref<128x384xf32, #tpu.memory_space<vmem>>, vector<1x128xf32>,
    %c124_1043 = arith.constant 124 : index
    %c128_1044 = arith.constant 128 : index
    %1089 = vector.load %arg14[%c124_1043, %c128_1044] : memref<128x384xf32, #tpu.memory_space<vmem>>, vector<1x128xf32>
    tpu.vector_store %arg14[%c124_1043, %c128_1044], %1087 {strides = array<i32>} : memref<128x384xf32, #tpu.memory_space<vmem>>, vector<1x128xf32>,
    %c123_1045 = arith.constant 123 : index
    %c256_1046 = arith.constant 256 : index
    %1090 = vector.load %arg14[%c123_1045, %c256_1046] : memref<128x384xf32, #tpu.memory_space<vmem>>, vector<1x128xf32>
    tpu.vector_store %arg14[%c123_1045, %c256_1046], %1087 {strides = array<i32>} : memref<128x384xf32, #tpu.memory_space<vmem>>, vector<1x128xf32>,
    %c8_i32_1047 = arith.constant 8 : i32
    %1091 = arith.muli %arg0, %c8_i32_1047 : i32
    %c7_i32_1048 = arith.constant 7 : i32
    %1092 = arith.addi %1091, %c7_i32_1048 : i32
    %1093 = arith.index_cast %1092 : i32 to index
    %c14_1049 = arith.constant 14 : index
    %1094 = memref.load %arg1[%1093, %c14_1049] : memref<8x16xi32, #tpu.memory_space<smem>>
    %1095 = arith.index_cast %1094 : i32 to index
    %c0_1050 = arith.constant 0 : index
    %1096 = vector.load %arg2[%1095, %c0_1050] : memref<1000x128xf32, #tpu.memory_space<vmem>>, vector<1x128xf32>
    %c125_1051 = arith.constant 125 : index
    %c128_1052 = arith.constant 128 : index
    %1097 = vector.load %arg14[%c125_1051, %c128_1052] : memref<128x384xf32, #tpu.memory_space<vmem>>, vector<1x128xf32>
    tpu.vector_store %arg14[%c125_1051, %c128_1052], %1096 {strides = array<i32>} : memref<128x384xf32, #tpu.memory_space<vmem>>, vector<1x128xf32>,
    %c124_1053 = arith.constant 124 : index
    %c256_1054 = arith.constant 256 : index
    %1098 = vector.load %arg14[%c124_1053, %c256_1054] : memref<128x384xf32, #tpu.memory_space<vmem>>, vector<1x128xf32>
    tpu.vector_store %arg14[%c124_1053, %c256_1054], %1096 {strides = array<i32>} : memref<128x384xf32, #tpu.memory_space<vmem>>, vector<1x128xf32>,
    %c8_i32_1055 = arith.constant 8 : i32
    %1099 = arith.muli %arg0, %c8_i32_1055 : i32
    %c7_i32_1056 = arith.constant 7 : i32
    %1100 = arith.addi %1099, %c7_i32_1056 : i32
    %1101 = arith.index_cast %1100 : i32 to index
    %c15_1057 = arith.constant 15 : index
    %1102 = memref.load %arg1[%1101, %c15_1057] : memref<8x16xi32, #tpu.memory_space<smem>>
    %1103 = arith.index_cast %1102 : i32 to index
    %c0_1058 = arith.constant 0 : index
    %1104 = vector.load %arg2[%1103, %c0_1058] : memref<1000x128xf32, #tpu.memory_space<vmem>>, vector<1x128xf32>
    %c125_1059 = arith.constant 125 : index
    %c256_1060 = arith.constant 256 : index
    %1105 = vector.load %arg14[%c125_1059, %c256_1060] : memref<128x384xf32, #tpu.memory_space<vmem>>, vector<1x128xf32>
    tpu.vector_store %arg14[%c125_1059, %c256_1060], %1104 {strides = array<i32>} : memref<128x384xf32, #tpu.memory_space<vmem>>, vector<1x128xf32>,
    %c0_1061 = arith.constant 0 : index
    %c0_1062 = arith.constant 0 : index
    %1106 = vector.load %arg14[%c0_1061, %c0_1062] : memref<128x384xf32, #tpu.memory_space<vmem>>, vector<128x384xf32>
    %c0_1063 = arith.constant 0 : index
    %c0_1064 = arith.constant 0 : index
    %1107 = vector.load %arg3[%c0_1063, %c0_1064] : memref<384x128xf32, #tpu.memory_space<vmem>>, vector<384x128xf32>
    %cst_1065 = arith.constant dense<0.000000e+00> : vector<128x128xf32>
    %1108 = tpu.matmul %1106, %1107, %cst_1065 {dimension_numbers = #tpu.dot_dimension_numbers<[1], [0], [0], [1], [0, 0, 1, 1], [], []>} : vector<128x384xf32>, vector<384x128xf32>, vector<128x128xf32> -> vector<128x128xf32>
    %c0_1066 = arith.constant 0 : index
    %c0_1067 = arith.constant 0 : index
    %1109 = vector.load %arg4[%c0_1066, %c0_1067] : memref<1x128xf32, #tpu.memory_space<vmem>>, vector<1x128xf32>
    %1110 = vector.broadcast %1109 : vector<1x128xf32> to vector<128x128xf32>
    %1111 = arith.addf %1108, %1110 : vector<128x128xf32>
    %cst_1068 = arith.constant 0.000000e+00 : f32
    %1112 = vector.broadcast %cst_1068 : f32 to vector<128x128xf32>
    %1113 = arith.maximumf %1111, %1112 : vector<128x128xf32>
    %1114 = vector.shape_cast %1113 : vector<128x128xf32> to vector<8x16x128xf32>
    %c0_1069 = arith.constant 0 : index
    %c0_1070 = arith.constant 0 : index
    %c0_1071 = arith.constant 0 : index
    %1115 = vector.load %arg11[%c0_1069, %c0_1070, %c0_1071] : memref<8x16x128xf32, #tpu.memory_space<vmem>>, vector<8x16x128xf32>
    tpu.vector_store %arg11[%c0_1069, %c0_1070, %c0_1071], %1114 {strides = array<i32>} : memref<8x16x128xf32, #tpu.memory_space<vmem>>, vector<8x16x128xf32>,
    %1116 = tpu.iota {dimensions = array<i32: 1>} : vector<8x16x128xi32>
    %c14_i32 = arith.constant 14 : i32
    %1117 = vector.broadcast %c14_i32 : i32 to vector<8x16x128xi32>
    %1118 = arith.cmpi slt, %1116, %1117 : vector<8x16x128xi32>
    %cst_1072 = arith.constant 0xFF800000 : f32
    %1119 = vector.broadcast %cst_1072 : f32 to vector<8x16x128xf32>
    %1120 = arith.select %1118, %1114, %1119 : vector<8x16x128xi1>, vector<8x16x128xf32>
    %cst_1073 = arith.constant dense<0xFF800000> : vector<8x128xf32>
    %1121 = vector.multi_reduction <maximumf>, %1120, %cst_1073 [1] : vector<8x16x128xf32> to vector<8x128xf32>
    %c0_1074 = arith.constant 0 : index
    %c0_1075 = arith.constant 0 : index
    %1122 = vector.load %arg12[%c0_1074, %c0_1075] : memref<8x128xf32, #tpu.memory_space<vmem>>, vector<8x128xf32>
    tpu.vector_store %arg12[%c0_1074, %c0_1075], %1121 {strides = array<i32>} : memref<8x128xf32, #tpu.memory_space<vmem>>, vector<8x128xf32>,
    %c0_1076 = arith.constant 0 : index
    %c0_1077 = arith.constant 0 : index
    %1123 = vector.load %arg5[%c0_1076, %c0_1077] : memref<128x128xf32, #tpu.memory_space<vmem>>, vector<128x128xf32>
    %cst_1078 = arith.constant dense<0.000000e+00> : vector<8x128xf32>
    %1124 = tpu.matmul %1121, %1123, %cst_1078 {dimension_numbers = #tpu.dot_dimension_numbers<[1], [0], [0], [1], [0, 0, 1, 1], [], []>} : vector<8x128xf32>, vector<128x128xf32>, vector<8x128xf32> -> vector<8x128xf32>
    %c0_1079 = arith.constant 0 : index
    %c0_1080 = arith.constant 0 : index
    %1125 = vector.load %arg6[%c0_1079, %c0_1080] : memref<1x128xf32, #tpu.memory_space<vmem>>, vector<1x128xf32>
    %1126 = vector.broadcast %1125 : vector<1x128xf32> to vector<8x128xf32>
    %1127 = arith.addf %1124, %1126 : vector<8x128xf32>
    %cst_1081 = arith.constant 0.000000e+00 : f32
    %1128 = vector.broadcast %cst_1081 : f32 to vector<8x128xf32>
    %1129 = arith.maximumf %1127, %1128 : vector<8x128xf32>
    %c0_1082 = arith.constant 0 : index
    %c0_1083 = arith.constant 0 : index
    %1130 = vector.load %arg7[%c0_1082, %c0_1083] : memref<128x128xf32, #tpu.memory_space<vmem>>, vector<128x128xf32>
    %cst_1084 = arith.constant dense<0.000000e+00> : vector<8x128xf32>
    %1131 = tpu.matmul %1129, %1130, %cst_1084 {dimension_numbers = #tpu.dot_dimension_numbers<[1], [0], [0], [1], [0, 0, 1, 1], [], []>} : vector<8x128xf32>, vector<128x128xf32>, vector<8x128xf32> -> vector<8x128xf32>
    %c0_1085 = arith.constant 0 : index
    %c0_1086 = arith.constant 0 : index
    %1132 = vector.load %arg8[%c0_1085, %c0_1086] : memref<1x128xf32, #tpu.memory_space<vmem>>, vector<1x128xf32>
    %1133 = vector.broadcast %1132 : vector<1x128xf32> to vector<8x128xf32>
    %1134 = arith.addf %1131, %1133 : vector<8x128xf32>
    %cst_1087 = arith.constant 0.000000e+00 : f32
    %1135 = vector.broadcast %cst_1087 : f32 to vector<8x128xf32>
    %1136 = arith.maximumf %1134, %1135 : vector<8x128xf32>
    %c0_1088 = arith.constant 0 : index
    %c0_1089 = arith.constant 0 : index
    %1137 = vector.load %arg9[%c0_1088, %c0_1089] : memref<1x128xf32, #tpu.memory_space<vmem>>, vector<1x128xf32>
    %1138 = vector.broadcast %1137 : vector<1x128xf32> to vector<8x128xf32>
    %1139 = arith.mulf %1136, %1138 : vector<8x128xf32>
    %cst_1090 = arith.constant dense<0.000000e+00> : vector<8xf32>
    %1140 = vector.multi_reduction <add>, %1139, %cst_1090 [1] : vector<8x128xf32> to vector<8xf32>
    %1141 = vector.shape_cast %1140 : vector<8xf32> to vector<8x1xf32>
    %c0_1091 = arith.constant 0 : index
    %c0_1092 = arith.constant 0 : index
    %1142 = vector.load %arg10[%c0_1091, %c0_1092] : memref<1x1xf32, #tpu.memory_space<vmem>>, vector<1x1xf32>
    %1143 = vector.broadcast %1142 : vector<1x1xf32> to vector<8x1xf32>
    %1144 = arith.addf %1141, %1143 : vector<8x1xf32>
    %1145 = arith.negf %1144 : vector<8x1xf32>
    %1146 = math.exp %1145 : vector<8x1xf32>
    %cst_1093 = arith.constant 1.000000e+00 : f32
    %1147 = vector.broadcast %cst_1093 : f32 to vector<8x1xf32>
    %1148 = arith.addf %1147, %1146 : vector<8x1xf32>
    %1149 = arith.divf %1147, %1148 : vector<8x1xf32>
    %c0_1094 = arith.constant 0 : index
    %c0_1095 = arith.constant 0 : index
    %1150 = vector.load %arg13[%c0_1094, %c0_1095] : memref<8x1xf32, #tpu.memory_space<vmem>>, vector<8x1xf32>
    tpu.vector_store %arg13[%c0_1094, %c0_1095], %1149 {strides = array<i32>} : memref<8x1xf32, #tpu.memory_space<vmem>>, vector<8x1xf32>,
    return
  }
  func.func @transform_0(%arg0: i32, %arg1: memref<8x16xi32, #tpu.memory_space<smem>>) -> (i32, i32) {
    %c0_i32 = arith.constant 0 : i32
    %c0_i32_0 = arith.constant 0 : i32
    %c0_i32_1 = arith.constant 0 : i32
    return %c0_i32, %c0_i32_0 : i32, i32
  }
  func.func @transform_1(%arg0: i32, %arg1: memref<8x16xi32, #tpu.memory_space<smem>>) -> (i32, i32) {
    %c0_i32 = arith.constant 0 : i32
    %c0_i32_0 = arith.constant 0 : i32
    %c0_i32_1 = arith.constant 0 : i32
    return %c0_i32, %c0_i32_0 : i32, i32
  }
  func.func @transform_2(%arg0: i32, %arg1: memref<8x16xi32, #tpu.memory_space<smem>>) -> (i32, i32) {
    %c0_i32 = arith.constant 0 : i32
    %c0_i32_0 = arith.constant 0 : i32
    %c0_i32_1 = arith.constant 0 : i32
    return %c0_i32, %c0_i32_0 : i32, i32
  }
  func.func @transform_3(%arg0: i32, %arg1: memref<8x16xi32, #tpu.memory_space<smem>>) -> (i32, i32) {
    %c0_i32 = arith.constant 0 : i32
    %c0_i32_0 = arith.constant 0 : i32
    %c0_i32_1 = arith.constant 0 : i32
    return %c0_i32, %c0_i32_0 : i32, i32
  }
  func.func @transform_4(%arg0: i32, %arg1: memref<8x16xi32, #tpu.memory_space<smem>>) -> (i32, i32) {
    %c0_i32 = arith.constant 0 : i32
    %c0_i32_0 = arith.constant 0 : i32
    %c0_i32_1 = arith.constant 0 : i32
    return %c0_i32, %c0_i32_0 : i32, i32
  }
  func.func @transform_5(%arg0: i32, %arg1: memref<8x16xi32, #tpu.memory_space<smem>>) -> (i32, i32) {
    %c0_i32 = arith.constant 0 : i32
    %c0_i32_0 = arith.constant 0 : i32
    %c0_i32_1 = arith.constant 0 : i32
    return %c0_i32, %c0_i32_0 : i32, i32
  }
  func.func @transform_6(%arg0: i32, %arg1: memref<8x16xi32, #tpu.memory_space<smem>>) -> (i32, i32) {
    %c0_i32 = arith.constant 0 : i32
    %c0_i32_0 = arith.constant 0 : i32
    %c0_i32_1 = arith.constant 0 : i32
    return %c0_i32, %c0_i32_0 : i32, i32
  }
  func.func @transform_7(%arg0: i32, %arg1: memref<8x16xi32, #tpu.memory_space<smem>>) -> (i32, i32) {
    %c0_i32 = arith.constant 0 : i32
    %c0_i32_0 = arith.constant 0 : i32
    %c0_i32_1 = arith.constant 0 : i32
    return %c0_i32, %c0_i32_0 : i32, i32
  }
  func.func @transform_8(%arg0: i32, %arg1: memref<8x16xi32, #tpu.memory_space<smem>>) -> (i32, i32) {
    %c0_i32 = arith.constant 0 : i32
    %c0_i32_0 = arith.constant 0 : i32
    %c0_i32_1 = arith.constant 0 : i32
    return %c0_i32, %c0_i32_0 : i32, i32
  }
  func.func @transform_9(%arg0: i32, %arg1: memref<8x16xi32, #tpu.memory_space<smem>>) -> (i32, i32, i32) {
    %c0_i32 = arith.constant 0 : i32
    %c0_i32_0 = arith.constant 0 : i32
    %c0_i32_1 = arith.constant 0 : i32
    return %arg0, %c0_i32, %c0_i32_0 : i32, i32, i32
  }
  func.func @transform_10(%arg0: i32, %arg1: memref<8x16xi32, #tpu.memory_space<smem>>) -> (i32, i32) {
    %c0_i32 = arith.constant 0 : i32
    %c0_i32_0 = arith.constant 0 : i32
    return %arg0, %c0_i32 : i32, i32
  }
  func.func @transform_11(%arg0: i32, %arg1: memref<8x16xi32, #tpu.memory_space<smem>>) -> (i32, i32) {
    %c0_i32 = arith.constant 0 : i32
    %c0_i32_0 = arith.constant 0 : i32
    return %arg0, %c0_i32 : i32, i32
  }
}

</mosaic_0001>

<llo_original>
// kernel: tpu_custom_call.1
$region0: #{tpu_custom_call.1}
  #allocation0 [shape = 'u32[]', space=smem, size = 0x4, offset = 0x4, fixed_abs, tag = 'smem constant byte address 0x4 - core index']
  #allocation1 [shape = 'u32[144,128]{1,0:T(1,128)}', space=vmem, size = 0x12000, scoped, tag = 'internal scratch']
  #allocation2 [shape = 'f32[128,384]{1,0:T(8,128)}', space=vmem, size = 0x30000, scoped, tag = 'scratch operand']
  #allocation3 [shape = 's32[1]{0}', space=sflag, size = 0x4, scoped, tag = 'scoped memory for tpu_custom_call.1']
  #allocation4 [shape = 'u8[4096]{0}', space=smem, size = 0x1000, scoped, tag = 'prefetched SMEM operand 0']
  #allocation5 [shape = 'f32[1,1]{1,0:T(1,128)S(1)}', space=vmem, size = 0x200, scoped, tag = 'scoped memory for tpu_custom_call.1']
  %s0 = inlined_call_operand.hbm [shape: s32[8,16], index: 0, kind: input, shape index: {}]
  %s1 = inlined_call_operand.hbm [shape: f32[1000,128], index: 1, kind: input, shape index: {}]
  %s2 = inlined_call_operand.hbm [shape: f32[384,128], index: 2, kind: input, shape index: {}]
  %s3 = inlined_call_operand.vmem [shape: f32[1,128], index: 3, kind: input, shape index: {}]
  %s4 = inlined_call_operand.hbm [shape: f32[128,128], index: 4, kind: input, shape index: {}]
  %s5 = inlined_call_operand.vmem [shape: f32[1,128], index: 5, kind: input, shape index: {}]
  %s6 = inlined_call_operand.hbm [shape: f32[128,128], index: 6, kind: input, shape index: {}]
  %s7 = inlined_call_operand.vmem [shape: f32[1,128], index: 7, kind: input, shape index: {}]
  %s8 = inlined_call_operand.vmem [shape: f32[1,128], index: 8, kind: input, shape index: {}]
  %s9 = inlined_call_operand.<no memory space> [shape: f32[1,1], index: 9, kind: input, shape index: {}]
  %s10 = inlined_call_operand.hbm [shape: f32[8,16,128], index: 10, kind: output, shape index: {0}]
  %s11 = inlined_call_operand.hbm [shape: f32[8,128], index: 11, kind: output, shape index: {1}]
  %s12 = inlined_call_operand.vmem [shape: f32[8,1], index: 12, kind: output, shape index: {2}]
  %13 = xla_tuple %s10, %s11, %s12
  %s14 = sld [smem:[#allocation0]]
  $region78: #{tpu_custom_call.1} parent=0
    _
  %s16 = ssub.s32 1, %s14
  %s17 = scalar_select 0, %s16, %s14
  %19 = dma.hbm_to_smem %s0, 128, [#allocation4], [#allocation3]
  %v20 = vstv %s9
  %21 = vst [vmem:[#allocation5] sm:$0x1] %v20
  %22 = dma.done [#allocation3], 128
  %23 = sfence
  $region1: #{tpu_custom_call.1} parent=0
    #allocation6 [shape = 'u8[512000]{0}', space=vmem, size = 0x7d000, scoped, tag = 'input window, operand 1, single buffered']
    #allocation7 [shape = 's32[1]{0}', space=sflag, size = 0x4, scoped, tag = 'scoped memory for tpu_custom_call.1']
    #allocation8 [shape = 's32[1]{0}', space=sflag, size = 0x4, scoped, tag = 'scoped memory for tpu_custom_call.1']
    #allocation9 [shape = 'u8[196608]{0}', space=vmem, size = 0x30000, scoped, tag = 'input window, operand 2, single buffered']
    #allocation10 [shape = 's32[1]{0}', space=sflag, size = 0x4, scoped, tag = 'scoped memory for tpu_custom_call.1']
    #allocation11 [shape = 'u8[65536]{0}', space=vmem, size = 0x10000, scoped, tag = 'input window, operand 4, single buffered']
    #allocation12 [shape = 'u8[65536]{0}', space=vmem, size = 0x10000, scoped, tag = 'input window, operand 6, single buffered']
    #allocation13 [shape = 's32[1]{0}', space=sflag, size = 0x4, scoped, tag = 'scoped memory for tpu_custom_call.1']
    #allocation14 [shape = 'u8[65536]{0}', space=vmem, size = 0x10000, scoped, tag = 'output window, operand 0, single buffered']
    #allocation15 [shape = 'u8[4096]{0}', space=vmem, size = 0x1000, scoped, tag = 'output window, operand 1, single buffered']
    #allocation16 [shape = 's32[1]{0}', space=sflag, size = 0x4, scoped, tag = 'scoped memory for tpu_custom_call.1']
    %24 = vsyncpa [#allocation7], 0
    %25 = vsyncpa [#allocation10], 0
    %26 = vsyncpa [#allocation13], 0
    %27 = vsyncpa [#allocation8], 0
    %28 = vsyncpa [#allocation16], 0
    // Predicated region
    $region2: #{tpu_custom_call.1} parent=1 // pred_check
      _
    $region3: #{tpu_custom_call.1} parent=1 // pred_check_branch
      %30 = sbr.rel (0) target = $region5
    $region4: #{tpu_custom_call.1} parent=1 // pred_region
      %s32 = ssub.s32 16000, 16000
      %33 = vsyncadd [#allocation7], %s32
      %s34 = sshll.u32 [#allocation6], 4
      %s35 = int_to_ptr.vmem [resolvable:$true] %s34
      %40 = dma.hbm_to_vmem [thread:$0]  %s1, 16000, %s35, [#allocation7], 128, 128, 8
    $region5: #{tpu_custom_call.1} parent=1 // pred_fallthru
      _
    // Predicated region
    $region6: #{tpu_custom_call.1} parent=1 // pred_check
      _
    $region7: #{tpu_custom_call.1} parent=1 // pred_check_branch
      %42 = sbr.rel (0) target = $region9
    $region8: #{tpu_custom_call.1} parent=1 // pred_region
      %s44 = ssub.s32 6144, 6144
      %45 = vsyncadd [#allocation10], %s44
      %s46 = sshll.u32 [#allocation9], 4
      %s47 = int_to_ptr.vmem [resolvable:$true] %s46
      %52 = dma.hbm_to_vmem [thread:$0]  %s2, 6144, %s47, [#allocation10], 128, 128, 8
    $region9: #{tpu_custom_call.1} parent=1 // pred_fallthru
      _
    // Predicated region
    $region10: #{tpu_custom_call.1} parent=1 // pred_check
      _
    $region11: #{tpu_custom_call.1} parent=1 // pred_check_branch
      %54 = sbr.rel (0) target = $region13
    $region12: #{tpu_custom_call.1} parent=1 // pred_region
      _
    $region13: #{tpu_custom_call.1} parent=1 // pred_fallthru
      _
    // Predicated region
    $region14: #{tpu_custom_call.1} parent=1 // pred_check
      _
    $region15: #{tpu_custom_call.1} parent=1 // pred_check_branch
      %56 = sbr.rel (0) target = $region17
    $region16: #{tpu_custom_call.1} parent=1 // pred_region
      %s58 = ssub.s32 2048, 2048
      %59 = vsyncadd [#allocation10], %s58
      %s60 = sshll.u32 [#allocation11], 4
      %s61 = int_to_ptr.vmem [resolvable:$true] %s60
      %66 = dma.hbm_to_vmem [thread:$0]  %s4, 2048, %s61, [#allocation10], 128, 128, 8
    $region17: #{tpu_custom_call.1} parent=1 // pred_fallthru
      _
    // Predicated region
    $region18: #{tpu_custom_call.1} parent=1 // pred_check
      _
    $region19: #{tpu_custom_call.1} parent=1 // pred_check_branch
      %68 = sbr.rel (0) target = $region21
    $region20: #{tpu_custom_call.1} parent=1 // pred_region
      _
    $region21: #{tpu_custom_call.1} parent=1 // pred_fallthru
      _
    // Predicated region
    $region22: #{tpu_custom_call.1} parent=1 // pred_check
      _
    $region23: #{tpu_custom_call.1} parent=1 // pred_check_branch
      %70 = sbr.rel (0) target = $region25
    $region24: #{tpu_custom_call.1} parent=1 // pred_region
      %s72 = ssub.s32 2048, 2048
      %73 = vsyncadd [#allocation13], %s72
      %s74 = sshll.u32 [#allocation12], 4
      %s75 = int_to_ptr.vmem [resolvable:$true] %s74
      %80 = dma.hbm_to_vmem [thread:$0]  %s6, 2048, %s75, [#allocation13], 128, 128, 8
    $region25: #{tpu_custom_call.1} parent=1 // pred_fallthru
      _
    // Predicated region
    $region26: #{tpu_custom_call.1} parent=1 // pred_check
      _
    $region27: #{tpu_custom_call.1} parent=1 // pred_check_branch
      %82 = sbr.rel (0) target = $region29
    $region28: #{tpu_custom_call.1} parent=1 // pred_region
      _
    $region29: #{tpu_custom_call.1} parent=1 // pred_fallthru
      _
    // Predicated region
    $region30: #{tpu_custom_call.1} parent=1 // pred_check
      _
    $region31: #{tpu_custom_call.1} parent=1 // pred_check_branch
      %84 = sbr.rel (0) target = $region33
    $region32: #{tpu_custom_call.1} parent=1 // pred_region
      _
    $region33: #{tpu_custom_call.1} parent=1 // pred_fallthru
      _
    // Predicated region
    $region34: #{tpu_custom_call.1} parent=1 // pred_check
      _
    $region35: #{tpu_custom_call.1} parent=1 // pred_check_branch
      %86 = sbr.rel (0) target = $region37
    $region36: #{tpu_custom_call.1} parent=1 // pred_region
      _
    $region37: #{tpu_custom_call.1} parent=1 // pred_fallthru
      _
    // Predicated region
    $region38: #{tpu_custom_call.1} parent=1 // pred_check
      _
    $region39: #{tpu_custom_call.1} parent=1 // pred_check_branch
      %88 = sbr.rel (0) target = $region41
    $region40: #{tpu_custom_call.1} parent=1 // pred_region
      %89 = dma.done [#allocation7], 16000
    $region41: #{tpu_custom_call.1} parent=1 // pred_fallthru
      _
    // Predicated region
    $region42: #{tpu_custom_call.1} parent=1 // pred_check
      _
    $region43: #{tpu_custom_call.1} parent=1 // pred_check_branch
      %91 = sbr.rel (0) target = $region45
    $region44: #{tpu_custom_call.1} parent=1 // pred_region
      %92 = dma.done [#allocation10], 6144
    $region45: #{tpu_custom_call.1} parent=1 // pred_fallthru
      _
    // Predicated region
    $region46: #{tpu_custom_call.1} parent=1 // pred_check
      _
    $region47: #{tpu_custom_call.1} parent=1 // pred_check_branch
      %94 = sbr.rel (0) target = $region49
    $region48: #{tpu_custom_call.1} parent=1 // pred_region
      %95 = dma.done [#allocation10], 2048
    $region49: #{tpu_custom_call.1} parent=1 // pred_fallthru
      _
    // Predicated region
    $region50: #{tpu_custom_call.1} parent=1 // pred_check
      _
    $region51: #{tpu_custom_call.1} parent=1 // pred_check_branch
      %97 = sbr.rel (0) target = $region53
    $region52: #{tpu_custom_call.1} parent=1 // pred_region
      %98 = dma.done [#allocation13], 2048
    $region53: #{tpu_custom_call.1} parent=1 // pred_fallthru
      _
    %99 = vst [vmem:[#allocation2] sm:$0xff] 0.0
    %100 = vst [vmem:[#allocation2 + $0x8] sm:$0xff] 0.0
    %101 = vst [vmem:[#allocation2 + $0x10] sm:$0xff] 0.0
    %102 = vst [vmem:[#allocation2 + $0x18] sm:$0xff] 0.0
    %103 = vst [vmem:[#allocation2 + $0x20] sm:$0xff] 0.0
    %104 = vst [vmem:[#allocation2 + $0x28] sm:$0xff] 0.0
    %105 = vst [vmem:[#allocation2 + $0x30] sm:$0xff] 0.0
    %106 = vst [vmem:[#allocation2 + $0x38] sm:$0xff] 0.0
    %107 = vst [vmem:[#allocation2 + $0x40] sm:$0xff] 0.0
    %108 = vst [vmem:[#allocation2 + $0x48] sm:$0xff] 0.0
    %109 = vst [vmem:[#allocation2 + $0x50] sm:$0xff] 0.0
    %110 = vst [vmem:[#allocation2 + $0x58] sm:$0xff] 0.0
    %111 = vst [vmem:[#allocation2 + $0x60] sm:$0xff] 0.0
    %112 = vst [vmem:[#allocation2 + $0x68] sm:$0xff] 0.0
    %113 = vst [vmem:[#allocation2 + $0x70] sm:$0xff] 0.0
    %114 = vst [vmem:[#allocation2 + $0x78] sm:$0xff] 0.0
    %115 = vst [vmem:[#allocation2 + $0x80] sm:$0xff] 0.0
    %116 = vst [vmem:[#allocation2 + $0x88] sm:$0xff] 0.0
    %117 = vst [vmem:[#allocation2 + $0x90] sm:$0xff] 0.0
    %118 = vst [vmem:[#allocation2 + $0x98] sm:$0xff] 0.0
    %119 = vst [vmem:[#allocation2 + $0xa0] sm:$0xff] 0.0
    %120 = vst [vmem:[#allocation2 + $0xa8] sm:$0xff] 0.0
    %121 = vst [vmem:[#allocation2 + $0xb0] sm:$0xff] 0.0
    %122 = vst [vmem:[#allocation2 + $0xb8] sm:$0xff] 0.0
    %123 = vst [vmem:[#allocation2 + $0xc0] sm:$0xff] 0.0
    %124 = vst [vmem:[#allocation2 + $0xc8] sm:$0xff] 0.0
    %125 = vst [vmem:[#allocation2 + $0xd0] sm:$0xff] 0.0
    %126 = vst [vmem:[#allocation2 + $0xd8] sm:$0xff] 0.0
    %127 = vst [vmem:[#allocation2 + $0xe0] sm:$0xff] 0.0
    %128 = vst [vmem:[#allocation2 + $0xe8] sm:$0xff] 0.0
    %129 = vst [vmem:[#allocation2 + $0xf0] sm:$0xff] 0.0
    %130 = vst [vmem:[#allocation2 + $0xf8] sm:$0xff] 0.0
    %131 = vst [vmem:[#allocation2 + $0x100] sm:$0xff] 0.0
    %132 = vst [vmem:[#allocation2 + $0x108] sm:$0xff] 0.0
    %133 = vst [vmem:[#allocation2 + $0x110] sm:$0xff] 0.0
    %134 = vst [vmem:[#allocation2 + $0x118] sm:$0xff] 0.0
    %135 = vst [vmem:[#allocation2 + $0x120] sm:$0xff] 0.0
    %136 = vst [vmem:[#allocation2 + $0x128] sm:$0xff] 0.0
    %137 = vst [vmem:[#allocation2 + $0x130] sm:$0xff] 0.0
    %138 = vst [vmem:[#allocation2 + $0x138] sm:$0xff] 0.0
    %139 = vst [vmem:[#allocation2 + $0x140] sm:$0xff] 0.0
    %140 = vst [vmem:[#allocation2 + $0x148] sm:$0xff] 0.0
    %141 = vst [vmem:[#allocation2 + $0x150] sm:$0xff] 0.0
    %142 = vst [vmem:[#allocation2 + $0x158] sm:$0xff] 0.0
    %143 = vst [vmem:[#allocation2 + $0x160] sm:$0xff] 0.0
    %144 = vst [vmem:[#allocation2 + $0x168] sm:$0xff] 0.0
    %145 = vst [vmem:[#allocation2 + $0x170] sm:$0xff] 0.0
    %146 = vst [vmem:[#allocation2 + $0x178] sm:$0xff] 0.0
    %s147 = smul.u32 0, 8
    %s148 = smul.u32 %s147, 128
    %s149 = sld [smem:[#allocation4 + %s148]]
    %s150 = scalar_lea.vmem [#allocation6], %s149
    %v151 = vld [vmem:[%s150] sm:$0x1]
    %152 = vst [vmem:[#allocation2] sm:$0x1] %v151
    %s153 = sadd.s32 %s148, 1
    %s154 = sld [smem:[#allocation4 + %s153]]
    %s155 = scalar_lea.vmem [#allocation6], %s154
    %v156 = vld [vmem:[%s155] sm:$0x1]
    %157 = vst [vmem:[#allocation2 + $0x1] sm:$0x1] %v156
    %158 = vst [vmem:[#allocation2 + $0x8] sm:$0x1] %v156
    %s159 = sadd.s32 %s148, 2
    %s160 = sld [smem:[#allocation4 + %s159]]
    %s161 = scalar_lea.vmem [#allocation6], %s160
    %v162 = vld [vmem:[%s161] sm:$0x1]
    %163 = vst [vmem:[#allocation2 + $0x2] sm:$0x1] %v162
    %164 = vst [vmem:[#allocation2 + $0x9] sm:$0x1] %v162
    %165 = vst [vmem:[#allocation2 + $0x10] sm:$0x1] %v162
    %s166 = sadd.s32 %s148, 3
    %s167 = sld [smem:[#allocation4 + %s166]]
    %s168 = scalar_lea.vmem [#allocation6], %s167
    %v169 = vld [vmem:[%s168] sm:$0x1]
    %170 = vst [vmem:[#allocation2 + $0x3] sm:$0x1] %v169
    %171 = vst [vmem:[#allocation2 + $0xa] sm:$0x1] %v169
    %172 = vst [vmem:[#allocation2 + $0x11] sm:$0x1] %v169
    %s173 = sadd.s32 %s148, 4
    %s174 = sld [smem:[#allocation4 + %s173]]
    %s175 = scalar_lea.vmem [#allocation6], %s174
    %v176 = vld [vmem:[%s175] sm:$0x1]
    %177 = vst [vmem:[#allocation2 + $0x4] sm:$0x1] %v176
    %178 = vst [vmem:[#allocation2 + $0xb] sm:$0x1] %v176
    %179 = vst [vmem:[#allocation2 + $0x12] sm:$0x1] %v176
    %s180 = sadd.s32 %s148, 5
    %s181 = sld [smem:[#allocation4 + %s180]]
    %s182 = scalar_lea.vmem [#allocation6], %s181
    %v183 = vld [vmem:[%s182] sm:$0x1]
    %184 = vst [vmem:[#allocation2 + $0x5] sm:$0x1] %v183
    %185 = vst [vmem:[#allocation2 + $0xc] sm:$0x1] %v183
    %186 = vst [vmem:[#allocation2 + $0x13] sm:$0x1] %v183
    %s187 = sadd.s32 %s148, 6
    %s188 = sld [smem:[#allocation4 + %s187]]
    %s189 = scalar_lea.vmem [#allocation6], %s188
    %v190 = vld [vmem:[%s189] sm:$0x1]
    %191 = vst [vmem:[#allocation2 + $0x6] sm:$0x1] %v190
    %192 = vst [vmem:[#allocation2 + $0xd] sm:$0x1] %v190
    %193 = vst [vmem:[#allocation2 + $0x14] sm:$0x1] %v190
    %s194 = sadd.s32 %s148, 7
    %s195 = sld [smem:[#allocation4 + %s194]]
    %s196 = scalar_lea.vmem [#allocation6], %s195
    %v197 = vld [vmem:[%s196] sm:$0x1]
    %198 = vst [vmem:[#allocation2 + $0x7] sm:$0x1] %v197
    %199 = vst [vmem:[#allocation2 + $0xe] sm:$0x1] %v197
    %200 = vst [vmem:[#allocation2 + $0x15] sm:$0x1] %v197
    %s201 = sadd.s32 %s148, 8
    %s202 = sld [smem:[#allocation4 + %s201]]
    %s203 = scalar_lea.vmem [#allocation6], %s202
    %v204 = vld [vmem:[%s203] sm:$0x1]
    %205 = vst [vmem:[#allocation2 + $0x18] sm:$0x1] %v204
    %206 = vst [vmem:[#allocation2 + $0xf] sm:$0x1] %v204
    %207 = vst [vmem:[#allocation2 + $0x16] sm:$0x1] %v204
    %s208 = sadd.s32 %s148, 9
    %s209 = sld [smem:[#allocation4 + %s208]]
    %s210 = scalar_lea.vmem [#allocation6], %s209
    %v211 = vld [vmem:[%s210] sm:$0x1]
    %212 = vst [vmem:[#allocation2 + $0x19] sm:$0x1] %v211
    %213 = vst [vmem:[#allocation2 + $0x20] sm:$0x1] %v211
    %214 = vst [vmem:[#allocation2 + $0x17] sm:$0x1] %v211
    %s215 = sadd.s32 %s148, 10
    %s216 = sld [smem:[#allocation4 + %s215]]
    %s217 = scalar_lea.vmem [#allocation6], %s216
    %v218 = vld [vmem:[%s217] sm:$0x1]
    %219 = vst [vmem:[#allocation2 + $0x1a] sm:$0x1] %v218
    %220 = vst [vmem:[#allocation2 + $0x21] sm:$0x1] %v218
    %221 = vst [vmem:[#allocation2 + $0x28] sm:$0x1] %v218
    %s222 = sadd.s32 %s148, 11
    %s223 = sld [smem:[#allocation4 + %s222]]
    %s224 = scalar_lea.vmem [#allocation6], %s223
    %v225 = vld [vmem:[%s224] sm:$0x1]
    %226 = vst [vmem:[#allocation2 + $0x1b] sm:$0x1] %v225
    %227 = vst [vmem:[#allocation2 + $0x22] sm:$0x1] %v225
    %228 = vst [vmem:[#allocation2 + $0x29] sm:$0x1] %v225
    %s229 = sadd.s32 %s148, 12
    %s230 = sld [smem:[#allocation4 + %s229]]
    %s231 = scalar_lea.vmem [#allocation6], %s230
    %v232 = vld [vmem:[%s231] sm:$0x1]
    %233 = vst [vmem:[#allocation2 + $0x1c] sm:$0x1] %v232
    %234 = vst [vmem:[#allocation2 + $0x23] sm:$0x1] %v232
    %235 = vst [vmem:[#allocation2 + $0x2a] sm:$0x1] %v232
    %s236 = sadd.s32 %s148, 13
    %s237 = sld [smem:[#allocation4 + %s236]]
    %s238 = scalar_lea.vmem [#allocation6], %s237
    %v239 = vld [vmem:[%s238] sm:$0x1]
    %240 = vst [vmem:[#allocation2 + $0x1d] sm:$0x1] %v239
    %241 = vst [vmem:[#allocation2 + $0x24] sm:$0x1] %v239
    %242 = vst [vmem:[#allocation2 + $0x2b] sm:$0x1] %v239
    %s243 = sadd.s32 %s148, 14
    %s244 = sld [smem:[#allocation4 + %s243]]
    %s245 = scalar_lea.vmem [#allocation6], %s244
    %v246 = vld [vmem:[%s245] sm:$0x1]
    %247 = vst [vmem:[#allocation2 + $0x25] sm:$0x1] %v246
    %248 = vst [vmem:[#allocation2 + $0x2c] sm:$0x1] %v246
    %s249 = sadd.s32 %s148, 15
    %s250 = sld [smem:[#allocation4 + %s249]]
    %s251 = scalar_lea.vmem [#allocation6], %s250
    %v252 = vld [vmem:[%s251] sm:$0x1]
    %253 = vst [vmem:[#allocation2 + $0x2d] sm:$0x1] %v252
    %s254 = sadd.s32 %s147, 1
    %s255 = smul.u32 %s254, 128
    %s256 = sld [smem:[#allocation4 + %s255]]
    %s257 = scalar_lea.vmem [#allocation6], %s256
    %v258 = vld [vmem:[%s257] sm:$0x1]
    %259 = vst [vmem:[#allocation2 + $0x30] sm:$0x1] %v258
    %s260 = sadd.s32 %s255, 1
    %s261 = sld [smem:[#allocation4 + %s260]]
    %s262 = scalar_lea.vmem [#allocation6], %s261
    %v263 = vld [vmem:[%s262] sm:$0x1]
    %264 = vst [vmem:[#allocation2 + $0x31] sm:$0x1] %v263
    %265 = vst [vmem:[#allocation2 + $0x38] sm:$0x1] %v263
    %s266 = sadd.s32 %s255, 2
    %s267 = sld [smem:[#allocation4 + %s266]]
    %s268 = scalar_lea.vmem [#allocation6], %s267
    %v269 = vld [vmem:[%s268] sm:$0x1]
    %270 = vst [vmem:[#allocation2 + $0x32] sm:$0x1] %v269
    %271 = vst [vmem:[#allocation2 + $0x39] sm:$0x1] %v269
    %272 = vst [vmem:[#allocation2 + $0x40] sm:$0x1] %v269
    %s273 = sadd.s32 %s255, 3
    %s274 = sld [smem:[#allocation4 + %s273]]
    %s275 = scalar_lea.vmem [#allocation6], %s274
    %v276 = vld [vmem:[%s275] sm:$0x1]
    %277 = vst [vmem:[#allocation2 + $0x33] sm:$0x1] %v276
    %278 = vst [vmem:[#allocation2 + $0x3a] sm:$0x1] %v276
    %279 = vst [vmem:[#allocation2 + $0x41] sm:$0x1] %v276
    %s280 = sadd.s32 %s255, 4
    %s281 = sld [smem:[#allocation4 + %s280]]
    %s282 = scalar_lea.vmem [#allocation6], %s281
    %v283 = vld [vmem:[%s282] sm:$0x1]
    %284 = vst [vmem:[#allocation2 + $0x34] sm:$0x1] %v283
    %285 = vst [vmem:[#allocation2 + $0x3b] sm:$0x1] %v283
    %286 = vst [vmem:[#allocation2 + $0x42] sm:$0x1] %v283
    %s287 = sadd.s32 %s255, 5
    %s288 = sld [smem:[#allocation4 + %s287]]
    %s289 = scalar_lea.vmem [#allocation6], %s288
    %v290 = vld [vmem:[%s289] sm:$0x1]
    %291 = vst [vmem:[#allocation2 + $0x35] sm:$0x1] %v290
    %292 = vst [vmem:[#allocation2 + $0x3c] sm:$0x1] %v290
    %293 = vst [vmem:[#allocation2 + $0x43] sm:$0x1] %v290
    %s294 = sadd.s32 %s255, 6
    %s295 = sld [smem:[#allocation4 + %s294]]
    %s296 = scalar_lea.vmem [#allocation6], %s295
    %v297 = vld [vmem:[%s296] sm:$0x1]
    %298 = vst [vmem:[#allocation2 + $0x36] sm:$0x1] %v297
    %299 = vst [vmem:[#allocation2 + $0x3d] sm:$0x1] %v297
    %300 = vst [vmem:[#allocation2 + $0x44] sm:$0x1] %v297
    %s301 = sadd.s32 %s255, 7
    %s302 = sld [smem:[#allocation4 + %s301]]
    %s303 = scalar_lea.vmem [#allocation6], %s302
    %v304 = vld [vmem:[%s303] sm:$0x1]
    %305 = vst [vmem:[#allocation2 + $0x37] sm:$0x1] %v304
    %306 = vst [vmem:[#allocation2 + $0x3e] sm:$0x1] %v304
    %307 = vst [vmem:[#allocation2 + $0x45] sm:$0x1] %v304
    %s308 = sadd.s32 %s255, 8
    %s309 = sld [smem:[#allocation4 + %s308]]
    %s310 = scalar_lea.vmem [#allocation6], %s309
    %v311 = vld [vmem:[%s310] sm:$0x1]
    %312 = vst [vmem:[#allocation2 + $0x48] sm:$0x1] %v311
    %313 = vst [vmem:[#allocation2 + $0x3f] sm:$0x1] %v311
    %314 = vst [vmem:[#allocation2 + $0x46] sm:$0x1] %v311
    %s315 = sadd.s32 %s255, 9
    %s316 = sld [smem:[#allocation4 + %s315]]
    %s317 = scalar_lea.vmem [#allocation6], %s316
    %v318 = vld [vmem:[%s317] sm:$0x1]
    %319 = vst [vmem:[#allocation2 + $0x49] sm:$0x1] %v318
    %320 = vst [vmem:[#allocation2 + $0x50] sm:$0x1] %v318
    %321 = vst [vmem:[#allocation2 + $0x47] sm:$0x1] %v318
    %s322 = sadd.s32 %s255, 10
    %s323 = sld [smem:[#allocation4 + %s322]]
    %s324 = scalar_lea.vmem [#allocation6], %s323
    %v325 = vld [vmem:[%s324] sm:$0x1]
    %326 = vst [vmem:[#allocation2 + $0x4a] sm:$0x1] %v325
    %327 = vst [vmem:[#allocation2 + $0x51] sm:$0x1] %v325
    %328 = vst [vmem:[#allocation2 + $0x58] sm:$0x1] %v325
    %s329 = sadd.s32 %s255, 11
    %s330 = sld [smem:[#allocation4 + %s329]]
    %s331 = scalar_lea.vmem [#allocation6], %s330
    %v332 = vld [vmem:[%s331] sm:$0x1]
    %333 = vst [vmem:[#allocation2 + $0x4b] sm:$0x1] %v332
    %334 = vst [vmem:[#allocation2 + $0x52] sm:$0x1] %v332
    %335 = vst [vmem:[#allocation2 + $0x59] sm:$0x1] %v332
    %s336 = sadd.s32 %s255, 12
    %s337 = sld [smem:[#allocation4 + %s336]]
    %s338 = scalar_lea.vmem [#allocation6], %s337
    %v339 = vld [vmem:[%s338] sm:$0x1]
    %340 = vst [vmem:[#allocation2 + $0x4c] sm:$0x1] %v339
    %341 = vst [vmem:[#allocation2 + $0x53] sm:$0x1] %v339
    %342 = vst [vmem:[#allocation2 + $0x5a] sm:$0x1] %v339
    %s343 = sadd.s32 %s255, 13
    %s344 = sld [smem:[#allocation4 + %s343]]
    %s345 = scalar_lea.vmem [#allocation6], %s344
    %v346 = vld [vmem:[%s345] sm:$0x1]
    %347 = vst [vmem:[#allocation2 + $0x4d] sm:$0x1] %v346
    %348 = vst [vmem:[#allocation2 + $0x54] sm:$0x1] %v346
    %349 = vst [vmem:[#allocation2 + $0x5b] sm:$0x1] %v346
    %s350 = sadd.s32 %s255, 14
    %s351 = sld [smem:[#allocation4 + %s350]]
    %s352 = scalar_lea.vmem [#allocation6], %s351
    %v353 = vld [vmem:[%s352] sm:$0x1]
    %354 = vst [vmem:[#allocation2 + $0x55] sm:$0x1] %v353
    %355 = vst [vmem:[#allocation2 + $0x5c] sm:$0x1] %v353
    %s356 = sadd.s32 %s255, 15
    %s357 = sld [smem:[#allocation4 + %s356]]
    %s358 = scalar_lea.vmem [#allocation6], %s357
    %v359 = vld [vmem:[%s358] sm:$0x1]
    %360 = vst [vmem:[#allocation2 + $0x5d] sm:$0x1] %v359
    %s361 = sadd.s32 %s147, 2
    %s362 = smul.u32 %s361, 128
    %s363 = sld [smem:[#allocation4 + %s362]]
    %s364 = scalar_lea.vmem [#allocation6], %s363
    %v365 = vld [vmem:[%s364] sm:$0x1]
    %366 = vst [vmem:[#allocation2 + $0x60] sm:$0x1] %v365
    %s367 = sadd.s32 %s362, 1
    %s368 = sld [smem:[#allocation4 + %s367]]
    %s369 = scalar_lea.vmem [#allocation6], %s368
    %v370 = vld [vmem:[%s369] sm:$0x1]
    %371 = vst [vmem:[#allocation2 + $0x61] sm:$0x1] %v370
    %372 = vst [vmem:[#allocation2 + $0x68] sm:$0x1] %v370
    %s373 = sadd.s32 %s362, 2
    %s374 = sld [smem:[#allocation4 + %s373]]
    %s375 = scalar_lea.vmem [#allocation6], %s374
    %v376 = vld [vmem:[%s375] sm:$0x1]
    %377 = vst [vmem:[#allocation2 + $0x62] sm:$0x1] %v376
    %378 = vst [vmem:[#allocation2 + $0x69] sm:$0x1] %v376
    %379 = vst [vmem:[#allocation2 + $0x70] sm:$0x1] %v376
    %s380 = sadd.s32 %s362, 3
    %s381 = sld [smem:[#allocation4 + %s380]]
    %s382 = scalar_lea.vmem [#allocation6], %s381
    %v383 = vld [vmem:[%s382] sm:$0x1]
    %384 = vst [vmem:[#allocation2 + $0x63] sm:$0x1] %v383
    %385 = vst [vmem:[#allocation2 + $0x6a] sm:$0x1] %v383
    %386 = vst [vmem:[#allocation2 + $0x71] sm:$0x1] %v383
    %s387 = sadd.s32 %s362, 4
    %s388 = sld [smem:[#allocation4 + %s387]]
    %s389 = scalar_lea.vmem [#allocation6], %s388
    %v390 = vld [vmem:[%s389] sm:$0x1]
    %391 = vst [vmem:[#allocation2 + $0x64] sm:$0x1] %v390
    %392 = vst [vmem:[#allocation2 + $0x6b] sm:$0x1] %v390
    %393 = vst [vmem:[#allocation2 + $0x72] sm:$0x1] %v390
    %s394 = sadd.s32 %s362, 5
    %s395 = sld [smem:[#allocation4 + %s394]]
    %s396 = scalar_lea.vmem [#allocation6], %s395
    %v397 = vld [vmem:[%s396] sm:$0x1]
    %398 = vst [vmem:[#allocation2 + $0x65] sm:$0x1] %v397
    %399 = vst [vmem:[#allocation2 + $0x6c] sm:$0x1] %v397
    %400 = vst [vmem:[#allocation2 + $0x73] sm:$0x1] %v397
    %s401 = sadd.s32 %s362, 6
    %s402 = sld [smem:[#allocation4 + %s401]]
    %s403 = scalar_lea.vmem [#allocation6], %s402
    %v404 = vld [vmem:[%s403] sm:$0x1]
    %405 = vst [vmem:[#allocation2 + $0x66] sm:$0x1] %v404
    %406 = vst [vmem:[#allocation2 + $0x6d] sm:$0x1] %v404
    %407 = vst [vmem:[#allocation2 + $0x74] sm:$0x1] %v404
    %s408 = sadd.s32 %s362, 7
    %s409 = sld [smem:[#allocation4 + %s408]]
    %s410 = scalar_lea.vmem [#allocation6], %s409
    %v411 = vld [vmem:[%s410] sm:$0x1]
    %412 = vst [vmem:[#allocation2 + $0x67] sm:$0x1] %v411
    %413 = vst [vmem:[#allocation2 + $0x6e] sm:$0x1] %v411
    %414 = vst [vmem:[#allocation2 + $0x75] sm:$0x1] %v411
    %s415 = sadd.s32 %s362, 8
    %s416 = sld [smem:[#allocation4 + %s415]]
    %s417 = scalar_lea.vmem [#allocation6], %s416
    %v418 = vld [vmem:[%s417] sm:$0x1]
    %419 = vst [vmem:[#allocation2 + $0x78] sm:$0x1] %v418
    %420 = vst [vmem:[#allocation2 + $0x6f] sm:$0x1] %v418
    %421 = vst [vmem:[#allocation2 + $0x76] sm:$0x1] %v418
    %s422 = sadd.s32 %s362, 9
    %s423 = sld [smem:[#allocation4 + %s422]]
    %s424 = scalar_lea.vmem [#allocation6], %s423
    %v425 = vld [vmem:[%s424] sm:$0x1]
    %426 = vst [vmem:[#allocation2 + $0x79] sm:$0x1] %v425
    %427 = vst [vmem:[#allocation2 + $0x80] sm:$0x1] %v425
    %428 = vst [vmem:[#allocation2 + $0x77] sm:$0x1] %v425
    %s429 = sadd.s32 %s362, 10
    %s430 = sld [smem:[#allocation4 + %s429]]
    %s431 = scalar_lea.vmem [#allocation6], %s430
    %v432 = vld [vmem:[%s431] sm:$0x1]
    %433 = vst [vmem:[#allocation2 + $0x7a] sm:$0x1] %v432
    %434 = vst [vmem:[#allocation2 + $0x81] sm:$0x1] %v432
    %435 = vst [vmem:[#allocation2 + $0x88] sm:$0x1] %v432
    %s436 = sadd.s32 %s362, 11
    %s437 = sld [smem:[#allocation4 + %s436]]
    %s438 = scalar_lea.vmem [#allocation6], %s437
    %v439 = vld [vmem:[%s438] sm:$0x1]
    %440 = vst [vmem:[#allocation2 + $0x7b] sm:$0x1] %v439
    %441 = vst [vmem:[#allocation2 + $0x82] sm:$0x1] %v439
    %442 = vst [vmem:[#allocation2 + $0x89] sm:$0x1] %v439
    %s443 = sadd.s32 %s362, 12
    %s444 = sld [smem:[#allocation4 + %s443]]
    %s445 = scalar_lea.vmem [#allocation6], %s444
    %v446 = vld [vmem:[%s445] sm:$0x1]
    %447 = vst [vmem:[#allocation2 + $0x7c] sm:$0x1] %v446
    %448 = vst [vmem:[#allocation2 + $0x83] sm:$0x1] %v446
    %449 = vst [vmem:[#allocation2 + $0x8a] sm:$0x1] %v446
    %s450 = sadd.s32 %s362, 13
    %s451 = sld [smem:[#allocation4 + %s450]]
    %s452 = scalar_lea.vmem [#allocation6], %s451
    %v453 = vld [vmem:[%s452] sm:$0x1]
    %454 = vst [vmem:[#allocation2 + $0x7d] sm:$0x1] %v453
    %455 = vst [vmem:[#allocation2 + $0x84] sm:$0x1] %v453
    %456 = vst [vmem:[#allocation2 + $0x8b] sm:$0x1] %v453
    %s457 = sadd.s32 %s362, 14
    %s458 = sld [smem:[#allocation4 + %s457]]
    %s459 = scalar_lea.vmem [#allocation6], %s458
    %v460 = vld [vmem:[%s459] sm:$0x1]
    %461 = vst [vmem:[#allocation2 + $0x85] sm:$0x1] %v460
    %462 = vst [vmem:[#allocation2 + $0x8c] sm:$0x1] %v460
    %s463 = sadd.s32 %s362, 15
    %s464 = sld [smem:[#allocation4 + %s463]]
    %s465 = scalar_lea.vmem [#allocation6], %s464
    %v466 = vld [vmem:[%s465] sm:$0x1]
    %467 = vst [vmem:[#allocation2 + $0x8d] sm:$0x1] %v466
    %s468 = sadd.s32 %s147, 3
    %s469 = smul.u32 %s468, 128
    %s470 = sld [smem:[#allocation4 + %s469]]
    %s471 = scalar_lea.vmem [#allocation6], %s470
    %v472 = vld [vmem:[%s471] sm:$0x1]
    %473 = vst [vmem:[#allocation2 + $0x90] sm:$0x1] %v472
    %s474 = sadd.s32 %s469, 1
    %s475 = sld [smem:[#allocation4 + %s474]]
    %s476 = scalar_lea.vmem [#allocation6], %s475
    %v477 = vld [vmem:[%s476] sm:$0x1]
    %478 = vst [vmem:[#allocation2 + $0x91] sm:$0x1] %v477
    %479 = vst [vmem:[#allocation2 + $0x98] sm:$0x1] %v477
    %s480 = sadd.s32 %s469, 2
    %s481 = sld [smem:[#allocation4 + %s480]]
    %s482 = scalar_lea.vmem [#allocation6], %s481
    %v483 = vld [vmem:[%s482] sm:$0x1]
    %484 = vst [vmem:[#allocation2 + $0x92] sm:$0x1] %v483
    %485 = vst [vmem:[#allocation2 + $0x99] sm:$0x1] %v483
    %486 = vst [vmem:[#allocation2 + $0xa0] sm:$0x1] %v483
    %s487 = sadd.s32 %s469, 3
    %s488 = sld [smem:[#allocation4 + %s487]]
    %s489 = scalar_lea.vmem [#allocation6], %s488
    %v490 = vld [vmem:[%s489] sm:$0x1]
    %491 = vst [vmem:[#allocation2 + $0x93] sm:$0x1] %v490
    %492 = vst [vmem:[#allocation2 + $0x9a] sm:$0x1] %v490
    %493 = vst [vmem:[#allocation2 + $0xa1] sm:$0x1] %v490
    %s494 = sadd.s32 %s469, 4
    %s495 = sld [smem:[#allocation4 + %s494]]
    %s496 = scalar_lea.vmem [#allocation6], %s495
    %v497 = vld [vmem:[%s496] sm:$0x1]
    %498 = vst [vmem:[#allocation2 + $0x94] sm:$0x1] %v497
    %499 = vst [vmem:[#allocation2 + $0x9b] sm:$0x1] %v497
    %500 = vst [vmem:[#allocation2 + $0xa2] sm:$0x1] %v497
    %s501 = sadd.s32 %s469, 5
    %s502 = sld [smem:[#allocation4 + %s501]]
    %s503 = scalar_lea.vmem [#allocation6], %s502
    %v504 = vld [vmem:[%s503] sm:$0x1]
    %505 = vst [vmem:[#allocation2 + $0x95] sm:$0x1] %v504
    %506 = vst [vmem:[#allocation2 + $0x9c] sm:$0x1] %v504
    %507 = vst [vmem:[#allocation2 + $0xa3] sm:$0x1] %v504
    %s508 = sadd.s32 %s469, 6
    %s509 = sld [smem:[#allocation4 + %s508]]
    %s510 = scalar_lea.vmem [#allocation6], %s509
    %v511 = vld [vmem:[%s510] sm:$0x1]
    %512 = vst [vmem:[#allocation2 + $0x96] sm:$0x1] %v511
    %513 = vst [vmem:[#allocation2 + $0x9d] sm:$0x1] %v511
    %514 = vst [vmem:[#allocation2 + $0xa4] sm:$0x1] %v511
    %s515 = sadd.s32 %s469, 7
    %s516 = sld [smem:[#allocation4 + %s515]]
    %s517 = scalar_lea.vmem [#allocation6], %s516
    %v518 = vld [vmem:[%s517] sm:$0x1]
    %519 = vst [vmem:[#allocation2 + $0x97] sm:$0x1] %v518
    %520 = vst [vmem:[#allocation2 + $0x9e] sm:$0x1] %v518
    %521 = vst [vmem:[#allocation2 + $0xa5] sm:$0x1] %v518
    %s522 = sadd.s32 %s469, 8
    %s523 = sld [smem:[#allocation4 + %s522]]
    %s524 = scalar_lea.vmem [#allocation6], %s523
    %v525 = vld [vmem:[%s524] sm:$0x1]
    %526 = vst [vmem:[#allocation2 + $0xa8] sm:$0x1] %v525
    %527 = vst [vmem:[#allocation2 + $0x9f] sm:$0x1] %v525
    %528 = vst [vmem:[#allocation2 + $0xa6] sm:$0x1] %v525
    %s529 = sadd.s32 %s469, 9
    %s530 = sld [smem:[#allocation4 + %s529]]
    %s531 = scalar_lea.vmem [#allocation6], %s530
    %v532 = vld [vmem:[%s531] sm:$0x1]
    %533 = vst [vmem:[#allocation2 + $0xa9] sm:$0x1] %v532
    %534 = vst [vmem:[#allocation2 + $0xb0] sm:$0x1] %v532
    %535 = vst [vmem:[#allocation2 + $0xa7] sm:$0x1] %v532
    %s536 = sadd.s32 %s469, 10
    %s537 = sld [smem:[#allocation4 + %s536]]
    %s538 = scalar_lea.vmem [#allocation6], %s537
    %v539 = vld [vmem:[%s538] sm:$0x1]
    %540 = vst [vmem:[#allocation2 + $0xaa] sm:$0x1] %v539
    %541 = vst [vmem:[#allocation2 + $0xb1] sm:$0x1] %v539
    %542 = vst [vmem:[#allocation2 + $0xb8] sm:$0x1] %v539
    %s543 = sadd.s32 %s469, 11
    %s544 = sld [smem:[#allocation4 + %s543]]
    %s545 = scalar_lea.vmem [#allocation6], %s544
    %v546 = vld [vmem:[%s545] sm:$0x1]
    %547 = vst [vmem:[#allocation2 + $0xab] sm:$0x1] %v546
    %548 = vst [vmem:[#allocation2 + $0xb2] sm:$0x1] %v546
    %549 = vst [vmem:[#allocation2 + $0xb9] sm:$0x1] %v546
    %s550 = sadd.s32 %s469, 12
    %s551 = sld [smem:[#allocation4 + %s550]]
    %s552 = scalar_lea.vmem [#allocation6], %s551
    %v553 = vld [vmem:[%s552] sm:$0x1]
    %554 = vst [vmem:[#allocation2 + $0xac] sm:$0x1] %v553
    %555 = vst [vmem:[#allocation2 + $0xb3] sm:$0x1] %v553
    %556 = vst [vmem:[#allocation2 + $0xba] sm:$0x1] %v553
    %s557 = sadd.s32 %s469, 13
    %s558 = sld [smem:[#allocation4 + %s557]]
    %s559 = scalar_lea.vmem [#allocation6], %s558
    %v560 = vld [vmem:[%s559] sm:$0x1]
    %561 = vst [vmem:[#allocation2 + $0xad] sm:$0x1] %v560
    %562 = vst [vmem:[#allocation2 + $0xb4] sm:$0x1] %v560
    %563 = vst [vmem:[#allocation2 + $0xbb] sm:$0x1] %v560
    %s564 = sadd.s32 %s469, 14
    %s565 = sld [smem:[#allocation4 + %s564]]
    %s566 = scalar_lea.vmem [#allocation6], %s565
    %v567 = vld [vmem:[%s566] sm:$0x1]
    %568 = vst [vmem:[#allocation2 + $0xb5] sm:$0x1] %v567
    %569 = vst [vmem:[#allocation2 + $0xbc] sm:$0x1] %v567
    %s570 = sadd.s32 %s469, 15
    %s571 = sld [smem:[#allocation4 + %s570]]
    %s572 = scalar_lea.vmem [#allocation6], %s571
    %v573 = vld [vmem:[%s572] sm:$0x1]
    %574 = vst [vmem:[#allocation2 + $0xbd] sm:$0x1] %v573
    %s575 = sadd.s32 %s147, 4
    %s576 = smul.u32 %s575, 128
    %s577 = sld [smem:[#allocation4 + %s576]]
    %s578 = scalar_lea.vmem [#allocation6], %s577
    %v579 = vld [vmem:[%s578] sm:$0x1]
    %580 = vst [vmem:[#allocation2 + $0xc0] sm:$0x1] %v579
    %s581 = sadd.s32 %s576, 1
    %s582 = sld [smem:[#allocation4 + %s581]]
    %s583 = scalar_lea.vmem [#allocation6], %s582
    %v584 = vld [vmem:[%s583] sm:$0x1]
    %585 = vst [vmem:[#allocation2 + $0xc1] sm:$0x1] %v584
    %586 = vst [vmem:[#allocation2 + $0xc8] sm:$0x1] %v584
    %s587 = sadd.s32 %s576, 2
    %s588 = sld [smem:[#allocation4 + %s587]]
    %s589 = scalar_lea.vmem [#allocation6], %s588
    %v590 = vld [vmem:[%s589] sm:$0x1]
    %591 = vst [vmem:[#allocation2 + $0xc2] sm:$0x1] %v590
    %592 = vst [vmem:[#allocation2 + $0xc9] sm:$0x1] %v590
    %593 = vst [vmem:[#allocation2 + $0xd0] sm:$0x1] %v590
    %s594 = sadd.s32 %s576, 3
    %s595 = sld [smem:[#allocation4 + %s594]]
    %s596 = scalar_lea.vmem [#allocation6], %s595
    %v597 = vld [vmem:[%s596] sm:$0x1]
    %598 = vst [vmem:[#allocation2 + $0xc3] sm:$0x1] %v597
    %599 = vst [vmem:[#allocation2 + $0xca] sm:$0x1] %v597
    %600 = vst [vmem:[#allocation2 + $0xd1] sm:$0x1] %v597
    %s601 = sadd.s32 %s576, 4
    %s602 = sld [smem:[#allocation4 + %s601]]
    %s603 = scalar_lea.vmem [#allocation6], %s602
    %v604 = vld [vmem:[%s603] sm:$0x1]
    %605 = vst [vmem:[#allocation2 + $0xc4] sm:$0x1] %v604
    %606 = vst [vmem:[#allocation2 + $0xcb] sm:$0x1] %v604
    %607 = vst [vmem:[#allocation2 + $0xd2] sm:$0x1] %v604
    %s608 = sadd.s32 %s576, 5
    %s609 = sld [smem:[#allocation4 + %s608]]
    %s610 = scalar_lea.vmem [#allocation6], %s609
    %v611 = vld [vmem:[%s610] sm:$0x1]
    %612 = vst [vmem:[#allocation2 + $0xc5] sm:$0x1] %v611
    %613 = vst [vmem:[#allocation2 + $0xcc] sm:$0x1] %v611
    %614 = vst [vmem:[#allocation2 + $0xd3] sm:$0x1] %v611
    %s615 = sadd.s32 %s576, 6
    %s616 = sld [smem:[#allocation4 + %s615]]
    %s617 = scalar_lea.vmem [#allocation6], %s616
    %v618 = vld [vmem:[%s617] sm:$0x1]
    %619 = vst [vmem:[#allocation2 + $0xc6] sm:$0x1] %v618
    %620 = vst [vmem:[#allocation2 + $0xcd] sm:$0x1] %v618
    %621 = vst [vmem:[#allocation2 + $0xd4] sm:$0x1] %v618
    %s622 = sadd.s32 %s576, 7
    %s623 = sld [smem:[#allocation4 + %s622]]
    %s624 = scalar_lea.vmem [#allocation6], %s623
    %v625 = vld [vmem:[%s624] sm:$0x1]
    %626 = vst [vmem:[#allocation2 + $0xc7] sm:$0x1] %v625
    %627 = vst [vmem:[#allocation2 + $0xce] sm:$0x1] %v625
    %628 = vst [vmem:[#allocation2 + $0xd5] sm:$0x1] %v625
    %s629 = sadd.s32 %s576, 8
    %s630 = sld [smem:[#allocation4 + %s629]]
    %s631 = scalar_lea.vmem [#allocation6], %s630
    %v632 = vld [vmem:[%s631] sm:$0x1]
    %633 = vst [vmem:[#allocation2 + $0xd8] sm:$0x1] %v632
    %634 = vst [vmem:[#allocation2 + $0xcf] sm:$0x1] %v632
    %635 = vst [vmem:[#allocation2 + $0xd6] sm:$0x1] %v632
    %s636 = sadd.s32 %s576, 9
    %s637 = sld [smem:[#allocation4 + %s636]]
    %s638 = scalar_lea.vmem [#allocation6], %s637
    %v639 = vld [vmem:[%s638] sm:$0x1]
    %640 = vst [vmem:[#allocation2 + $0xd9] sm:$0x1] %v639
    %641 = vst [vmem:[#allocation2 + $0xe0] sm:$0x1] %v639
    %642 = vst [vmem:[#allocation2 + $0xd7] sm:$0x1] %v639
    %s643 = sadd.s32 %s576, 10
    %s644 = sld [smem:[#allocation4 + %s643]]
    %s645 = scalar_lea.vmem [#allocation6], %s644
    %v646 = vld [vmem:[%s645] sm:$0x1]
    %647 = vst [vmem:[#allocation2 + $0xda] sm:$0x1] %v646
    %648 = vst [vmem:[#allocation2 + $0xe1] sm:$0x1] %v646
    %649 = vst [vmem:[#allocation2 + $0xe8] sm:$0x1] %v646
    %s650 = sadd.s32 %s576, 11
    %s651 = sld [smem:[#allocation4 + %s650]]
    %s652 = scalar_lea.vmem [#allocation6], %s651
    %v653 = vld [vmem:[%s652] sm:$0x1]
    %654 = vst [vmem:[#allocation2 + $0xdb] sm:$0x1] %v653
    %655 = vst [vmem:[#allocation2 + $0xe2] sm:$0x1] %v653
    %656 = vst [vmem:[#allocation2 + $0xe9] sm:$0x1] %v653
    %s657 = sadd.s32 %s576, 12
    %s658 = sld [smem:[#allocation4 + %s657]]
    %s659 = scalar_lea.vmem [#allocation6], %s658
    %v660 = vld [vmem:[%s659] sm:$0x1]
    %661 = vst [vmem:[#allocation2 + $0xdc] sm:$0x1] %v660
    %662 = vst [vmem:[#allocation2 + $0xe3] sm:$0x1] %v660
    %663 = vst [vmem:[#allocation2 + $0xea] sm:$0x1] %v660
    %s664 = sadd.s32 %s576, 13
    %s665 = sld [smem:[#allocation4 + %s664]]
    %s666 = scalar_lea.vmem [#allocation6], %s665
    %v667 = vld [vmem:[%s666] sm:$0x1]
    %668 = vst [vmem:[#allocation2 + $0xdd] sm:$0x1] %v667
    %669 = vst [vmem:[#allocation2 + $0xe4] sm:$0x1] %v667
    %670 = vst [vmem:[#allocation2 + $0xeb] sm:$0x1] %v667
    %s671 = sadd.s32 %s576, 14
    %s672 = sld [smem:[#allocation4 + %s671]]
    %s673 = scalar_lea.vmem [#allocation6], %s672
    %v674 = vld [vmem:[%s673] sm:$0x1]
    %675 = vst [vmem:[#allocation2 + $0xe5] sm:$0x1] %v674
    %676 = vst [vmem:[#allocation2 + $0xec] sm:$0x1] %v674
    %s677 = sadd.s32 %s576, 15
    %s678 = sld [smem:[#allocation4 + %s677]]
    %s679 = scalar_lea.vmem [#allocation6], %s678
    %v680 = vld [vmem:[%s679] sm:$0x1]
    %681 = vst [vmem:[#allocation2 + $0xed] sm:$0x1] %v680
    %s682 = sadd.s32 %s147, 5
    %s683 = smul.u32 %s682, 128
    %s684 = sld [smem:[#allocation4 + %s683]]
    %s685 = scalar_lea.vmem [#allocation6], %s684
    %v686 = vld [vmem:[%s685] sm:$0x1]
    %687 = vst [vmem:[#allocation2 + $0xf0] sm:$0x1] %v686
    %s688 = sadd.s32 %s683, 1
    %s689 = sld [smem:[#allocation4 + %s688]]
    %s690 = scalar_lea.vmem [#allocation6], %s689
    %v691 = vld [vmem:[%s690] sm:$0x1]
    %692 = vst [vmem:[#allocation2 + $0xf1] sm:$0x1] %v691
    %693 = vst [vmem:[#allocation2 + $0xf8] sm:$0x1] %v691
    %s694 = sadd.s32 %s683, 2
    %s695 = sld [smem:[#allocation4 + %s694]]
    %s696 = scalar_lea.vmem [#allocation6], %s695
    %v697 = vld [vmem:[%s696] sm:$0x1]
    %698 = vst [vmem:[#allocation2 + $0xf2] sm:$0x1] %v697
    %699 = vst [vmem:[#allocation2 + $0xf9] sm:$0x1] %v697
    %700 = vst [vmem:[#allocation2 + $0x100] sm:$0x1] %v697
    %s701 = sadd.s32 %s683, 3
    %s702 = sld [smem:[#allocation4 + %s701]]
    %s703 = scalar_lea.vmem [#allocation6], %s702
    %v704 = vld [vmem:[%s703] sm:$0x1]
    %705 = vst [vmem:[#allocation2 + $0xf3] sm:$0x1] %v704
    %706 = vst [vmem:[#allocation2 + $0xfa] sm:$0x1] %v704
    %707 = vst [vmem:[#allocation2 + $0x101] sm:$0x1] %v704
    %s708 = sadd.s32 %s683, 4
    %s709 = sld [smem:[#allocation4 + %s708]]
    %s710 = scalar_lea.vmem [#allocation6], %s709
    %v711 = vld [vmem:[%s710] sm:$0x1]
    %712 = vst [vmem:[#allocation2 + $0xf4] sm:$0x1] %v711
    %713 = vst [vmem:[#allocation2 + $0xfb] sm:$0x1] %v711
    %714 = vst [vmem:[#allocation2 + $0x102] sm:$0x1] %v711
    %s715 = sadd.s32 %s683, 5
    %s716 = sld [smem:[#allocation4 + %s715]]
    %s717 = scalar_lea.vmem [#allocation6], %s716
    %v718 = vld [vmem:[%s717] sm:$0x1]
    %719 = vst [vmem:[#allocation2 + $0xf5] sm:$0x1] %v718
    %720 = vst [vmem:[#allocation2 + $0xfc] sm:$0x1] %v718
    %721 = vst [vmem:[#allocation2 + $0x103] sm:$0x1] %v718
    %s722 = sadd.s32 %s683, 6
    %s723 = sld [smem:[#allocation4 + %s722]]
    %s724 = scalar_lea.vmem [#allocation6], %s723
    %v725 = vld [vmem:[%s724] sm:$0x1]
    %726 = vst [vmem:[#allocation2 + $0xf6] sm:$0x1] %v725
    %727 = vst [vmem:[#allocation2 + $0xfd] sm:$0x1] %v725
    %728 = vst [vmem:[#allocation2 + $0x104] sm:$0x1] %v725
    %s729 = sadd.s32 %s683, 7
    %s730 = sld [smem:[#allocation4 + %s729]]
    %s731 = scalar_lea.vmem [#allocation6], %s730
    %v732 = vld [vmem:[%s731] sm:$0x1]
    %733 = vst [vmem:[#allocation2 + $0xf7] sm:$0x1] %v732
    %734 = vst [vmem:[#allocation2 + $0xfe] sm:$0x1] %v732
    %735 = vst [vmem:[#allocation2 + $0x105] sm:$0x1] %v732
    %s736 = sadd.s32 %s683, 8
    %s737 = sld [smem:[#allocation4 + %s736]]
    %s738 = scalar_lea.vmem [#allocation6], %s737
    %v739 = vld [vmem:[%s738] sm:$0x1]
    %740 = vst [vmem:[#allocation2 + $0x108] sm:$0x1] %v739
    %741 = vst [vmem:[#allocation2 + $0xff] sm:$0x1] %v739
    %742 = vst [vmem:[#allocation2 + $0x106] sm:$0x1] %v739
    %s743 = sadd.s32 %s683, 9
    %s744 = sld [smem:[#allocation4 + %s743]]
    %s745 = scalar_lea.vmem [#allocation6], %s744
    %v746 = vld [vmem:[%s745] sm:$0x1]
    %747 = vst [vmem:[#allocation2 + $0x109] sm:$0x1] %v746
    %748 = vst [vmem:[#allocation2 + $0x110] sm:$0x1] %v746
    %749 = vst [vmem:[#allocation2 + $0x107] sm:$0x1] %v746
    %s750 = sadd.s32 %s683, 10
    %s751 = sld [smem:[#allocation4 + %s750]]
    %s752 = scalar_lea.vmem [#allocation6], %s751
    %v753 = vld [vmem:[%s752] sm:$0x1]
    %754 = vst [vmem:[#allocation2 + $0x10a] sm:$0x1] %v753
    %755 = vst [vmem:[#allocation2 + $0x111] sm:$0x1] %v753
    %756 = vst [vmem:[#allocation2 + $0x118] sm:$0x1] %v753
    %s757 = sadd.s32 %s683, 11
    %s758 = sld [smem:[#allocation4 + %s757]]
    %s759 = scalar_lea.vmem [#allocation6], %s758
    %v760 = vld [vmem:[%s759] sm:$0x1]
    %761 = vst [vmem:[#allocation2 + $0x10b] sm:$0x1] %v760
    %762 = vst [vmem:[#allocation2 + $0x112] sm:$0x1] %v760
    %763 = vst [vmem:[#allocation2 + $0x119] sm:$0x1] %v760
    %s764 = sadd.s32 %s683, 12
    %s765 = sld [smem:[#allocation4 + %s764]]
    %s766 = scalar_lea.vmem [#allocation6], %s765
    %v767 = vld [vmem:[%s766] sm:$0x1]
    %768 = vst [vmem:[#allocation2 + $0x10c] sm:$0x1] %v767
    %769 = vst [vmem:[#allocation2 + $0x113] sm:$0x1] %v767
    %770 = vst [vmem:[#allocation2 + $0x11a] sm:$0x1] %v767
    %s771 = sadd.s32 %s683, 13
    %s772 = sld [smem:[#allocation4 + %s771]]
    %s773 = scalar_lea.vmem [#allocation6], %s772
    %v774 = vld [vmem:[%s773] sm:$0x1]
    %775 = vst [vmem:[#allocation2 + $0x10d] sm:$0x1] %v774
    %776 = vst [vmem:[#allocation2 + $0x114] sm:$0x1] %v774
    %777 = vst [vmem:[#allocation2 + $0x11b] sm:$0x1] %v774
    %s778 = sadd.s32 %s683, 14
    %s779 = sld [smem:[#allocation4 + %s778]]
    %s780 = scalar_lea.vmem [#allocation6], %s779
    %v781 = vld [vmem:[%s780] sm:$0x1]
    %782 = vst [vmem:[#allocation2 + $0x115] sm:$0x1] %v781
    %783 = vst [vmem:[#allocation2 + $0x11c] sm:$0x1] %v781
    %s784 = sadd.s32 %s683, 15
    %s785 = sld [smem:[#allocation4 + %s784]]
    %s786 = scalar_lea.vmem [#allocation6], %s785
    %v787 = vld [vmem:[%s786] sm:$0x1]
    %788 = vst [vmem:[#allocation2 + $0x11d] sm:$0x1] %v787
    %s789 = sadd.s32 %s147, 6
    %s790 = smul.u32 %s789, 128
    %s791 = sld [smem:[#allocation4 + %s790]]
    %s792 = scalar_lea.vmem [#allocation6], %s791
    %v793 = vld [vmem:[%s792] sm:$0x1]
    %794 = vst [vmem:[#allocation2 + $0x120] sm:$0x1] %v793
    %s795 = sadd.s32 %s790, 1
    %s796 = sld [smem:[#allocation4 + %s795]]
    %s797 = scalar_lea.vmem [#allocation6], %s796
    %v798 = vld [vmem:[%s797] sm:$0x1]
    %799 = vst [vmem:[#allocation2 + $0x121] sm:$0x1] %v798
    %800 = vst [vmem:[#allocation2 + $0x128] sm:$0x1] %v798
    %s801 = sadd.s32 %s790, 2
    %s802 = sld [smem:[#allocation4 + %s801]]
    %s803 = scalar_lea.vmem [#allocation6], %s802
    %v804 = vld [vmem:[%s803] sm:$0x1]
    %805 = vst [vmem:[#allocation2 + $0x122] sm:$0x1] %v804
    %806 = vst [vmem:[#allocation2 + $0x129] sm:$0x1] %v804
    %807 = vst [vmem:[#allocation2 + $0x130] sm:$0x1] %v804
    %s808 = sadd.s32 %s790, 3
    %s809 = sld [smem:[#allocation4 + %s808]]
    %s810 = scalar_lea.vmem [#allocation6], %s809
    %v811 = vld [vmem:[%s810] sm:$0x1]
    %812 = vst [vmem:[#allocation2 + $0x123] sm:$0x1] %v811
    %813 = vst [vmem:[#allocation2 + $0x12a] sm:$0x1] %v811
    %814 = vst [vmem:[#allocation2 + $0x131] sm:$0x1] %v811
    %s815 = sadd.s32 %s790, 4
    %s816 = sld [smem:[#allocation4 + %s815]]
    %s817 = scalar_lea.vmem [#allocation6], %s816
    %v818 = vld [vmem:[%s817] sm:$0x1]
    %819 = vst [vmem:[#allocation2 + $0x124] sm:$0x1] %v818
    %820 = vst [vmem:[#allocation2 + $0x12b] sm:$0x1] %v818
    %821 = vst [vmem:[#allocation2 + $0x132] sm:$0x1] %v818
    %s822 = sadd.s32 %s790, 5
    %s823 = sld [smem:[#allocation4 + %s822]]
    %s824 = scalar_lea.vmem [#allocation6], %s823
    %v825 = vld [vmem:[%s824] sm:$0x1]
    %826 = vst [vmem:[#allocation2 + $0x125] sm:$0x1] %v825
    %827 = vst [vmem:[#allocation2 + $0x12c] sm:$0x1] %v825
    %828 = vst [vmem:[#allocation2 + $0x133] sm:$0x1] %v825
    %s829 = sadd.s32 %s790, 6
    %s830 = sld [smem:[#allocation4 + %s829]]
    %s831 = scalar_lea.vmem [#allocation6], %s830
    %v832 = vld [vmem:[%s831] sm:$0x1]
    %833 = vst [vmem:[#allocation2 + $0x126] sm:$0x1] %v832
    %834 = vst [vmem:[#allocation2 + $0x12d] sm:$0x1] %v832
    %835 = vst [vmem:[#allocation2 + $0x134] sm:$0x1] %v832
    %s836 = sadd.s32 %s790, 7
    %s837 = sld [smem:[#allocation4 + %s836]]
    %s838 = scalar_lea.vmem [#allocation6], %s837
    %v839 = vld [vmem:[%s838] sm:$0x1]
    %840 = vst [vmem:[#allocation2 + $0x127] sm:$0x1] %v839
    %841 = vst [vmem:[#allocation2 + $0x12e] sm:$0x1] %v839
    %842 = vst [vmem:[#allocation2 + $0x135] sm:$0x1] %v839
    %s843 = sadd.s32 %s790, 8
    %s844 = sld [smem:[#allocation4 + %s843]]
    %s845 = scalar_lea.vmem [#allocation6], %s844
    %v846 = vld [vmem:[%s845] sm:$0x1]
    %847 = vst [vmem:[#allocation2 + $0x138] sm:$0x1] %v846
    %848 = vst [vmem:[#allocation2 + $0x12f] sm:$0x1] %v846
    %849 = vst [vmem:[#allocation2 + $0x136] sm:$0x1] %v846
    %s850 = sadd.s32 %s790, 9
    %s851 = sld [smem:[#allocation4 + %s850]]
    %s852 = scalar_lea.vmem [#allocation6], %s851
    %v853 = vld [vmem:[%s852] sm:$0x1]
    %854 = vst [vmem:[#allocation2 + $0x139] sm:$0x1] %v853
    %855 = vst [vmem:[#allocation2 + $0x140] sm:$0x1] %v853
    %856 = vst [vmem:[#allocation2 + $0x137] sm:$0x1] %v853
    %s857 = sadd.s32 %s790, 10
    %s858 = sld [smem:[#allocation4 + %s857]]
    %s859 = scalar_lea.vmem [#allocation6], %s858
    %v860 = vld [vmem:[%s859] sm:$0x1]
    %861 = vst [vmem:[#allocation2 + $0x13a] sm:$0x1] %v860
    %862 = vst [vmem:[#allocation2 + $0x141] sm:$0x1] %v860
    %863 = vst [vmem:[#allocation2 + $0x148] sm:$0x1] %v860
    %s864 = sadd.s32 %s790, 11
    %s865 = sld [smem:[#allocation4 + %s864]]
    %s866 = scalar_lea.vmem [#allocation6], %s865
    %v867 = vld [vmem:[%s866] sm:$0x1]
    %868 = vst [vmem:[#allocation2 + $0x13b] sm:$0x1] %v867
    %869 = vst [vmem:[#allocation2 + $0x142] sm:$0x1] %v867
    %870 = vst [vmem:[#allocation2 + $0x149] sm:$0x1] %v867
    %s871 = sadd.s32 %s790, 12
    %s872 = sld [smem:[#allocation4 + %s871]]
    %s873 = scalar_lea.vmem [#allocation6], %s872
    %v874 = vld [vmem:[%s873] sm:$0x1]
    %875 = vst [vmem:[#allocation2 + $0x13c] sm:$0x1] %v874
    %876 = vst [vmem:[#allocation2 + $0x143] sm:$0x1] %v874
    %877 = vst [vmem:[#allocation2 + $0x14a] sm:$0x1] %v874
    %s878 = sadd.s32 %s790, 13
    %s879 = sld [smem:[#allocation4 + %s878]]
    %s880 = scalar_lea.vmem [#allocation6], %s879
    %v881 = vld [vmem:[%s880] sm:$0x1]
    %882 = vst [vmem:[#allocation2 + $0x13d] sm:$0x1] %v881
    %883 = vst [vmem:[#allocation2 + $0x144] sm:$0x1] %v881
    %884 = vst [vmem:[#allocation2 + $0x14b] sm:$0x1] %v881
    %s885 = sadd.s32 %s790, 14
    %s886 = sld [smem:[#allocation4 + %s885]]
    %s887 = scalar_lea.vmem [#allocation6], %s886
    %v888 = vld [vmem:[%s887] sm:$0x1]
    %889 = vst [vmem:[#allocation2 + $0x145] sm:$0x1] %v888
    %890 = vst [vmem:[#allocation2 + $0x14c] sm:$0x1] %v888
    %s891 = sadd.s32 %s790, 15
    %s892 = sld [smem:[#allocation4 + %s891]]
    %s893 = scalar_lea.vmem [#allocation6], %s892
    %v894 = vld [vmem:[%s893] sm:$0x1]
    %895 = vst [vmem:[#allocation2 + $0x14d] sm:$0x1] %v894
    %s896 = sadd.s32 %s147, 7
    %s897 = smul.u32 %s896, 128
    %s898 = sld [smem:[#allocation4 + %s897]]
    %s899 = scalar_lea.vmem [#allocation6], %s898
    %v900 = vld [vmem:[%s899] sm:$0x1]
    %901 = vst [vmem:[#allocation2 + $0x150] sm:$0x1] %v900
    %s902 = sadd.s32 %s897, 1
    %s903 = sld [smem:[#allocation4 + %s902]]
    %s904 = scalar_lea.vmem [#allocation6], %s903
    %v905 = vld [vmem:[%s904] sm:$0x1]
    %906 = vst [vmem:[#allocation2 + $0x151] sm:$0x1] %v905
    %907 = vst [vmem:[#allocation2 + $0x158] sm:$0x1] %v905
    %s908 = sadd.s32 %s897, 2
    %s909 = sld [smem:[#allocation4 + %s908]]
    %s910 = scalar_lea.vmem [#allocation6], %s909
    %v911 = vld [vmem:[%s910] sm:$0x1]
    %912 = vst [vmem:[#allocation2 + $0x152] sm:$0x1] %v911
    %913 = vst [vmem:[#allocation2 + $0x159] sm:$0x1] %v911
    %914 = vst [vmem:[#allocation2 + $0x160] sm:$0x1] %v911
    %s915 = sadd.s32 %s897, 3
    %s916 = sld [smem:[#allocation4 + %s915]]
    %s917 = scalar_lea.vmem [#allocation6], %s916
    %v918 = vld [vmem:[%s917] sm:$0x1]
    %919 = vst [vmem:[#allocation2 + $0x153] sm:$0x1] %v918
    %920 = vst [vmem:[#allocation2 + $0x15a] sm:$0x1] %v918
    %921 = vst [vmem:[#allocation2 + $0x161] sm:$0x1] %v918
    %s922 = sadd.s32 %s897, 4
    %s923 = sld [smem:[#allocation4 + %s922]]
    %s924 = scalar_lea.vmem [#allocation6], %s923
    %v925 = vld [vmem:[%s924] sm:$0x1]
    %926 = vst [vmem:[#allocation2 + $0x154] sm:$0x1] %v925
    %927 = vst [vmem:[#allocation2 + $0x15b] sm:$0x1] %v925
    %928 = vst [vmem:[#allocation2 + $0x162] sm:$0x1] %v925
    %s929 = sadd.s32 %s897, 5
    %s930 = sld [smem:[#allocation4 + %s929]]
    %s931 = scalar_lea.vmem [#allocation6], %s930
    %v932 = vld [vmem:[%s931] sm:$0x1]
    %933 = vst [vmem:[#allocation2 + $0x155] sm:$0x1] %v932
    %934 = vst [vmem:[#allocation2 + $0x15c] sm:$0x1] %v932
    %935 = vst [vmem:[#allocation2 + $0x163] sm:$0x1] %v932
    %s936 = sadd.s32 %s897, 6
    %s937 = sld [smem:[#allocation4 + %s936]]
    %s938 = scalar_lea.vmem [#allocation6], %s937
    %v939 = vld [vmem:[%s938] sm:$0x1]
    %940 = vst [vmem:[#allocation2 + $0x156] sm:$0x1] %v939
    %941 = vst [vmem:[#allocation2 + $0x15d] sm:$0x1] %v939
    %942 = vst [vmem:[#allocation2 + $0x164] sm:$0x1] %v939
    %s943 = sadd.s32 %s897, 7
    %s944 = sld [smem:[#allocation4 + %s943]]
    %s945 = scalar_lea.vmem [#allocation6], %s944
    %v946 = vld [vmem:[%s945] sm:$0x1]
    %947 = vst [vmem:[#allocation2 + $0x157] sm:$0x1] %v946
    %948 = vst [vmem:[#allocation2 + $0x15e] sm:$0x1] %v946
    %949 = vst [vmem:[#allocation2 + $0x165] sm:$0x1] %v946
    %s950 = sadd.s32 %s897, 8
    %s951 = sld [smem:[#allocation4 + %s950]]
    %s952 = scalar_lea.vmem [#allocation6], %s951
    %v953 = vld [vmem:[%s952] sm:$0x1]
    %954 = vst [vmem:[#allocation2 + $0x168] sm:$0x1] %v953
    %955 = vst [vmem:[#allocation2 + $0x15f] sm:$0x1] %v953
    %956 = vst [vmem:[#allocation2 + $0x166] sm:$0x1] %v953
    %s957 = sadd.s32 %s897, 9
    %s958 = sld [smem:[#allocation4 + %s957]]
    %s959 = scalar_lea.vmem [#allocation6], %s958
    %v960 = vld [vmem:[%s959] sm:$0x1]
    %961 = vst [vmem:[#allocation2 + $0x169] sm:$0x1] %v960
    %962 = vst [vmem:[#allocation2 + $0x170] sm:$0x1] %v960
    %963 = vst [vmem:[#allocation2 + $0x167] sm:$0x1] %v960
    %s964 = sadd.s32 %s897, 10
    %s965 = sld [smem:[#allocation4 + %s964]]
    %s966 = scalar_lea.vmem [#allocation6], %s965
    %v967 = vld [vmem:[%s966] sm:$0x1]
    %968 = vst [vmem:[#allocation2 + $0x16a] sm:$0x1] %v967
    %969 = vst [vmem:[#allocation2 + $0x171] sm:$0x1] %v967
    %970 = vst [vmem:[#allocation2 + $0x178] sm:$0x1] %v967
    %s971 = sadd.s32 %s897, 11
    %s972 = sld [smem:[#allocation4 + %s971]]
    %s973 = scalar_lea.vmem [#allocation6], %s972
    %v974 = vld [vmem:[%s973] sm:$0x1]
    %975 = vst [vmem:[#allocation2 + $0x16b] sm:$0x1] %v974
    %976 = vst [vmem:[#allocation2 + $0x172] sm:$0x1] %v974
    %977 = vst [vmem:[#allocation2 + $0x179] sm:$0x1] %v974
    %s978 = sadd.s32 %s897, 12
    %s979 = sld [smem:[#allocation4 + %s978]]
    %s980 = scalar_lea.vmem [#allocation6], %s979
    %v981 = vld [vmem:[%s980] sm:$0x1]
    %982 = vst [vmem:[#allocation2 + $0x16c] sm:$0x1] %v981
    %983 = vst [vmem:[#allocation2 + $0x173] sm:$0x1] %v981
    %984 = vst [vmem:[#allocation2 + $0x17a] sm:$0x1] %v981
    %s985 = sadd.s32 %s897, 13
    %s986 = sld [smem:[#allocation4 + %s985]]
    %s987 = scalar_lea.vmem [#allocation6], %s986
    %v988 = vld [vmem:[%s987] sm:$0x1]
    %989 = vst [vmem:[#allocation2 + $0x16d] sm:$0x1] %v988
    %990 = vst [vmem:[#allocation2 + $0x174] sm:$0x1] %v988
    %991 = vst [vmem:[#allocation2 + $0x17b] sm:$0x1] %v988
    %s992 = sadd.s32 %s897, 14
    %s993 = sld [smem:[#allocation4 + %s992]]
    %s994 = scalar_lea.vmem [#allocation6], %s993
    %v995 = vld [vmem:[%s994] sm:$0x1]
    %996 = vst [vmem:[#allocation2 + $0x175] sm:$0x1] %v995
    %997 = vst [vmem:[#allocation2 + $0x17c] sm:$0x1] %v995
    %s998 = sadd.s32 %s897, 15
    %s999 = sld [smem:[#allocation4 + %s998]]
    %s1000 = scalar_lea.vmem [#allocation6], %s999
    %v1001 = vld [vmem:[%s1000] sm:$0x1]
    %1002 = vst [vmem:[#allocation2 + $0x17d] sm:$0x1] %v1001
    %v1003 = vld [vmem:[#allocation2] sm:$0xff]
    %v1004 = vld [vmem:[#allocation2 + $0x8] sm:$0xff]
    %v1005 = vld [vmem:[#allocation2 + $0x10] sm:$0xff]
    %v1006 = vld [vmem:[#allocation2 + $0x18] sm:$0xff]
    %v1007 = vld [vmem:[#allocation2 + $0x20] sm:$0xff]
    %v1008 = vld [vmem:[#allocation2 + $0x28] sm:$0xff]
    %v1009 = vld [vmem:[#allocation2 + $0x30] sm:$0xff]
    %v1010 = vld [vmem:[#allocation2 + $0x38] sm:$0xff]
    %v1011 = vld [vmem:[#allocation2 + $0x40] sm:$0xff]
    %v1012 = vld [vmem:[#allocation2 + $0x48] sm:$0xff]
    %v1013 = vld [vmem:[#allocation2 + $0x50] sm:$0xff]
    %v1014 = vld [vmem:[#allocation2 + $0x58] sm:$0xff]
    %v1015 = vld [vmem:[#allocation2 + $0x60] sm:$0xff]
    %v1016 = vld [vmem:[#allocation2 + $0x68] sm:$0xff]
    %v1017 = vld [vmem:[#allocation2 + $0x70] sm:$0xff]
    %v1018 = vld [vmem:[#allocation2 + $0x78] sm:$0xff]
    %v1019 = vld [vmem:[#allocation2 + $0x80] sm:$0xff]
    %v1020 = vld [vmem:[#allocation2 + $0x88] sm:$0xff]
    %v1021 = vld [vmem:[#allocation2 + $0x90] sm:$0xff]
    %v1022 = vld [vmem:[#allocation2 + $0x98] sm:$0xff]
    %v1023 = vld [vmem:[#allocation2 + $0xa0] sm:$0xff]
    %v1024 = vld [vmem:[#allocation2 + $0xa8] sm:$0xff]
    %v1025 = vld [vmem:[#allocation2 + $0xb0] sm:$0xff]
    %v1026 = vld [vmem:[#allocation2 + $0xb8] sm:$0xff]
    %v1027 = vld [vmem:[#allocation2 + $0xc0] sm:$0xff]
    %v1028 = vld [vmem:[#allocation2 + $0xc8] sm:$0xff]
    %v1029 = vld [vmem:[#allocation2 + $0xd0] sm:$0xff]
    %v1030 = vld [vmem:[#allocation2 + $0xd8] sm:$0xff]
    %v1031 = vld [vmem:[#allocation2 + $0xe0] sm:$0xff]
    %v1032 = vld [vmem:[#allocation2 + $0xe8] sm:$0xff]
    %v1033 = vld [vmem:[#allocation2 + $0xf0] sm:$0xff]
    %v1034 = vld [vmem:[#allocation2 + $0xf8] sm:$0xff]
    %v1035 = vld [vmem:[#allocation2 + $0x100] sm:$0xff]
    %v1036 = vld [vmem:[#allocation2 + $0x108] sm:$0xff]
    %v1037 = vld [vmem:[#allocation2 + $0x110] sm:$0xff]
    %v1038 = vld [vmem:[#allocation2 + $0x118] sm:$0xff]
    %v1039 = vld [vmem:[#allocation2 + $0x120] sm:$0xff]
    %v1040 = vld [vmem:[#allocation2 + $0x128] sm:$0xff]
    %v1041 = vld [vmem:[#allocation2 + $0x130] sm:$0xff]
    %v1042 = vld [vmem:[#allocation2 + $0x138] sm:$0xff]
    %v1043 = vld [vmem:[#allocation2 + $0x140] sm:$0xff]
    %v1044 = vld [vmem:[#allocation2 + $0x148] sm:$0xff]
    %v1045 = vld [vmem:[#allocation2 + $0x150] sm:$0xff]
    %v1046 = vld [vmem:[#allocation2 + $0x158] sm:$0xff]
    %v1047 = vld [vmem:[#allocation2 + $0x160] sm:$0xff]
    %v1048 = vld [vmem:[#allocation2 + $0x168] sm:$0xff]
    %v1049 = vld [vmem:[#allocation2 + $0x170] sm:$0xff]
    %v1050 = vld [vmem:[#allocation2 + $0x178] sm:$0xff]
    %v1051 = vld [vmem:[#allocation9] sm:$0xff]
    %v1052 = vld [vmem:[#allocation9 + $0x8] sm:$0xff]
    %v1053 = vld [vmem:[#allocation9 + $0x10] sm:$0xff]
    %v1054 = vld [vmem:[#allocation9 + $0x18] sm:$0xff]
    %v1055 = vld [vmem:[#allocation9 + $0x20] sm:$0xff]
    %v1056 = vld [vmem:[#allocation9 + $0x28] sm:$0xff]
    %v1057 = vld [vmem:[#allocation9 + $0x30] sm:$0xff]
    %v1058 = vld [vmem:[#allocation9 + $0x38] sm:$0xff]
    %v1059 = vld [vmem:[#allocation9 + $0x40] sm:$0xff]
    %v1060 = vld [vmem:[#allocation9 + $0x48] sm:$0xff]
    %v1061 = vld [vmem:[#allocation9 + $0x50] sm:$0xff]
    %v1062 = vld [vmem:[#allocation9 + $0x58] sm:$0xff]
    %v1063 = vld [vmem:[#allocation9 + $0x60] sm:$0xff]
    %v1064 = vld [vmem:[#allocation9 + $0x68] sm:$0xff]
    %v1065 = vld [vmem:[#allocation9 + $0x70] sm:$0xff]
    %v1066 = vld [vmem:[#allocation9 + $0x78] sm:$0xff]
    %v1067 = vld [vmem:[#allocation9 + $0x80] sm:$0xff]
    %v1068 = vld [vmem:[#allocation9 + $0x88] sm:$0xff]
    %v1069 = vld [vmem:[#allocation9 + $0x90] sm:$0xff]
    %v1070 = vld [vmem:[#allocation9 + $0x98] sm:$0xff]
    %v1071 = vld [vmem:[#allocation9 + $0xa0] sm:$0xff]
    %v1072 = vld [vmem:[#allocation9 + $0xa8] sm:$0xff]
    %v1073 = vld [vmem:[#allocation9 + $0xb0] sm:$0xff]
    %v1074 = vld [vmem:[#allocation9 + $0xb8] sm:$0xff]
    %v1075 = vld [vmem:[#allocation9 + $0xc0] sm:$0xff]
    %v1076 = vld [vmem:[#allocation9 + $0xc8] sm:$0xff]
    %v1077 = vld [vmem:[#allocation9 + $0xd0] sm:$0xff]
    %v1078 = vld [vmem:[#allocation9 + $0xd8] sm:$0xff]
    %v1079 = vld [vmem:[#allocation9 + $0xe0] sm:$0xff]
    %v1080 = vld [vmem:[#allocation9 + $0xe8] sm:$0xff]
    %v1081 = vld [vmem:[#allocation9 + $0xf0] sm:$0xff]
    %v1082 = vld [vmem:[#allocation9 + $0xf8] sm:$0xff]
    %v1083 = vld [vmem:[#allocation9 + $0x100] sm:$0xff]
    %v1084 = vld [vmem:[#allocation9 + $0x108] sm:$0xff]
    %v1085 = vld [vmem:[#allocation9 + $0x110] sm:$0xff]
    %v1086 = vld [vmem:[#allocation9 + $0x118] sm:$0xff]
    %v1087 = vld [vmem:[#allocation9 + $0x120] sm:$0xff]
    %v1088 = vld [vmem:[#allocation9 + $0x128] sm:$0xff]
    %v1089 = vld [vmem:[#allocation9 + $0x130] sm:$0xff]
    %v1090 = vld [vmem:[#allocation9 + $0x138] sm:$0xff]
    %v1091 = vld [vmem:[#allocation9 + $0x140] sm:$0xff]
    %v1092 = vld [vmem:[#allocation9 + $0x148] sm:$0xff]
    %v1093 = vld [vmem:[#allocation9 + $0x150] sm:$0xff]
    %v1094 = vld [vmem:[#allocation9 + $0x158] sm:$0xff]
    %v1095 = vld [vmem:[#allocation9 + $0x160] sm:$0xff]
    %v1096 = vld [vmem:[#allocation9 + $0x168] sm:$0xff]
    %v1097 = vld [vmem:[#allocation9 + $0x170] sm:$0xff]
    %v1098 = vld [vmem:[#allocation9 + $0x178] sm:$0xff]
    %v1099 = vld [vmem:[%s3] sm:$0x1]
    %v1101 = vlaneseq
    %v1102 = vshrl.u32 %v1101, 7
    %v1103 = vsub.s32 0, %v1102
    %v1104 = vrot.slane %v1099, %v1103
    %1106 = vmatprep.subr.mxu0 0.0
    %1107 = vmatpush1.msra.mxu0 %v1051
    %1108 = vmatprep.subr.mxu0 0.0
    %1109 = vmatpush1.msra.mxu0 %v1052
    %1110 = vmatprep.subr.mxu0 0.0
    %1111 = vmatpush1.msra.mxu0 %v1053
    %1112 = vmatprep.subr.mxu0 0.0
    %1113 = vmatpush1.msra.mxu0 %v1054
    %1114 = vmatprep.subr.mxu0 0.0
    %1115 = vmatpush1.msra.mxu0 %v1055
    %1116 = vmatprep.subr.mxu0 0.0
    %1117 = vmatpush1.msra.mxu0 %v1056
    %1118 = vmatprep.subr.mxu0 0.0
    %1119 = vmatpush1.msra.mxu0 %v1057
    %1120 = vmatprep.subr.mxu0 0.0
    %1121 = vmatpush1.msra.mxu0 %v1058
    %1122 = vmatprep.subr.mxu0 0.0
    %1123 = vmatpush1.msra.mxu0 %v1059
    %1124 = vmatprep.subr.mxu0 0.0
    %1125 = vmatpush1.msra.mxu0 %v1060
    %1126 = vmatprep.subr.mxu0 0.0
    %1127 = vmatpush1.msra.mxu0 %v1061
    %1128 = vmatprep.subr.mxu0 0.0
    %1129 = vmatpush1.msra.mxu0 %v1062
    %1130 = vmatprep.subr.mxu0 0.0
    %1131 = vmatpush1.msra.mxu0 %v1063
    %1132 = vmatprep.subr.mxu0 0.0
    %1133 = vmatpush1.msra.mxu0 %v1064
    %1134 = vmatprep.subr.mxu0 0.0
    %1135 = vmatpush1.msra.mxu0 %v1065
    %1136 = vmatprep.subr.mxu0 0.0
    %1137 = vmatpush1.msra.mxu0 %v1066
    %1138 = vmatprep.subr.mxu0 0.0
    %1139 = vmatpush1.msra.mxu0 %v1067
    %1140 = vmatprep.subr.mxu0 0.0
    %1141 = vmatpush1.msra.mxu0 %v1068
    %1142 = vmatprep.subr.mxu0 0.0
    %1143 = vmatpush1.msra.mxu0 %v1069
    %1144 = vmatprep.subr.mxu0 0.0
    %1145 = vmatpush1.msra.mxu0 %v1070
    %1146 = vmatprep.subr.mxu0 0.0
    %1147 = vmatpush1.msra.mxu0 %v1071
    %1148 = vmatprep.subr.mxu0 0.0
    %1149 = vmatpush1.msra.mxu0 %v1072
    %1150 = vmatprep.subr.mxu0 0.0
    %1151 = vmatpush1.msra.mxu0 %v1073
    %1152 = vmatprep.subr.mxu0 0.0
    %1153 = vmatpush1.msra.mxu0 %v1074
    %1154 = vmatprep.subr.mxu0 0.0
    %1155 = vmatpush1.msra.mxu0 %v1075
    %1156 = vmatprep.subr.mxu0 0.0
    %1157 = vmatpush1.msra.mxu0 %v1076
    %1158 = vmatprep.subr.mxu0 0.0
    %1159 = vmatpush1.msra.mxu0 %v1077
    %1160 = vmatprep.subr.mxu0 0.0
    %1161 = vmatpush1.msra.mxu0 %v1078
    %1162 = vmatprep.subr.mxu0 0.0
    %1163 = vmatpush1.msra.mxu0 %v1079
    %1164 = vmatprep.subr.mxu0 0.0
    %1165 = vmatpush1.msra.mxu0 %v1080
    %1166 = vmatprep.subr.mxu0 0.0
    %1167 = vmatpush1.msra.mxu0 %v1081
    %1168 = vmatprep.subr.mxu0 0.0
    %1169 = vmatpush1.msra.mxu0 %v1082
    %1170 = vmatprep.mubr.f32.mxu0 %v1004
    %1171 = vmatmul.mubr.f32.gmra.mrb[0].mxu0 %v1003
    %v1172 = vpop.f32.mrb[0].mxu0
    %v1173 = vadd.f32 %v1104, %v1172
    %v1174 = vpop.f32.mrb[0].mxu0
    %1175 = vmatprep.mubr.f32.mxu0 %v1007
    %1176 = vmatmul.mubr.f32.gmra.mrb[0].mxu0 %v1006
    %v1177 = vpop.f32.mrb[0].mxu0
    %v1178 = vadd.f32 %v1104, %v1177
    %v1179 = vpop.f32.mrb[0].mxu0
    %1180 = vmatprep.mubr.f32.mxu0 %v1010
    %1181 = vmatmul.mubr.f32.gmra.mrb[0].mxu0 %v1009
    %v1182 = vpop.f32.mrb[0].mxu0
    %v1183 = vadd.f32 %v1104, %v1182
    %v1184 = vpop.f32.mrb[0].mxu0
    %1185 = vmatprep.mubr.f32.mxu0 %v1013
    %1186 = vmatmul.mubr.f32.gmra.mrb[0].mxu0 %v1012
    %v1187 = vpop.f32.mrb[0].mxu0
    %v1188 = vadd.f32 %v1104, %v1187
    %v1189 = vpop.f32.mrb[0].mxu0
    %1190 = vmatprep.mubr.f32.mxu0 %v1016
    %1191 = vmatmul.mubr.f32.gmra.mrb[0].mxu0 %v1015
    %v1192 = vpop.f32.mrb[0].mxu0
    %v1193 = vadd.f32 %v1104, %v1192
    %v1194 = vpop.f32.mrb[0].mxu0
    %1195 = vmatprep.mubr.f32.mxu0 %v1019
    %1196 = vmatmul.mubr.f32.gmra.mrb[0].mxu0 %v1018
    %v1197 = vpop.f32.mrb[0].mxu0
    %v1198 = vadd.f32 %v1104, %v1197
    %v1199 = vpop.f32.mrb[0].mxu0
    %1200 = vmatprep.mubr.f32.mxu0 %v1022
    %1201 = vmatmul.mubr.f32.gmra.mrb[0].mxu0 %v1021
    %v1202 = vpop.f32.mrb[0].mxu0
    %v1203 = vadd.f32 %v1104, %v1202
    %v1204 = vpop.f32.mrb[0].mxu0
    %1205 = vmatprep.mubr.f32.mxu0 %v1025
    %1206 = vmatmul.mubr.f32.gmra.mrb[0].mxu0 %v1024
    %v1207 = vpop.f32.mrb[0].mxu0
    %v1208 = vadd.f32 %v1104, %v1207
    %v1209 = vpop.f32.mrb[0].mxu0
    %1210 = vmatprep.mubr.f32.mxu0 %v1028
    %1211 = vmatmul.mubr.f32.gmra.mrb[0].mxu0 %v1027
    %v1212 = vpop.f32.mrb[0].mxu0
    %v1213 = vadd.f32 %v1104, %v1212
    %v1214 = vpop.f32.mrb[0].mxu0
    %1215 = vmatprep.mubr.f32.mxu0 %v1031
    %1216 = vmatmul.mubr.f32.gmra.mrb[0].mxu0 %v1030
    %v1217 = vpop.f32.mrb[0].mxu0
    %v1218 = vadd.f32 %v1104, %v1217
    %v1219 = vpop.f32.mrb[0].mxu0
    %1220 = vmatprep.mubr.f32.mxu0 %v1034
    %1221 = vmatmul.mubr.f32.gmra.mrb[0].mxu0 %v1033
    %v1222 = vpop.f32.mrb[0].mxu0
    %v1223 = vadd.f32 %v1104, %v1222
    %v1224 = vpop.f32.mrb[0].mxu0
    %1225 = vmatprep.mubr.f32.mxu0 %v1037
    %1226 = vmatmul.mubr.f32.gmra.mrb[0].mxu0 %v1036
    %v1227 = vpop.f32.mrb[0].mxu0
    %v1228 = vadd.f32 %v1104, %v1227
    %v1229 = vpop.f32.mrb[0].mxu0
    %1230 = vmatprep.mubr.f32.mxu0 %v1040
    %1231 = vmatmul.mubr.f32.gmra.mrb[0].mxu0 %v1039
    %v1232 = vpop.f32.mrb[0].mxu0
    %v1233 = vadd.f32 %v1104, %v1232
    %v1234 = vpop.f32.mrb[0].mxu0
    %1235 = vmatprep.mubr.f32.mxu0 %v1043
    %1236 = vmatmul.mubr.f32.gmra.mrb[0].mxu0 %v1042
    %v1237 = vpop.f32.mrb[0].mxu0
    %v1238 = vadd.f32 %v1104, %v1237
    %v1239 = vpop.f32.mrb[0].mxu0
    %1240 = vmatprep.mubr.f32.mxu0 %v1046
    %1241 = vmatmul.mubr.f32.gmra.mrb[0].mxu0 %v1045
    %v1242 = vpop.f32.mrb[0].mxu0
    %v1243 = vadd.f32 %v1104, %v1242
    %v1244 = vpop.f32.mrb[0].mxu0
    %1245 = vmatprep.mubr.f32.mxu0 %v1049
    %1246 = vmatmul.mubr.f32.gmra.mrb[0].mxu0 %v1048
    %v1247 = vpop.f32.mrb[0].mxu0
    %v1248 = vadd.f32 %v1104, %v1247
    %v1249 = vpop.f32.mrb[0].mxu0
    %1250 = vdwg.mxu0
    %1251 = vmatprep.subr.mxu0 0.0
    %1252 = vmatpush1.msra.mxu0 %v1083
    %1253 = vmatprep.subr.mxu0 0.0
    %1254 = vmatpush1.msra.mxu0 %v1084
    %1255 = vmatprep.subr.mxu0 0.0
    %1256 = vmatpush1.msra.mxu0 %v1085
    %1257 = vmatprep.subr.mxu0 0.0
    %1258 = vmatpush1.msra.mxu0 %v1086
    %1259 = vmatprep.subr.mxu0 0.0
    %1260 = vmatpush1.msra.mxu0 %v1087
    %1261 = vmatprep.subr.mxu0 0.0
    %1262 = vmatpush1.msra.mxu0 %v1088
    %1263 = vmatprep.subr.mxu0 0.0
    %1264 = vmatpush1.msra.mxu0 %v1089
    %1265 = vmatprep.subr.mxu0 0.0
    %1266 = vmatpush1.msra.mxu0 %v1090
    %1267 = vmatprep.subr.mxu0 0.0
    %1268 = vmatpush1.msra.mxu0 %v1091
    %1269 = vmatprep.subr.mxu0 0.0
    %1270 = vmatpush1.msra.mxu0 %v1092
    %1271 = vmatprep.subr.mxu0 0.0
    %1272 = vmatpush1.msra.mxu0 %v1093
    %1273 = vmatprep.subr.mxu0 0.0
    %1274 = vmatpush1.msra.mxu0 %v1094
    %1275 = vmatprep.subr.mxu0 0.0
    %1276 = vmatpush1.msra.mxu0 %v1095
    %1277 = vmatprep.subr.mxu0 0.0
    %1278 = vmatpush1.msra.mxu0 %v1096
    %1279 = vmatprep.subr.mxu0 0.0
    %1280 = vmatpush1.msra.mxu0 %v1097
    %1281 = vmatprep.subr.mxu0 0.0
    %1282 = vmatpush1.msra.mxu0 %v1098
    %1283 = vmatprep.subr.mxu0 0.0
    %1284 = vmatpush1.msra.mxu0 0.0
    %1285 = vmatprep.subr.mxu0 0.0
    %1286 = vmatpush1.msra.mxu0 0.0
    %1287 = vmatprep.subr.mxu0 0.0
    %1288 = vmatpush1.msra.mxu0 0.0
    %1289 = vmatprep.subr.mxu0 0.0
    %1290 = vmatpush1.msra.mxu0 0.0
    %1291 = vmatprep.subr.mxu0 0.0
    %1292 = vmatpush1.msra.mxu0 0.0
    %1293 = vmatprep.subr.mxu0 0.0
    %1294 = vmatpush1.msra.mxu0 0.0
    %1295 = vmatprep.subr.mxu0 0.0
    %1296 = vmatpush1.msra.mxu0 0.0
    %1297 = vmatprep.subr.mxu0 0.0
    %1298 = vmatpush1.msra.mxu0 0.0
    %1299 = vmatprep.subr.mxu0 0.0
    %1300 = vmatpush1.msra.mxu0 0.0
    %1301 = vmatprep.subr.mxu0 0.0
    %1302 = vmatpush1.msra.mxu0 0.0
    %1303 = vmatprep.subr.mxu0 0.0
    %1304 = vmatpush1.msra.mxu0 0.0
    %1305 = vmatprep.subr.mxu0 0.0
    %1306 = vmatpush1.msra.mxu0 0.0
    %1307 = vmatprep.subr.mxu0 0.0
    %1308 = vmatpush1.msra.mxu0 0.0
    %1309 = vmatprep.subr.mxu0 0.0
    %1310 = vmatpush1.msra.mxu0 0.0
    %1311 = vmatprep.subr.mxu0 0.0
    %1312 = vmatpush1.msra.mxu0 0.0
    %1313 = vmatprep.subr.mxu0 0.0
    %1314 = vmatpush1.msra.mxu0 0.0
    %1315 = vmatprep.mubr.f32.mxu0 0.0
    %1316 = vmatmul.mubr.f32.gmra.mrb[0].mxu0 %v1005
    %v1317 = vpop.f32.mrb[0].mxu0
    %v1318 = vadd.f32 %v1173, %v1317
    %v1319 = vpop.f32.mrb[0].mxu0
    %1320 = vmatprep.mubr.f32.mxu0 0.0
    %1321 = vmatmul.mubr.f32.gmra.mrb[0].mxu0 %v1008
    %v1322 = vpop.f32.mrb[0].mxu0
    %v1323 = vadd.f32 %v1178, %v1322
    %v1324 = vpop.f32.mrb[0].mxu0
    %1325 = vmatprep.mubr.f32.mxu0 0.0
    %1326 = vmatmul.mubr.f32.gmra.mrb[0].mxu0 %v1011
    %v1327 = vpop.f32.mrb[0].mxu0
    %v1328 = vadd.f32 %v1183, %v1327
    %v1329 = vpop.f32.mrb[0].mxu0
    %1330 = vmatprep.mubr.f32.mxu0 0.0
    %1331 = vmatmul.mubr.f32.gmra.mrb[0].mxu0 %v1014
    %v1332 = vpop.f32.mrb[0].mxu0
    %v1333 = vadd.f32 %v1188, %v1332
    %v1334 = vpop.f32.mrb[0].mxu0
    %1335 = vmatprep.mubr.f32.mxu0 0.0
    %1336 = vmatmul.mubr.f32.gmra.mrb[0].mxu0 %v1017
    %v1337 = vpop.f32.mrb[0].mxu0
    %v1338 = vadd.f32 %v1193, %v1337
    %v1339 = vpop.f32.mrb[0].mxu0
    %1340 = vmatprep.mubr.f32.mxu0 0.0
    %1341 = vmatmul.mubr.f32.gmra.mrb[0].mxu0 %v1020
    %v1342 = vpop.f32.mrb[0].mxu0
    %v1343 = vadd.f32 %v1198, %v1342
    %v1344 = vpop.f32.mrb[0].mxu0
    %1345 = vmatprep.mubr.f32.mxu0 0.0
    %1346 = vmatmul.mubr.f32.gmra.mrb[0].mxu0 %v1023
    %v1347 = vpop.f32.mrb[0].mxu0
    %v1348 = vadd.f32 %v1203, %v1347
    %v1349 = vpop.f32.mrb[0].mxu0
    %1350 = vmatprep.mubr.f32.mxu0 0.0
    %1351 = vmatmul.mubr.f32.gmra.mrb[0].mxu0 %v1026
    %v1352 = vpop.f32.mrb[0].mxu0
    %v1353 = vadd.f32 %v1208, %v1352
    %v1354 = vpop.f32.mrb[0].mxu0
    %1355 = vmatprep.mubr.f32.mxu0 0.0
    %1356 = vmatmul.mubr.f32.gmra.mrb[0].mxu0 %v1029
    %v1357 = vpop.f32.mrb[0].mxu0
    %v1358 = vadd.f32 %v1213, %v1357
    %v1359 = vpop.f32.mrb[0].mxu0
    %1360 = vmatprep.mubr.f32.mxu0 0.0
    %1361 = vmatmul.mubr.f32.gmra.mrb[0].mxu0 %v1032
    %v1362 = vpop.f32.mrb[0].mxu0
    %v1363 = vadd.f32 %v1218, %v1362
    %v1364 = vpop.f32.mrb[0].mxu0
    %1365 = vmatprep.mubr.f32.mxu0 0.0
    %1366 = vmatmul.mubr.f32.gmra.mrb[0].mxu0 %v1035
    %v1367 = vpop.f32.mrb[0].mxu0
    %v1368 = vadd.f32 %v1223, %v1367
    %v1369 = vpop.f32.mrb[0].mxu0
    %1370 = vmatprep.mubr.f32.mxu0 0.0
    %1371 = vmatmul.mubr.f32.gmra.mrb[0].mxu0 %v1038
    %v1372 = vpop.f32.mrb[0].mxu0
    %v1373 = vadd.f32 %v1228, %v1372
    %v1374 = vpop.f32.mrb[0].mxu0
    %1375 = vmatprep.mubr.f32.mxu0 0.0
    %1376 = vmatmul.mubr.f32.gmra.mrb[0].mxu0 %v1041
    %v1377 = vpop.f32.mrb[0].mxu0
    %v1378 = vadd.f32 %v1233, %v1377
    %v1379 = vpop.f32.mrb[0].mxu0
    %1380 = vmatprep.mubr.f32.mxu0 0.0
    %1381 = vmatmul.mubr.f32.gmra.mrb[0].mxu0 %v1044
    %v1382 = vpop.f32.mrb[0].mxu0
    %v1383 = vadd.f32 %v1238, %v1382
    %v1384 = vpop.f32.mrb[0].mxu0
    %1385 = vmatprep.mubr.f32.mxu0 0.0
    %1386 = vmatmul.mubr.f32.gmra.mrb[0].mxu0 %v1047
    %v1387 = vpop.f32.mrb[0].mxu0
    %v1388 = vadd.f32 %v1243, %v1387
    %v1389 = vpop.f32.mrb[0].mxu0
    %1390 = vmatprep.mubr.f32.mxu0 0.0
    %1391 = vmatmul.mubr.f32.gmra.mrb[0].mxu0 %v1050
    %v1392 = vpop.f32.mrb[0].mxu0
    %v1393 = vadd.f32 %v1248, %v1392
    %v1394 = vpop.f32.mrb[0].mxu0
    %1395 = vdwg.mxu0
    %v1396 = vmax.f32 %v1318, 0.0
    %v1397 = vmax.f32 %v1323, 0.0
    %v1398 = vmax.f32 %v1328, 0.0
    %v1399 = vmax.f32 %v1333, 0.0
    %v1400 = vmax.f32 %v1338, 0.0
    %v1401 = vmax.f32 %v1343, 0.0
    %v1402 = vmax.f32 %v1348, 0.0
    %v1403 = vmax.f32 %v1353, 0.0
    %v1404 = vmax.f32 %v1358, 0.0
    %v1405 = vmax.f32 %v1363, 0.0
    %v1406 = vmax.f32 %v1368, 0.0
    %v1407 = vmax.f32 %v1373, 0.0
    %v1408 = vmax.f32 %v1378, 0.0
    %v1409 = vmax.f32 %v1383, 0.0
    %v1410 = vmax.f32 %v1388, 0.0
    %v1411 = vmax.f32 %v1393, 0.0
    %1412 = vst [vmem:[#allocation14] sm:$0xff] %v1396
    %1413 = vst [vmem:[#allocation14 + $0x8] sm:$0xff] %v1397
    %1414 = vst [vmem:[#allocation14 + $0x10] sm:$0xff] %v1398
    %1415 = vst [vmem:[#allocation14 + $0x18] sm:$0xff] %v1399
    %1416 = vst [vmem:[#allocation14 + $0x20] sm:$0xff] %v1400
    %1417 = vst [vmem:[#allocation14 + $0x28] sm:$0xff] %v1401
    %1418 = vst [vmem:[#allocation14 + $0x30] sm:$0xff] %v1402
    %1419 = vst [vmem:[#allocation14 + $0x38] sm:$0xff] %v1403
    %1420 = vst [vmem:[#allocation14 + $0x40] sm:$0xff] %v1404
    %1421 = vst [vmem:[#allocation14 + $0x48] sm:$0xff] %v1405
    %1422 = vst [vmem:[#allocation14 + $0x50] sm:$0xff] %v1406
    %1423 = vst [vmem:[#allocation14 + $0x58] sm:$0xff] %v1407
    %1424 = vst [vmem:[#allocation14 + $0x60] sm:$0xff] %v1408
    %1425 = vst [vmem:[#allocation14 + $0x68] sm:$0xff] %v1409
    %1426 = vst [vmem:[#allocation14 + $0x70] sm:$0xff] %v1410
    %1427 = vst [vmem:[#allocation14 + $0x78] sm:$0xff] %v1411
    %v1428 = vlaneseq
    %v1429 = vshrl.u32 %v1428, 7
    %v1430 = vadd.s32 %v1429, 8
    %vm1431 = vcmp.lt.s32.totalorder %v1429, 14
    %vm1432 = vcmp.lt.s32.totalorder %v1430, 14
    %v1433 = vsel %vm1431, %v1396, -inf
    %v1434 = vsel %vm1432, %v1397, -inf
    %v1435 = vsel %vm1431, %v1398, -inf
    %v1436 = vsel %vm1432, %v1399, -inf
    %v1437 = vsel %vm1431, %v1400, -inf
    %v1438 = vsel %vm1432, %v1401, -inf
    %v1439 = vsel %vm1431, %v1402, -inf
    %v1440 = vsel %vm1432, %v1403, -inf
    %v1441 = vsel %vm1431, %v1404, -inf
    %v1442 = vsel %vm1432, %v1405, -inf
    %v1443 = vsel %vm1431, %v1406, -inf
    %v1444 = vsel %vm1432, %v1407, -inf
    %v1445 = vsel %vm1431, %v1408, -inf
    %v1446 = vsel %vm1432, %v1409, -inf
    %v1447 = vsel %vm1431, %v1410, -inf
    %v1448 = vsel %vm1432, %v1411, -inf
    %v1449 = vmax.f32 %v1433, %v1434
    %v1450 = vrot.slane %v1449, 4
    %v1451 = vmax.f32 %v1449, %v1450
    %v1452 = vrot.slane %v1451, 2
    %v1453 = vmax.f32 %v1451, %v1452
    %v1454 = vrot.slane %v1453, 1
    %v1455 = vmax.f32 %v1453, %v1454
    %v1456 = vmax.f32 %v1435, %v1436
    %v1457 = vrot.slane %v1456, 4
    %v1458 = vmax.f32 %v1456, %v1457
    %v1459 = vrot.slane %v1458, 2
    %v1460 = vmax.f32 %v1458, %v1459
    %v1461 = vrot.slane %v1460, 1
    %v1462 = vmax.f32 %v1460, %v1461
    %v1463 = vmax.f32 %v1437, %v1438
    %v1464 = vrot.slane %v1463, 4
    %v1465 = vmax.f32 %v1463, %v1464
    %v1466 = vrot.slane %v1465, 2
    %v1467 = vmax.f32 %v1465, %v1466
    %v1468 = vrot.slane %v1467, 1
    %v1469 = vmax.f32 %v1467, %v1468
    %v1470 = vmax.f32 %v1439, %v1440
    %v1471 = vrot.slane %v1470, 4
    %v1472 = vmax.f32 %v1470, %v1471
    %v1473 = vrot.slane %v1472, 2
    %v1474 = vmax.f32 %v1472, %v1473
    %v1475 = vrot.slane %v1474, 1
    %v1476 = vmax.f32 %v1474, %v1475
    %v1477 = vmax.f32 %v1441, %v1442
    %v1478 = vrot.slane %v1477, 4
    %v1479 = vmax.f32 %v1477, %v1478
    %v1480 = vrot.slane %v1479, 2
    %v1481 = vmax.f32 %v1479, %v1480
    %v1482 = vrot.slane %v1481, 1
    %v1483 = vmax.f32 %v1481, %v1482
    %v1484 = vmax.f32 %v1443, %v1444
    %v1485 = vrot.slane %v1484, 4
    %v1486 = vmax.f32 %v1484, %v1485
    %v1487 = vrot.slane %v1486, 2
    %v1488 = vmax.f32 %v1486, %v1487
    %v1489 = vrot.slane %v1488, 1
    %v1490 = vmax.f32 %v1488, %v1489
    %v1491 = vmax.f32 %v1445, %v1446
    %v1492 = vrot.slane %v1491, 4
    %v1493 = vmax.f32 %v1491, %v1492
    %v1494 = vrot.slane %v1493, 2
    %v1495 = vmax.f32 %v1493, %v1494
    %v1496 = vrot.slane %v1495, 1
    %v1497 = vmax.f32 %v1495, %v1496
    %v1498 = vmax.f32 %v1447, %v1448
    %v1499 = vrot.slane %v1498, 4
    %v1500 = vmax.f32 %v1498, %v1499
    %v1501 = vrot.slane %v1500, 2
    %v1502 = vmax.f32 %v1500, %v1501
    %v1503 = vrot.slane %v1502, 1
    %v1504 = vmax.f32 %v1502, %v1503
    %vm1513 = vcmask 1041409
    %v1514 = vsel %vm1513, %v1462, %v1455
    %vm1515 = vcmask 1042434
    %v1516 = vsel %vm1515, %v1469, %v1514
    %vm1517 = vcmask 1043459
    %v1518 = vsel %vm1517, %v1476, %v1516
    %vm1519 = vcmask 1044484
    %v1520 = vsel %vm1519, %v1483, %v1518
    %vm1521 = vcmask 1045509
    %v1522 = vsel %vm1521, %v1490, %v1520
    %vm1523 = vcmask 1046534
    %v1524 = vsel %vm1523, %v1497, %v1522
    %vm1525 = vcmask 1047559
    %v1526 = vsel %vm1525, %v1504, %v1524
    %1528 = vst [vmem:[#allocation15] sm:$0xff] %v1526
    %v1529 = vld [vmem:[#allocation11] sm:$0xff]
    %v1530 = vld [vmem:[#allocation11 + $0x8] sm:$0xff]
    %v1531 = vld [vmem:[#allocation11 + $0x10] sm:$0xff]
    %v1532 = vld [vmem:[#allocation11 + $0x18] sm:$0xff]
    %v1533 = vld [vmem:[#allocation11 + $0x20] sm:$0xff]
    %v1534 = vld [vmem:[#allocation11 + $0x28] sm:$0xff]
    %v1535 = vld [vmem:[#allocation11 + $0x30] sm:$0xff]
    %v1536 = vld [vmem:[#allocation11 + $0x38] sm:$0xff]
    %v1537 = vld [vmem:[#allocation11 + $0x40] sm:$0xff]
    %v1538 = vld [vmem:[#allocation11 + $0x48] sm:$0xff]
    %v1539 = vld [vmem:[#allocation11 + $0x50] sm:$0xff]
    %v1540 = vld [vmem:[#allocation11 + $0x58] sm:$0xff]
    %v1541 = vld [vmem:[#allocation11 + $0x60] sm:$0xff]
    %v1542 = vld [vmem:[#allocation11 + $0x68] sm:$0xff]
    %v1543 = vld [vmem:[#allocation11 + $0x70] sm:$0xff]
    %v1544 = vld [vmem:[#allocation11 + $0x78] sm:$0xff]
    %v1545 = vld [vmem:[%s5] sm:$0x1]
    %v1547 = vlaneseq
    %v1548 = vshrl.u32 %v1547, 7
    %v1549 = vsub.s32 0, %v1548
    %v1550 = vrot.slane %v1545, %v1549
    %1552 = vmatprep.subr.mxu0 0.0
    %1553 = vmatpush1.msra.mxu0 %v1529
    %1554 = vmatprep.subr.mxu0 0.0
    %1555 = vmatpush1.msra.mxu0 %v1530
    %1556 = vmatprep.subr.mxu0 0.0
    %1557 = vmatpush1.msra.mxu0 %v1531
    %1558 = vmatprep.subr.mxu0 0.0
    %1559 = vmatpush1.msra.mxu0 %v1532
    %1560 = vmatprep.subr.mxu0 0.0
    %1561 = vmatpush1.msra.mxu0 %v1533
    %1562 = vmatprep.subr.mxu0 0.0
    %1563 = vmatpush1.msra.mxu0 %v1534
    %1564 = vmatprep.subr.mxu0 0.0
    %1565 = vmatpush1.msra.mxu0 %v1535
    %1566 = vmatprep.subr.mxu0 0.0
    %1567 = vmatpush1.msra.mxu0 %v1536
    %1568 = vmatprep.subr.mxu0 0.0
    %1569 = vmatpush1.msra.mxu0 %v1537
    %1570 = vmatprep.subr.mxu0 0.0
    %1571 = vmatpush1.msra.mxu0 %v1538
    %1572 = vmatprep.subr.mxu0 0.0
    %1573 = vmatpush1.msra.mxu0 %v1539
    %1574 = vmatprep.subr.mxu0 0.0
    %1575 = vmatpush1.msra.mxu0 %v1540
    %1576 = vmatprep.subr.mxu0 0.0
    %1577 = vmatpush1.msra.mxu0 %v1541
    %1578 = vmatprep.subr.mxu0 0.0
    %1579 = vmatpush1.msra.mxu0 %v1542
    %1580 = vmatprep.subr.mxu0 0.0
    %1581 = vmatpush1.msra.mxu0 %v1543
    %1582 = vmatprep.subr.mxu0 0.0
    %1583 = vmatpush1.msra.mxu0 %v1544
    %1584 = vmatprep.subr.mxu0 0.0
    %1585 = vmatpush1.msra.mxu0 0.0
    %1586 = vmatprep.subr.mxu0 0.0
    %1587 = vmatpush1.msra.mxu0 0.0
    %1588 = vmatprep.subr.mxu0 0.0
    %1589 = vmatpush1.msra.mxu0 0.0
    %1590 = vmatprep.subr.mxu0 0.0
    %1591 = vmatpush1.msra.mxu0 0.0
    %1592 = vmatprep.subr.mxu0 0.0
    %1593 = vmatpush1.msra.mxu0 0.0
    %1594 = vmatprep.subr.mxu0 0.0
    %1595 = vmatpush1.msra.mxu0 0.0
    %1596 = vmatprep.subr.mxu0 0.0
    %1597 = vmatpush1.msra.mxu0 0.0
    %1598 = vmatprep.subr.mxu0 0.0
    %1599 = vmatpush1.msra.mxu0 0.0
    %1600 = vmatprep.subr.mxu0 0.0
    %1601 = vmatpush1.msra.mxu0 0.0
    %1602 = vmatprep.subr.mxu0 0.0
    %1603 = vmatpush1.msra.mxu0 0.0
    %1604 = vmatprep.subr.mxu0 0.0
    %1605 = vmatpush1.msra.mxu0 0.0
    %1606 = vmatprep.subr.mxu0 0.0
    %1607 = vmatpush1.msra.mxu0 0.0
    %1608 = vmatprep.subr.mxu0 0.0
    %1609 = vmatpush1.msra.mxu0 0.0
    %1610 = vmatprep.subr.mxu0 0.0
    %1611 = vmatpush1.msra.mxu0 0.0
    %1612 = vmatprep.subr.mxu0 0.0
    %1613 = vmatpush1.msra.mxu0 0.0
    %1614 = vmatprep.subr.mxu0 0.0
    %1615 = vmatpush1.msra.mxu0 0.0
    %1616 = vmatprep.mubr.f32.mxu0 0.0
    %1617 = vmatmul.mubr.f32.gmra.mrb[0].mxu0 %v1526
    %v1618 = vpop.f32.mrb[0].mxu0
    %v1619 = vadd.f32 %v1550, %v1618
    %v1620 = vpop.f32.mrb[0].mxu0
    %1621 = vdwg.mxu0
    %v1622 = vmax.f32 %v1619, 0.0
    %v1623 = vld [vmem:[#allocation12] sm:$0xff]
    %v1624 = vld [vmem:[#allocation12 + $0x8] sm:$0xff]
    %v1625 = vld [vmem:[#allocation12 + $0x10] sm:$0xff]
    %v1626 = vld [vmem:[#allocation12 + $0x18] sm:$0xff]
    %v1627 = vld [vmem:[#allocation12 + $0x20] sm:$0xff]
    %v1628 = vld [vmem:[#allocation12 + $0x28] sm:$0xff]
    %v1629 = vld [vmem:[#allocation12 + $0x30] sm:$0xff]
    %v1630 = vld [vmem:[#allocation12 + $0x38] sm:$0xff]
    %v1631 = vld [vmem:[#allocation12 + $0x40] sm:$0xff]
    %v1632 = vld [vmem:[#allocation12 + $0x48] sm:$0xff]
    %v1633 = vld [vmem:[#allocation12 + $0x50] sm:$0xff]
    %v1634 = vld [vmem:[#allocation12 + $0x58] sm:$0xff]
    %v1635 = vld [vmem:[#allocation12 + $0x60] sm:$0xff]
    %v1636 = vld [vmem:[#allocation12 + $0x68] sm:$0xff]
    %v1637 = vld [vmem:[#allocation12 + $0x70] sm:$0xff]
    %v1638 = vld [vmem:[#allocation12 + $0x78] sm:$0xff]
    %v1639 = vld [vmem:[%s7] sm:$0x1]
    %v1641 = vlaneseq
    %v1642 = vshrl.u32 %v1641, 7
    %v1643 = vsub.s32 0, %v1642
    %v1644 = vrot.slane %v1639, %v1643
    %1646 = vmatprep.subr.mxu0 0.0
    %1647 = vmatpush1.msra.mxu0 %v1623
    %1648 = vmatprep.subr.mxu0 0.0
    %1649 = vmatpush1.msra.mxu0 %v1624
    %1650 = vmatprep.subr.mxu0 0.0
    %1651 = vmatpush1.msra.mxu0 %v1625
    %1652 = vmatprep.subr.mxu0 0.0
    %1653 = vmatpush1.msra.mxu0 %v1626
    %1654 = vmatprep.subr.mxu0 0.0
    %1655 = vmatpush1.msra.mxu0 %v1627
    %1656 = vmatprep.subr.mxu0 0.0
    %1657 = vmatpush1.msra.mxu0 %v1628
    %1658 = vmatprep.subr.mxu0 0.0
    %1659 = vmatpush1.msra.mxu0 %v1629
    %1660 = vmatprep.subr.mxu0 0.0
    %1661 = vmatpush1.msra.mxu0 %v1630
    %1662 = vmatprep.subr.mxu0 0.0
    %1663 = vmatpush1.msra.mxu0 %v1631
    %1664 = vmatprep.subr.mxu0 0.0
    %1665 = vmatpush1.msra.mxu0 %v1632
    %1666 = vmatprep.subr.mxu0 0.0
    %1667 = vmatpush1.msra.mxu0 %v1633
    %1668 = vmatprep.subr.mxu0 0.0
    %1669 = vmatpush1.msra.mxu0 %v1634
    %1670 = vmatprep.subr.mxu0 0.0
    %1671 = vmatpush1.msra.mxu0 %v1635
    %1672 = vmatprep.subr.mxu0 0.0
    %1673 = vmatpush1.msra.mxu0 %v1636
    %1674 = vmatprep.subr.mxu0 0.0
    %1675 = vmatpush1.msra.mxu0 %v1637
    %1676 = vmatprep.subr.mxu0 0.0
    %1677 = vmatpush1.msra.mxu0 %v1638
    %1678 = vmatprep.subr.mxu0 0.0
    %1679 = vmatpush1.msra.mxu0 0.0
    %1680 = vmatprep.subr.mxu0 0.0
    %1681 = vmatpush1.msra.mxu0 0.0
    %1682 = vmatprep.subr.mxu0 0.0
    %1683 = vmatpush1.msra.mxu0 0.0
    %1684 = vmatprep.subr.mxu0 0.0
    %1685 = vmatpush1.msra.mxu0 0.0
    %1686 = vmatprep.subr.mxu0 0.0
    %1687 = vmatpush1.msra.mxu0 0.0
    %1688 = vmatprep.subr.mxu0 0.0
    %1689 = vmatpush1.msra.mxu0 0.0
    %1690 = vmatprep.subr.mxu0 0.0
    %1691 = vmatpush1.msra.mxu0 0.0
    %1692 = vmatprep.subr.mxu0 0.0
    %1693 = vmatpush1.msra.mxu0 0.0
    %1694 = vmatprep.subr.mxu0 0.0
    %1695 = vmatpush1.msra.mxu0 0.0
    %1696 = vmatprep.subr.mxu0 0.0
    %1697 = vmatpush1.msra.mxu0 0.0
    %1698 = vmatprep.subr.mxu0 0.0
    %1699 = vmatpush1.msra.mxu0 0.0
    %1700 = vmatprep.subr.mxu0 0.0
    %1701 = vmatpush1.msra.mxu0 0.0
    %1702 = vmatprep.subr.mxu0 0.0
    %1703 = vmatpush1.msra.mxu0 0.0
    %1704 = vmatprep.subr.mxu0 0.0
    %1705 = vmatpush1.msra.mxu0 0.0
    %1706 = vmatprep.subr.mxu0 0.0
    %1707 = vmatpush1.msra.mxu0 0.0
    %1708 = vmatprep.subr.mxu0 0.0
    %1709 = vmatpush1.msra.mxu0 0.0
    %1710 = vmatprep.mubr.f32.mxu0 0.0
    %1711 = vmatmul.mubr.f32.gmra.mrb[0].mxu0 %v1622
    %v1712 = vpop.f32.mrb[0].mxu0
    %v1713 = vadd.f32 %v1644, %v1712
    %v1714 = vpop.f32.mrb[0].mxu0
    %1715 = vdwg.mxu0
    %v1716 = vmax.f32 %v1713, 0.0
    %v1717 = vld [vmem:[%s8] sm:$0x1]
    %v1719 = vlaneseq
    %v1720 = vshrl.u32 %v1719, 7
    %v1721 = vsub.s32 0, %v1720
    %v1722 = vrot.slane %v1717, %v1721
    %v1724 = vmul.f32 %v1716, %v1722
    %1725 = vadd.xlane.f32.xlu0 %v1724
    %v1726 = vpop.xlane.xlu0 %1725
    %v1727 = vld [vmem:[#allocation5] sm:$0x1]
    %v1729 = vlaneseq
    %v1730 = vshrl.u32 %v1729, 7
    %v1731 = vsub.s32 0, %v1730
    %v1732 = vrot.slane %v1727, %v1731
    %v1734 = vadd.f32 %v1726, %v1732
    %v1735 = vxor.u32 %v1734, 2147483648
    %v1736 = vmul.f32 %v1735, 1.442695
    %v1737 = vpow.pop %v1736
    %v1738 = vadd.f32 %v1737, 1.0
    %v1739 = vrcp.pop %v1738
    %v1740 = vmul.f32 1.0, %v1739
    %vm1741 = vcmask 7168
    %1742 = vst.msk [vmem:[%s12] sm:$0xff] %vm1741, %v1740
    // Predicated region
    $region54: #{tpu_custom_call.1} parent=1 // pred_check
      _
    $region55: #{tpu_custom_call.1} parent=1 // pred_check_branch
      %1744 = sbr.rel (0) target = $region57
    $region56: #{tpu_custom_call.1} parent=1 // pred_region
      %s1746 = ssub.s32 2048, 2048
      %1747 = vsyncadd [#allocation8], %s1746
      %s1748 = sshll.u32 [#allocation14], 4
      %s1749 = int_to_ptr.vmem [resolvable:$true] %s1748
      %1754 = dma.vmem_to_hbm [thread:$0]  %s1749, 2048, %s10, [#allocation8], 128, 128, 8
    $region57: #{tpu_custom_call.1} parent=1 // pred_fallthru
      _
    // Predicated region
    $region58: #{tpu_custom_call.1} parent=1 // pred_check
      _
    $region59: #{tpu_custom_call.1} parent=1 // pred_check_branch
      %1756 = sbr.rel (0) target = $region61
    $region60: #{tpu_custom_call.1} parent=1 // pred_region
      %s1758 = ssub.s32 128, 128
      %1759 = vsyncadd [#allocation16], %s1758
      %s1761 = sshll.u32 [#allocation15], 4
      %s1762 = int_to_ptr.vmem [resolvable:$true] %s1761
      %1764 = dma.vmem_to_hbm [thread:$0]  %s1762, 128, %s11, [#allocation16]
    $region61: #{tpu_custom_call.1} parent=1 // pred_fallthru
      _
    // Predicated region
    $region62: #{tpu_custom_call.1} parent=1 // pred_check
      _
    $region63: #{tpu_custom_call.1} parent=1 // pred_check_branch
      %1766 = sbr.rel (0) target = $region65
    $region64: #{tpu_custom_call.1} parent=1 // pred_region
      _
    $region65: #{tpu_custom_call.1} parent=1 // pred_fallthru
      _
    // Predicated region
    $region66: #{tpu_custom_call.1} parent=1 // pred_check
      _
    $region67: #{tpu_custom_call.1} parent=1 // pred_check_branch
      %1768 = sbr.rel (0) target = $region69
    $region68: #{tpu_custom_call.1} parent=1 // pred_region
      %1769 = dma.done [#allocation8], 2048
    $region69: #{tpu_custom_call.1} parent=1 // pred_fallthru
      _
    // Predicated region
    $region70: #{tpu_custom_call.1} parent=1 // pred_check
      _
    $region71: #{tpu_custom_call.1} parent=1 // pred_check_branch
      %1771 = sbr.rel (0) target = $region73
    $region72: #{tpu_custom_call.1} parent=1 // pred_region
      %1772 = dma.done [#allocation16], 128
    $region73: #{tpu_custom_call.1} parent=1 // pred_fallthru
      _
    // Predicated region
    $region74: #{tpu_custom_call.1} parent=1 // pred_check
      _
    $region75: #{tpu_custom_call.1} parent=1 // pred_check_branch
      %1774 = sbr.rel (0) target = $region77
    $region76: #{tpu_custom_call.1} parent=1 // pred_region
      _
    $region77: #{tpu_custom_call.1} parent=1 // pred_fallthru
      _
    %1775 = vsyncpa [#allocation7], 1
    %1776 = vsyncpa [#allocation10], 1
    %1777 = vsyncpa [#allocation13], 1
    %1778 = vsyncpa [#allocation8], 1
    %1779 = vsyncpa [#allocation16], 1

</llo_original>
